<compile_context>
chip_gen: v5e
topology: v5e:2x2
jax: 0.10.0
libtpu: 0.0.40
codegen_flags: <defaults>
</compile_context>

<pallas_src>
import functools

import numpy as np

import jax
import jax.numpy as jnp
from jax.experimental import pallas as pl
from jax.experimental.pallas import tpu as pltpu  # noqa: F401  (TPU backend import)


def fused_kernel(x_ref, w1_ref, gamma_ref, beta_ref, w2_ref, masks_ref, out_ref,
                 *, H, W):
    """ReLU -> 1x1 conv -> BN(batch stats) -> ReLU -> 3x3 conv (pad=1), fully fused.

    x_ref:     [C_in,  H*W]      bf16  (channels on sublanes, spatial on lanes)
    w1_ref:    [C_mid, C_in]     bf16
    gamma_ref: [C_mid, 1]        f32
    beta_ref:  [C_mid, 1]        f32
    w2_ref:    [9, C_out, C_mid] bf16  (tap-major: t = (ky)*3 + kx)
    masks_ref: [9, H*W]          f32   (edge-validity mask per tap; zeroes every
                                        out-of-image AND every roll-wrapped lane)
    out_ref:   [C_out, H*W]      f32
    """
    HW = H * W

    # relu148 + conv2d148 (1x1): bf16 operands, f32 accumulation on the MXU.
    x = jnp.maximum(x_ref[...], 0).astype(jnp.bfloat16)              # [C_in, HW]
    z = jnp.dot(w1_ref[...], x, preferred_element_type=jnp.float32)  # [C_mid, HW] f32

    # batchnorm2d149 (training-mode batch stats over N*H*W = 49 positions), one pass:
    #   var = E[z^2] - mean^2 ; fold gamma * rsqrt and mean into a single scale/shift.
    inv_n = 1.0 / HW
    mean = jnp.sum(z, axis=1, keepdims=True) * inv_n                 # [C_mid, 1]
    ex2 = jnp.sum(z * z, axis=1, keepdims=True) * inv_n
    var = ex2 - mean * mean                                          # biased variance
    scale = gamma_ref[...] * jax.lax.rsqrt(var + 1e-5)
    shift = beta_ref[...] - mean * scale

    # relu149 (f32 elementwise; v5e has no bf16 VPU)
    y = jnp.maximum(z * scale + shift, 0.0)                          # [C_mid, HW] f32

    # conv2d149 (3x3, pad=1): 9 lane-rotated + masked taps, each cast to bf16 and fed
    # straight into a small accumulated matmul -- no im2col buffer is ever materialized.
    # NOTE: the rotation wraps around; correctness relies on masks_ref zeroing every
    # wrapped lane, which holds for 3x3/pad=1 on HxW (any wrap implies h+dy or w+dx
    # is outside the image).  Do not change the masks without revisiting this.
    acc = None
    t = 0
    for dy in (-1, 0, 1):
        for dx in (-1, 0, 1):
            s = dy * W + dx
            if s == 0:
                tap = y                                              # center tap: mask == 1
            else:
                tap = jnp.roll(y, -s, axis=1) * masks_ref[t:t + 1, :]
            part = jnp.dot(w2_ref[t], tap.astype(jnp.bfloat16),
                           preferred_element_type=jnp.float32)       # [C_out, HW]
            acc = part if acc is None else acc + part
            t += 1
    out_ref[...] = acc


def prepare_params(w1, gamma, beta, w2, H, W):
    """One-time (outside jit) weight repacking: no transposes on the traced call path."""
    c_out, c_mid, kh, kw = w2.shape
    w1_mat = jnp.asarray(w1[:, :, 0, 0], dtype=jnp.bfloat16)                    # [C_mid, C_in]
    # [C_out, C_mid, kh, kw] -> [kh, kw, C_out, C_mid] -> [9, C_out, C_mid], tap-major.
    w2_taps = jnp.asarray(
        jnp.transpose(w2, (2, 3, 0, 1)).reshape(kh * kw, c_out, c_mid),
        dtype=jnp.bfloat16)
    gamma_col = jnp.asarray(gamma, jnp.float32).reshape(c_mid, 1)
    beta_col = jnp.asarray(beta, jnp.float32).reshape(c_mid, 1)

    # Static edge masks for the 3x3 / pad=1 taps: masks[t, h*W + w] == 1 iff
    # (h+dy, w+dx) is inside the HxW image, for t = (dy+1)*3 + (dx+1).
    pos = np.arange(H * W)
    hh, ww = pos // W, pos % W
    masks = np.stack([
        ((hh + dy >= 0) & (hh + dy < H) & (ww + dx >= 0) & (ww + dx < W)).astype(np.float32)
        for dy in (-1, 0, 1) for dx in (-1, 0, 1)])                              # [9, H*W]
    return w1_mat, gamma_col, beta_col, w2_taps, jnp.asarray(masks)


@jax.jit
def run_module(x_nchw, w1_mat, gamma_col, beta_col, w2_taps, masks):
    N, C_in, H, W = x_nchw.shape
    assert N == 1
    HW = H * W
    C_mid = w1_mat.shape[0]
    C_out = w2_taps.shape[1]

    # NCHW with N==1 -> [C_in, H*W]: a pure (contiguous) reshape, no transpose.
    x2d = x_nchw.reshape(C_in, HW)

    kernel = functools.partial(fused_kernel, H=H, W=W)
    flops = 2 * HW * C_in * C_mid + 2 * HW * (9 * C_mid) * C_out
    bytes_accessed = (x2d.size * x2d.dtype.itemsize + w1_mat.size * 2 + w2_taps.size * 2 +
                      gamma_col.size * 4 + beta_col.size * 4 + masks.size * 4 +
                      C_out * HW * 4)

    out2d = pl.pallas_call(
        kernel,
        out_shape=jax.ShapeDtypeStruct((C_out, HW), jnp.float32),
        cost_estimate=pl.CostEstimate(flops=int(flops),
                                      transcendentals=int(C_mid),
                                      bytes_accessed=int(bytes_accessed)),
    )(x2d, w1_mat, gamma_col, beta_col, w2_taps, masks)

    # [C_out, H*W] -> NCHW: again a pure reshape, no transpose.
    return out2d.reshape(N, C_out, H, W)


def reference(x, w1, gamma, beta, w2):
    """Pure-JAX f32 reference (training-mode BatchNorm, same as the PyTorch default)."""
    dn = ('NCHW', 'OIHW', 'NCHW')
    x = jnp.maximum(x, 0.0)
    y = jax.lax.conv_general_dilated(x, w1, (1, 1), 'VALID',
                                     dimension_numbers=dn,
                                     precision=jax.lax.Precision.HIGHEST)
    mean = jnp.mean(y, axis=(0, 2, 3), keepdims=True)
    var = jnp.mean((y - mean) ** 2, axis=(0, 2, 3), keepdims=True)
    y = (y - mean) * jax.lax.rsqrt(var + 1e-5)
    y = y * gamma.reshape(1, -1, 1, 1) + beta.reshape(1, -1, 1, 1)
    y = jnp.maximum(y, 0.0)
    return jax.lax.conv_general_dilated(y, w2, (1, 1), ((1, 1), (1, 1)),
                                        dimension_numbers=dn,
                                        precision=jax.lax.Precision.HIGHEST)


if __name__ == "__main__":
    key = jax.random.PRNGKey(0)
    kx, k1, kg, kb, k2 = jax.random.split(key, 5)

    # Shapes implied by the module: x [1, 1920, 7, 7]
    x = jax.random.normal(kx, (1, 1920, 7, 7), dtype=jnp.float32)
    w1 = 0.05 * jax.random.normal(k1, (192, 1920, 1, 1), dtype=jnp.float32)   # conv2d148 weight
    gamma = 1.0 + 0.1 * jax.random.normal(kg, (192,), dtype=jnp.float32)      # BN weight
    beta = 0.1 * jax.random.normal(kb, (192,), dtype=jnp.float32)             # BN bias
    w2 = 0.05 * jax.random.normal(k2, (48, 192, 3, 3), dtype=jnp.float32)     # conv2d149 weight

    params = prepare_params(w1, gamma, beta, w2, 7, 7)   # one-time repack, outside jit
    x_bf16 = x.astype(jnp.bfloat16)   # upstream producer emits bf16 activations (halved HBM traffic)

    out = jax.block_until_ready(run_module(x_bf16, *params))
    assert out.shape == (1, 48, 7, 7), out.shape

    ref = reference(x, w1, gamma, beta, w2)
    # bf16 matmul operands (f32 accumulation) -> scale-relative tolerance vs. f32 reference.
    err = float(jnp.max(jnp.abs(out - ref)))
    scale = float(jnp.max(jnp.abs(ref)))
    assert err <= 2e-2 * max(scale, 1.0), (err, scale)

    print("KERNEL_OK")
</pallas_src>

<mosaic_0001>
module attributes {stable_mosaic.version = 11 : i64} {
  func.func @fused_kernel(%arg0: memref<1920x49xbf16, #tpu.memory_space<vmem>>, %arg1: memref<192x1920xbf16, #tpu.memory_space<vmem>>, %arg2: memref<192x1xf32, #tpu.memory_space<vmem>>, %arg3: memref<192x1xf32, #tpu.memory_space<vmem>>, %arg4: memref<9x48x192xbf16, #tpu.memory_space<vmem>>, %arg5: memref<9x49xf32, #tpu.memory_space<vmem>>, %arg6: memref<48x49xf32, #tpu.memory_space<vmem>>) attributes {dimension_semantics = [], scalar_prefetch = 0 : i64, scratch_operands = 0 : i64, tpu.core_type = #tpu.core_type<tc>} {
    %c0 = arith.constant 0 : index
    %c0_0 = arith.constant 0 : index
    %0 = vector.load %arg0[%c0, %c0_0] : memref<1920x49xbf16, #tpu.memory_space<vmem>>, vector<1920x49xbf16>
    %cst = arith.constant 0.000000e+00 : bf16
    %1 = vector.broadcast %cst : bf16 to vector<1920x49xbf16>
    %2 = arith.maximumf %0, %1 : vector<1920x49xbf16>
    %c0_1 = arith.constant 0 : index
    %c0_2 = arith.constant 0 : index
    %3 = vector.load %arg1[%c0_1, %c0_2] : memref<192x1920xbf16, #tpu.memory_space<vmem>>, vector<192x1920xbf16>
    %cst_3 = arith.constant dense<0.000000e+00> : vector<192x49xf32>
    %4 = tpu.matmul %3, %2, %cst_3 {dimension_numbers = #tpu.dot_dimension_numbers<[1], [0], [0], [1], [0, 0, 1, 1], [], []>} : vector<192x1920xbf16>, vector<1920x49xbf16>, vector<192x49xf32> -> vector<192x49xf32>
    %cst_4 = arith.constant dense<0.000000e+00> : vector<192xf32>
    %5 = vector.multi_reduction <add>, %4, %cst_4 [1] : vector<192x49xf32> to vector<192xf32>
    %6 = vector.shape_cast %5 : vector<192xf32> to vector<192x1xf32>
    %cst_5 = arith.constant 0.0204081628 : f32
    %7 = vector.broadcast %cst_5 : f32 to vector<192x1xf32>
    %8 = arith.mulf %6, %7 : vector<192x1xf32>
    %9 = arith.mulf %4, %4 : vector<192x49xf32>
    %cst_6 = arith.constant dense<0.000000e+00> : vector<192xf32>
    %10 = vector.multi_reduction <add>, %9, %cst_6 [1] : vector<192x49xf32> to vector<192xf32>
    %11 = vector.shape_cast %10 : vector<192xf32> to vector<192x1xf32>
    %cst_7 = arith.constant 0.0204081628 : f32
    %12 = vector.broadcast %cst_7 : f32 to vector<192x1xf32>
    %13 = arith.mulf %11, %12 : vector<192x1xf32>
    %14 = arith.mulf %8, %8 : vector<192x1xf32>
    %15 = arith.subf %13, %14 : vector<192x1xf32>
    %c0_8 = arith.constant 0 : index
    %c0_9 = arith.constant 0 : index
    %16 = vector.load %arg2[%c0_8, %c0_9] : memref<192x1xf32, #tpu.memory_space<vmem>>, vector<192x1xf32>
    %cst_10 = arith.constant 9.99999974E-6 : f32
    %17 = vector.broadcast %cst_10 : f32 to vector<192x1xf32>
    %18 = arith.addf %15, %17 : vector<192x1xf32>
    %19 = math.rsqrt %18 : vector<192x1xf32>
    %20 = arith.mulf %16, %19 : vector<192x1xf32>
    %c0_11 = arith.constant 0 : index
    %c0_12 = arith.constant 0 : index
    %21 = vector.load %arg3[%c0_11, %c0_12] : memref<192x1xf32, #tpu.memory_space<vmem>>, vector<192x1xf32>
    %22 = arith.mulf %8, %20 : vector<192x1xf32>
    %23 = arith.subf %21, %22 : vector<192x1xf32>
    %24 = vector.broadcast %20 : vector<192x1xf32> to vector<192x49xf32>
    %25 = arith.mulf %4, %24 : vector<192x49xf32>
    %26 = vector.broadcast %23 : vector<192x1xf32> to vector<192x49xf32>
    %27 = arith.addf %25, %26 : vector<192x49xf32>
    %cst_13 = arith.constant 0.000000e+00 : f32
    %28 = vector.broadcast %cst_13 : f32 to vector<192x49xf32>
    %29 = arith.maximumf %27, %28 : vector<192x49xf32>
    %30 = vector.extract_strided_slice %29 {offsets = [0, 41], sizes = [192, 8], strides = [1, 1]} : vector<192x49xf32> to vector<192x8xf32>
    %31 = vector.extract_strided_slice %29 {offsets = [0, 0], sizes = [192, 41], strides = [1, 1]} : vector<192x49xf32> to vector<192x41xf32>
    %32 = tpu.concatenate %30, %31 in 1 : vector<192x8xf32>, vector<192x41xf32> -> vector<192x49xf32>
    %c0_14 = arith.constant 0 : index
    %c0_15 = arith.constant 0 : index
    %33 = vector.load %arg5[%c0_14, %c0_15] : memref<9x49xf32, #tpu.memory_space<vmem>>, vector<1x49xf32>
    %34 = vector.broadcast %33 : vector<1x49xf32> to vector<192x49xf32>
    %35 = arith.mulf %32, %34 : vector<192x49xf32>
    %c0_16 = arith.constant 0 : index
    %c0_17 = arith.constant 0 : index
    %c0_18 = arith.constant 0 : index
    %36 = vector.load %arg4[%c0_16, %c0_17, %c0_18] : memref<9x48x192xbf16, #tpu.memory_space<vmem>>, vector<1x48x192xbf16>
    %37 = vector.shape_cast %36 : vector<1x48x192xbf16> to vector<48x192xbf16>
    %38 = arith.truncf %35 : vector<192x49xf32> to vector<192x49xbf16>
    %cst_19 = arith.constant dense<0.000000e+00> : vector<48x49xf32>
    %39 = tpu.matmul %37, %38, %cst_19 {dimension_numbers = #tpu.dot_dimension_numbers<[1], [0], [0], [1], [0, 0, 1, 1], [], []>} : vector<48x192xbf16>, vector<192x49xbf16>, vector<48x49xf32> -> vector<48x49xf32>
    %40 = vector.extract_strided_slice %29 {offsets = [0, 42], sizes = [192, 7], strides = [1, 1]} : vector<192x49xf32> to vector<192x7xf32>
    %41 = vector.extract_strided_slice %29 {offsets = [0, 0], sizes = [192, 42], strides = [1, 1]} : vector<192x49xf32> to vector<192x42xf32>
    %42 = tpu.concatenate %40, %41 in 1 : vector<192x7xf32>, vector<192x42xf32> -> vector<192x49xf32>
    %c1 = arith.constant 1 : index
    %c0_20 = arith.constant 0 : index
    %43 = vector.load %arg5[%c1, %c0_20] : memref<9x49xf32, #tpu.memory_space<vmem>>, vector<1x49xf32>
    %44 = vector.broadcast %43 : vector<1x49xf32> to vector<192x49xf32>
    %45 = arith.mulf %42, %44 : vector<192x49xf32>
    %c1_21 = arith.constant 1 : index
    %c0_22 = arith.constant 0 : index
    %c0_23 = arith.constant 0 : index
    %46 = vector.load %arg4[%c1_21, %c0_22, %c0_23] : memref<9x48x192xbf16, #tpu.memory_space<vmem>>, vector<1x48x192xbf16>
    %47 = vector.shape_cast %46 : vector<1x48x192xbf16> to vector<48x192xbf16>
    %48 = arith.truncf %45 : vector<192x49xf32> to vector<192x49xbf16>
    %cst_24 = arith.constant dense<0.000000e+00> : vector<48x49xf32>
    %49 = tpu.matmul %47, %48, %cst_24 {dimension_numbers = #tpu.dot_dimension_numbers<[1], [0], [0], [1], [0, 0, 1, 1], [], []>} : vector<48x192xbf16>, vector<192x49xbf16>, vector<48x49xf32> -> vector<48x49xf32>
    %50 = arith.addf %39, %49 : vector<48x49xf32>
    %51 = vector.extract_strided_slice %29 {offsets = [0, 43], sizes = [192, 6], strides = [1, 1]} : vector<192x49xf32> to vector<192x6xf32>
    %52 = vector.extract_strided_slice %29 {offsets = [0, 0], sizes = [192, 43], strides = [1, 1]} : vector<192x49xf32> to vector<192x43xf32>
    %53 = tpu.concatenate %51, %52 in 1 : vector<192x6xf32>, vector<192x43xf32> -> vector<192x49xf32>
    %c2 = arith.constant 2 : index
    %c0_25 = arith.constant 0 : index
    %54 = vector.load %arg5[%c2, %c0_25] : memref<9x49xf32, #tpu.memory_space<vmem>>, vector<1x49xf32>
    %55 = vector.broadcast %54 : vector<1x49xf32> to vector<192x49xf32>
    %56 = arith.mulf %53, %55 : vector<192x49xf32>
    %c2_26 = arith.constant 2 : index
    %c0_27 = arith.constant 0 : index
    %c0_28 = arith.constant 0 : index
    %57 = vector.load %arg4[%c2_26, %c0_27, %c0_28] : memref<9x48x192xbf16, #tpu.memory_space<vmem>>, vector<1x48x192xbf16>
    %58 = vector.shape_cast %57 : vector<1x48x192xbf16> to vector<48x192xbf16>
    %59 = arith.truncf %56 : vector<192x49xf32> to vector<192x49xbf16>
    %cst_29 = arith.constant dense<0.000000e+00> : vector<48x49xf32>
    %60 = tpu.matmul %58, %59, %cst_29 {dimension_numbers = #tpu.dot_dimension_numbers<[1], [0], [0], [1], [0, 0, 1, 1], [], []>} : vector<48x192xbf16>, vector<192x49xbf16>, vector<48x49xf32> -> vector<48x49xf32>
    %61 = arith.addf %50, %60 : vector<48x49xf32>
    %62 = vector.extract_strided_slice %29 {offsets = [0, 48], sizes = [192, 1], strides = [1, 1]} : vector<192x49xf32> to vector<192x1xf32>
    %63 = vector.extract_strided_slice %29 {offsets = [0, 0], sizes = [192, 48], strides = [1, 1]} : vector<192x49xf32> to vector<192x48xf32>
    %64 = tpu.concatenate %62, %63 in 1 : vector<192x1xf32>, vector<192x48xf32> -> vector<192x49xf32>
    %c3 = arith.constant 3 : index
    %c0_30 = arith.constant 0 : index
    %65 = vector.load %arg5[%c3, %c0_30] : memref<9x49xf32, #tpu.memory_space<vmem>>, vector<1x49xf32>
    %66 = vector.broadcast %65 : vector<1x49xf32> to vector<192x49xf32>
    %67 = arith.mulf %64, %66 : vector<192x49xf32>
    %c3_31 = arith.constant 3 : index
    %c0_32 = arith.constant 0 : index
    %c0_33 = arith.constant 0 : index
    %68 = vector.load %arg4[%c3_31, %c0_32, %c0_33] : memref<9x48x192xbf16, #tpu.memory_space<vmem>>, vector<1x48x192xbf16>
    %69 = vector.shape_cast %68 : vector<1x48x192xbf16> to vector<48x192xbf16>
    %70 = arith.truncf %67 : vector<192x49xf32> to vector<192x49xbf16>
    %cst_34 = arith.constant dense<0.000000e+00> : vector<48x49xf32>
    %71 = tpu.matmul %69, %70, %cst_34 {dimension_numbers = #tpu.dot_dimension_numbers<[1], [0], [0], [1], [0, 0, 1, 1], [], []>} : vector<48x192xbf16>, vector<192x49xbf16>, vector<48x49xf32> -> vector<48x49xf32>
    %72 = arith.addf %61, %71 : vector<48x49xf32>
    %c4 = arith.constant 4 : index
    %c0_35 = arith.constant 0 : index
    %c0_36 = arith.constant 0 : index
    %73 = vector.load %arg4[%c4, %c0_35, %c0_36] : memref<9x48x192xbf16, #tpu.memory_space<vmem>>, vector<1x48x192xbf16>
    %74 = vector.shape_cast %73 : vector<1x48x192xbf16> to vector<48x192xbf16>
    %75 = arith.truncf %29 : vector<192x49xf32> to vector<192x49xbf16>
    %cst_37 = arith.constant dense<0.000000e+00> : vector<48x49xf32>
    %76 = tpu.matmul %74, %75, %cst_37 {dimension_numbers = #tpu.dot_dimension_numbers<[1], [0], [0], [1], [0, 0, 1, 1], [], []>} : vector<48x192xbf16>, vector<192x49xbf16>, vector<48x49xf32> -> vector<48x49xf32>
    %77 = arith.addf %72, %76 : vector<48x49xf32>
    %78 = vector.extract_strided_slice %29 {offsets = [0, 1], sizes = [192, 48], strides = [1, 1]} : vector<192x49xf32> to vector<192x48xf32>
    %79 = vector.extract_strided_slice %29 {offsets = [0, 0], sizes = [192, 1], strides = [1, 1]} : vector<192x49xf32> to vector<192x1xf32>
    %80 = tpu.concatenate %78, %79 in 1 : vector<192x48xf32>, vector<192x1xf32> -> vector<192x49xf32>
    %c5 = arith.constant 5 : index
    %c0_38 = arith.constant 0 : index
    %81 = vector.load %arg5[%c5, %c0_38] : memref<9x49xf32, #tpu.memory_space<vmem>>, vector<1x49xf32>
    %82 = vector.broadcast %81 : vector<1x49xf32> to vector<192x49xf32>
    %83 = arith.mulf %80, %82 : vector<192x49xf32>
    %c5_39 = arith.constant 5 : index
    %c0_40 = arith.constant 0 : index
    %c0_41 = arith.constant 0 : index
    %84 = vector.load %arg4[%c5_39, %c0_40, %c0_41] : memref<9x48x192xbf16, #tpu.memory_space<vmem>>, vector<1x48x192xbf16>
    %85 = vector.shape_cast %84 : vector<1x48x192xbf16> to vector<48x192xbf16>
    %86 = arith.truncf %83 : vector<192x49xf32> to vector<192x49xbf16>
    %cst_42 = arith.constant dense<0.000000e+00> : vector<48x49xf32>
    %87 = tpu.matmul %85, %86, %cst_42 {dimension_numbers = #tpu.dot_dimension_numbers<[1], [0], [0], [1], [0, 0, 1, 1], [], []>} : vector<48x192xbf16>, vector<192x49xbf16>, vector<48x49xf32> -> vector<48x49xf32>
    %88 = arith.addf %77, %87 : vector<48x49xf32>
    %89 = vector.extract_strided_slice %29 {offsets = [0, 6], sizes = [192, 43], strides = [1, 1]} : vector<192x49xf32> to vector<192x43xf32>
    %90 = vector.extract_strided_slice %29 {offsets = [0, 0], sizes = [192, 6], strides = [1, 1]} : vector<192x49xf32> to vector<192x6xf32>
    %91 = tpu.concatenate %89, %90 in 1 : vector<192x43xf32>, vector<192x6xf32> -> vector<192x49xf32>
    %c6 = arith.constant 6 : index
    %c0_43 = arith.constant 0 : index
    %92 = vector.load %arg5[%c6, %c0_43] : memref<9x49xf32, #tpu.memory_space<vmem>>, vector<1x49xf32>
    %93 = vector.broadcast %92 : vector<1x49xf32> to vector<192x49xf32>
    %94 = arith.mulf %91, %93 : vector<192x49xf32>
    %c6_44 = arith.constant 6 : index
    %c0_45 = arith.constant 0 : index
    %c0_46 = arith.constant 0 : index
    %95 = vector.load %arg4[%c6_44, %c0_45, %c0_46] : memref<9x48x192xbf16, #tpu.memory_space<vmem>>, vector<1x48x192xbf16>
    %96 = vector.shape_cast %95 : vector<1x48x192xbf16> to vector<48x192xbf16>
    %97 = arith.truncf %94 : vector<192x49xf32> to vector<192x49xbf16>
    %cst_47 = arith.constant dense<0.000000e+00> : vector<48x49xf32>
    %98 = tpu.matmul %96, %97, %cst_47 {dimension_numbers = #tpu.dot_dimension_numbers<[1], [0], [0], [1], [0, 0, 1, 1], [], []>} : vector<48x192xbf16>, vector<192x49xbf16>, vector<48x49xf32> -> vector<48x49xf32>
    %99 = arith.addf %88, %98 : vector<48x49xf32>
    %100 = vector.extract_strided_slice %29 {offsets = [0, 7], sizes = [192, 42], strides = [1, 1]} : vector<192x49xf32> to vector<192x42xf32>
    %101 = vector.extract_strided_slice %29 {offsets = [0, 0], sizes = [192, 7], strides = [1, 1]} : vector<192x49xf32> to vector<192x7xf32>
    %102 = tpu.concatenate %100, %101 in 1 : vector<192x42xf32>, vector<192x7xf32> -> vector<192x49xf32>
    %c7 = arith.constant 7 : index
    %c0_48 = arith.constant 0 : index
    %103 = vector.load %arg5[%c7, %c0_48] : memref<9x49xf32, #tpu.memory_space<vmem>>, vector<1x49xf32>
    %104 = vector.broadcast %103 : vector<1x49xf32> to vector<192x49xf32>
    %105 = arith.mulf %102, %104 : vector<192x49xf32>
    %c7_49 = arith.constant 7 : index
    %c0_50 = arith.constant 0 : index
    %c0_51 = arith.constant 0 : index
    %106 = vector.load %arg4[%c7_49, %c0_50, %c0_51] : memref<9x48x192xbf16, #tpu.memory_space<vmem>>, vector<1x48x192xbf16>
    %107 = vector.shape_cast %106 : vector<1x48x192xbf16> to vector<48x192xbf16>
    %108 = arith.truncf %105 : vector<192x49xf32> to vector<192x49xbf16>
    %cst_52 = arith.constant dense<0.000000e+00> : vector<48x49xf32>
    %109 = tpu.matmul %107, %108, %cst_52 {dimension_numbers = #tpu.dot_dimension_numbers<[1], [0], [0], [1], [0, 0, 1, 1], [], []>} : vector<48x192xbf16>, vector<192x49xbf16>, vector<48x49xf32> -> vector<48x49xf32>
    %110 = arith.addf %99, %109 : vector<48x49xf32>
    %111 = vector.extract_strided_slice %29 {offsets = [0, 8], sizes = [192, 41], strides = [1, 1]} : vector<192x49xf32> to vector<192x41xf32>
    %112 = vector.extract_strided_slice %29 {offsets = [0, 0], sizes = [192, 8], strides = [1, 1]} : vector<192x49xf32> to vector<192x8xf32>
    %113 = tpu.concatenate %111, %112 in 1 : vector<192x41xf32>, vector<192x8xf32> -> vector<192x49xf32>
    %c8 = arith.constant 8 : index
    %c0_53 = arith.constant 0 : index
    %114 = vector.load %arg5[%c8, %c0_53] : memref<9x49xf32, #tpu.memory_space<vmem>>, vector<1x49xf32>
    %115 = vector.broadcast %114 : vector<1x49xf32> to vector<192x49xf32>
    %116 = arith.mulf %113, %115 : vector<192x49xf32>
    %c8_54 = arith.constant 8 : index
    %c0_55 = arith.constant 0 : index
    %c0_56 = arith.constant 0 : index
    %117 = vector.load %arg4[%c8_54, %c0_55, %c0_56] : memref<9x48x192xbf16, #tpu.memory_space<vmem>>, vector<1x48x192xbf16>
    %118 = vector.shape_cast %117 : vector<1x48x192xbf16> to vector<48x192xbf16>
    %119 = arith.truncf %116 : vector<192x49xf32> to vector<192x49xbf16>
    %cst_57 = arith.constant dense<0.000000e+00> : vector<48x49xf32>
    %120 = tpu.matmul %118, %119, %cst_57 {dimension_numbers = #tpu.dot_dimension_numbers<[1], [0], [0], [1], [0, 0, 1, 1], [], []>} : vector<48x192xbf16>, vector<192x49xbf16>, vector<48x49xf32> -> vector<48x49xf32>
    %121 = arith.addf %110, %120 : vector<48x49xf32>
    %c0_58 = arith.constant 0 : index
    %c0_59 = arith.constant 0 : index
    %122 = vector.load %arg6[%c0_58, %c0_59] : memref<48x49xf32, #tpu.memory_space<vmem>>, vector<48x49xf32>
    tpu.vector_store %arg6[%c0_58, %c0_59], %121 {strides = array<i32>} : memref<48x49xf32, #tpu.memory_space<vmem>>, vector<48x49xf32>,
    return
  }
}

</mosaic_0001>

<llo_original>
// kernel: run_module.1
$region0: #{run_module.1}
  #allocation0 [shape = 'u32[]', space=smem, size = 0x4, offset = 0x4, fixed_abs, tag = 'smem constant byte address 0x4 - core index']
  #allocation1 [shape = 'u32[72,128]{1,0:T(1,128)}', space=vmem, size = 0x9000, scoped, tag = 'internal scratch']
  %s0 = inlined_call_operand.vmem [shape: bf16[1920,49], index: 0, kind: input, shape index: {}]
  %s1 = inlined_call_operand.vmem [shape: bf16[192,1920], index: 1, kind: input, shape index: {}]
  %s2 = inlined_call_operand.vmem [shape: f32[192,1], index: 2, kind: input, shape index: {}]
  %s3 = inlined_call_operand.vmem [shape: f32[192,1], index: 3, kind: input, shape index: {}]
  %s4 = inlined_call_operand.vmem [shape: bf16[9,48,192], index: 4, kind: input, shape index: {}]
  %s5 = inlined_call_operand.vmem [shape: f32[9,49], index: 5, kind: input, shape index: {}]
  %s6 = inlined_call_operand.vmem [shape: f32[48,49], index: 6, kind: output, shape index: {}]
  %s7 = sld [smem:[#allocation0]]
  $region34: #{run_module.1} parent=0
    _
  %s9 = ssub.s32 1, %s7
  %s10 = scalar_select 0, %s9, %s7
  // Predicated region
  $region2: #{run_module.1} parent=0 // pred_check
    _
  $region3: #{run_module.1} parent=0 // pred_check_branch
    %12 = sbr.rel (0) target = $region5
  $region4: #{run_module.1} parent=0 // pred_region
    _
  $region5: #{run_module.1} parent=0 // pred_fallthru
    _
  // Predicated region
  $region6: #{run_module.1} parent=0 // pred_check
    _
  $region7: #{run_module.1} parent=0 // pred_check_branch
    %14 = sbr.rel (0) target = $region9
  $region8: #{run_module.1} parent=0 // pred_region
    _
  $region9: #{run_module.1} parent=0 // pred_fallthru
    _
  // Predicated region
  $region10: #{run_module.1} parent=0 // pred_check
    _
  $region11: #{run_module.1} parent=0 // pred_check_branch
    %16 = sbr.rel (0) target = $region13
  $region12: #{run_module.1} parent=0 // pred_region
    _
  $region13: #{run_module.1} parent=0 // pred_fallthru
    _
  // Predicated region
  $region14: #{run_module.1} parent=0 // pred_check
    _
  $region15: #{run_module.1} parent=0 // pred_check_branch
    %18 = sbr.rel (0) target = $region17
  $region16: #{run_module.1} parent=0 // pred_region
    _
  $region17: #{run_module.1} parent=0 // pred_fallthru
    _
  // Predicated region
  $region18: #{run_module.1} parent=0 // pred_check
    _
  $region19: #{run_module.1} parent=0 // pred_check_branch
    %20 = sbr.rel (0) target = $region21
  $region20: #{run_module.1} parent=0 // pred_region
    _
  $region21: #{run_module.1} parent=0 // pred_fallthru
    _
  // Predicated region
  $region22: #{run_module.1} parent=0 // pred_check
    _
  $region23: #{run_module.1} parent=0 // pred_check_branch
    %22 = sbr.rel (0) target = $region25
  $region24: #{run_module.1} parent=0 // pred_region
    _
  $region25: #{run_module.1} parent=0 // pred_fallthru
    _
  %v24 = vld [vmem:[%s0] sm:$0xf]
  %v25 = vld [vmem:[%s0 + $0x4] sm:$0xf]
  %v26 = vld [vmem:[%s0 + $0x8] sm:$0xf]
  %v27 = vld [vmem:[%s0 + $0xc] sm:$0xf]
  %v28 = vld [vmem:[%s0 + $0x10] sm:$0xf]
  %v29 = vld [vmem:[%s0 + $0x14] sm:$0xf]
  %v30 = vld [vmem:[%s0 + $0x18] sm:$0xf]
  %v31 = vld [vmem:[%s0 + $0x1c] sm:$0xf]
  %v32 = vld [vmem:[%s0 + $0x20] sm:$0xf]
  %v33 = vld [vmem:[%s0 + $0x24] sm:$0xf]
  %v34 = vld [vmem:[%s0 + $0x28] sm:$0xf]
  %v35 = vld [vmem:[%s0 + $0x2c] sm:$0xf]
  %v36 = vld [vmem:[%s0 + $0x30] sm:$0xf]
  %v37 = vld [vmem:[%s0 + $0x34] sm:$0xf]
  %v38 = vld [vmem:[%s0 + $0x38] sm:$0xf]
  %v39 = vld [vmem:[%s0 + $0x3c] sm:$0xf]
  %v40 = vld [vmem:[%s0 + $0x40] sm:$0xf]
  %v41 = vld [vmem:[%s0 + $0x44] sm:$0xf]
  %v42 = vld [vmem:[%s0 + $0x48] sm:$0xf]
  %v43 = vld [vmem:[%s0 + $0x4c] sm:$0xf]
  %v44 = vld [vmem:[%s0 + $0x50] sm:$0xf]
  %v45 = vld [vmem:[%s0 + $0x54] sm:$0xf]
  %v46 = vld [vmem:[%s0 + $0x58] sm:$0xf]
  %v47 = vld [vmem:[%s0 + $0x5c] sm:$0xf]
  %v48 = vld [vmem:[%s0 + $0x60] sm:$0xf]
  %v49 = vld [vmem:[%s0 + $0x64] sm:$0xf]
  %v50 = vld [vmem:[%s0 + $0x68] sm:$0xf]
  %v51 = vld [vmem:[%s0 + $0x6c] sm:$0xf]
  %v52 = vld [vmem:[%s0 + $0x70] sm:$0xf]
  %v53 = vld [vmem:[%s0 + $0x74] sm:$0xf]
  %v54 = vld [vmem:[%s0 + $0x78] sm:$0xf]
  %v55 = vld [vmem:[%s0 + $0x7c] sm:$0xf]
  %v56 = vld [vmem:[%s0 + $0x80] sm:$0xf]
  %v57 = vld [vmem:[%s0 + $0x84] sm:$0xf]
  %v58 = vld [vmem:[%s0 + $0x88] sm:$0xf]
  %v59 = vld [vmem:[%s0 + $0x8c] sm:$0xf]
  %v60 = vld [vmem:[%s0 + $0x90] sm:$0xf]
  %v61 = vld [vmem:[%s0 + $0x94] sm:$0xf]
  %v62 = vld [vmem:[%s0 + $0x98] sm:$0xf]
  %v63 = vld [vmem:[%s0 + $0x9c] sm:$0xf]
  %v64 = vld [vmem:[%s0 + $0xa0] sm:$0xf]
  %v65 = vld [vmem:[%s0 + $0xa4] sm:$0xf]
  %v66 = vld [vmem:[%s0 + $0xa8] sm:$0xf]
  %v67 = vld [vmem:[%s0 + $0xac] sm:$0xf]
  %v68 = vld [vmem:[%s0 + $0xb0] sm:$0xf]
  %v69 = vld [vmem:[%s0 + $0xb4] sm:$0xf]
  %v70 = vld [vmem:[%s0 + $0xb8] sm:$0xf]
  %v71 = vld [vmem:[%s0 + $0xbc] sm:$0xf]
  %v72 = vld [vmem:[%s0 + $0xc0] sm:$0xf]
  %v73 = vld [vmem:[%s0 + $0xc4] sm:$0xf]
  %v74 = vld [vmem:[%s0 + $0xc8] sm:$0xf]
  %v75 = vld [vmem:[%s0 + $0xcc] sm:$0xf]
  %v76 = vld [vmem:[%s0 + $0xd0] sm:$0xf]
  %v77 = vld [vmem:[%s0 + $0xd4] sm:$0xf]
  %v78 = vld [vmem:[%s0 + $0xd8] sm:$0xf]
  %v79 = vld [vmem:[%s0 + $0xdc] sm:$0xf]
  %v80 = vld [vmem:[%s0 + $0xe0] sm:$0xf]
  %v81 = vld [vmem:[%s0 + $0xe4] sm:$0xf]
  %v82 = vld [vmem:[%s0 + $0xe8] sm:$0xf]
  %v83 = vld [vmem:[%s0 + $0xec] sm:$0xf]
  %v84 = vld [vmem:[%s0 + $0xf0] sm:$0xf]
  %v85 = vld [vmem:[%s0 + $0xf4] sm:$0xf]
  %v86 = vld [vmem:[%s0 + $0xf8] sm:$0xf]
  %v87 = vld [vmem:[%s0 + $0xfc] sm:$0xf]
  %v88 = vld [vmem:[%s0 + $0x100] sm:$0xf]
  %v89 = vld [vmem:[%s0 + $0x104] sm:$0xf]
  %v90 = vld [vmem:[%s0 + $0x108] sm:$0xf]
  %v91 = vld [vmem:[%s0 + $0x10c] sm:$0xf]
  %v92 = vld [vmem:[%s0 + $0x110] sm:$0xf]
  %v93 = vld [vmem:[%s0 + $0x114] sm:$0xf]
  %v94 = vld [vmem:[%s0 + $0x118] sm:$0xf]
  %v95 = vld [vmem:[%s0 + $0x11c] sm:$0xf]
  %v96 = vld [vmem:[%s0 + $0x120] sm:$0xf]
  %v97 = vld [vmem:[%s0 + $0x124] sm:$0xf]
  %v98 = vld [vmem:[%s0 + $0x128] sm:$0xf]
  %v99 = vld [vmem:[%s0 + $0x12c] sm:$0xf]
  %v100 = vld [vmem:[%s0 + $0x130] sm:$0xf]
  %v101 = vld [vmem:[%s0 + $0x134] sm:$0xf]
  %v102 = vld [vmem:[%s0 + $0x138] sm:$0xf]
  %v103 = vld [vmem:[%s0 + $0x13c] sm:$0xf]
  %v104 = vld [vmem:[%s0 + $0x140] sm:$0xf]
  %v105 = vld [vmem:[%s0 + $0x144] sm:$0xf]
  %v106 = vld [vmem:[%s0 + $0x148] sm:$0xf]
  %v107 = vld [vmem:[%s0 + $0x14c] sm:$0xf]
  %v108 = vld [vmem:[%s0 + $0x150] sm:$0xf]
  %v109 = vld [vmem:[%s0 + $0x154] sm:$0xf]
  %v110 = vld [vmem:[%s0 + $0x158] sm:$0xf]
  %v111 = vld [vmem:[%s0 + $0x15c] sm:$0xf]
  %v112 = vld [vmem:[%s0 + $0x160] sm:$0xf]
  %v113 = vld [vmem:[%s0 + $0x164] sm:$0xf]
  %v114 = vld [vmem:[%s0 + $0x168] sm:$0xf]
  %v115 = vld [vmem:[%s0 + $0x16c] sm:$0xf]
  %v116 = vld [vmem:[%s0 + $0x170] sm:$0xf]
  %v117 = vld [vmem:[%s0 + $0x174] sm:$0xf]
  %v118 = vld [vmem:[%s0 + $0x178] sm:$0xf]
  %v119 = vld [vmem:[%s0 + $0x17c] sm:$0xf]
  %v120 = vld [vmem:[%s0 + $0x180] sm:$0xf]
  %v121 = vld [vmem:[%s0 + $0x184] sm:$0xf]
  %v122 = vld [vmem:[%s0 + $0x188] sm:$0xf]
  %v123 = vld [vmem:[%s0 + $0x18c] sm:$0xf]
  %v124 = vld [vmem:[%s0 + $0x190] sm:$0xf]
  %v125 = vld [vmem:[%s0 + $0x194] sm:$0xf]
  %v126 = vld [vmem:[%s0 + $0x198] sm:$0xf]
  %v127 = vld [vmem:[%s0 + $0x19c] sm:$0xf]
  %v128 = vld [vmem:[%s0 + $0x1a0] sm:$0xf]
  %v129 = vld [vmem:[%s0 + $0x1a4] sm:$0xf]
  %v130 = vld [vmem:[%s0 + $0x1a8] sm:$0xf]
  %v131 = vld [vmem:[%s0 + $0x1ac] sm:$0xf]
  %v132 = vld [vmem:[%s0 + $0x1b0] sm:$0xf]
  %v133 = vld [vmem:[%s0 + $0x1b4] sm:$0xf]
  %v134 = vld [vmem:[%s0 + $0x1b8] sm:$0xf]
  %v135 = vld [vmem:[%s0 + $0x1bc] sm:$0xf]
  %v136 = vld [vmem:[%s0 + $0x1c0] sm:$0xf]
  %v137 = vld [vmem:[%s0 + $0x1c4] sm:$0xf]
  %v138 = vld [vmem:[%s0 + $0x1c8] sm:$0xf]
  %v139 = vld [vmem:[%s0 + $0x1cc] sm:$0xf]
  %v140 = vld [vmem:[%s0 + $0x1d0] sm:$0xf]
  %v141 = vld [vmem:[%s0 + $0x1d4] sm:$0xf]
  %v142 = vld [vmem:[%s0 + $0x1d8] sm:$0xf]
  %v143 = vld [vmem:[%s0 + $0x1dc] sm:$0xf]
  %v144 = vld [vmem:[%s0 + $0x1e0] sm:$0xf]
  %v145 = vld [vmem:[%s0 + $0x1e4] sm:$0xf]
  %v146 = vld [vmem:[%s0 + $0x1e8] sm:$0xf]
  %v147 = vld [vmem:[%s0 + $0x1ec] sm:$0xf]
  %v148 = vld [vmem:[%s0 + $0x1f0] sm:$0xf]
  %v149 = vld [vmem:[%s0 + $0x1f4] sm:$0xf]
  %v150 = vld [vmem:[%s0 + $0x1f8] sm:$0xf]
  %v151 = vld [vmem:[%s0 + $0x1fc] sm:$0xf]
  %v152 = vld [vmem:[%s0 + $0x200] sm:$0xf]
  %v153 = vld [vmem:[%s0 + $0x204] sm:$0xf]
  %v154 = vld [vmem:[%s0 + $0x208] sm:$0xf]
  %v155 = vld [vmem:[%s0 + $0x20c] sm:$0xf]
  %v156 = vld [vmem:[%s0 + $0x210] sm:$0xf]
  %v157 = vld [vmem:[%s0 + $0x214] sm:$0xf]
  %v158 = vld [vmem:[%s0 + $0x218] sm:$0xf]
  %v159 = vld [vmem:[%s0 + $0x21c] sm:$0xf]
  %v160 = vld [vmem:[%s0 + $0x220] sm:$0xf]
  %v161 = vld [vmem:[%s0 + $0x224] sm:$0xf]
  %v162 = vld [vmem:[%s0 + $0x228] sm:$0xf]
  %v163 = vld [vmem:[%s0 + $0x22c] sm:$0xf]
  %v164 = vld [vmem:[%s0 + $0x230] sm:$0xf]
  %v165 = vld [vmem:[%s0 + $0x234] sm:$0xf]
  %v166 = vld [vmem:[%s0 + $0x238] sm:$0xf]
  %v167 = vld [vmem:[%s0 + $0x23c] sm:$0xf]
  %v168 = vld [vmem:[%s0 + $0x240] sm:$0xf]
  %v169 = vld [vmem:[%s0 + $0x244] sm:$0xf]
  %v170 = vld [vmem:[%s0 + $0x248] sm:$0xf]
  %v171 = vld [vmem:[%s0 + $0x24c] sm:$0xf]
  %v172 = vld [vmem:[%s0 + $0x250] sm:$0xf]
  %v173 = vld [vmem:[%s0 + $0x254] sm:$0xf]
  %v174 = vld [vmem:[%s0 + $0x258] sm:$0xf]
  %v175 = vld [vmem:[%s0 + $0x25c] sm:$0xf]
  %v176 = vld [vmem:[%s0 + $0x260] sm:$0xf]
  %v177 = vld [vmem:[%s0 + $0x264] sm:$0xf]
  %v178 = vld [vmem:[%s0 + $0x268] sm:$0xf]
  %v179 = vld [vmem:[%s0 + $0x26c] sm:$0xf]
  %v180 = vld [vmem:[%s0 + $0x270] sm:$0xf]
  %v181 = vld [vmem:[%s0 + $0x274] sm:$0xf]
  %v182 = vld [vmem:[%s0 + $0x278] sm:$0xf]
  %v183 = vld [vmem:[%s0 + $0x27c] sm:$0xf]
  %v184 = vld [vmem:[%s0 + $0x280] sm:$0xf]
  %v185 = vld [vmem:[%s0 + $0x284] sm:$0xf]
  %v186 = vld [vmem:[%s0 + $0x288] sm:$0xf]
  %v187 = vld [vmem:[%s0 + $0x28c] sm:$0xf]
  %v188 = vld [vmem:[%s0 + $0x290] sm:$0xf]
  %v189 = vld [vmem:[%s0 + $0x294] sm:$0xf]
  %v190 = vld [vmem:[%s0 + $0x298] sm:$0xf]
  %v191 = vld [vmem:[%s0 + $0x29c] sm:$0xf]
  %v192 = vld [vmem:[%s0 + $0x2a0] sm:$0xf]
  %v193 = vld [vmem:[%s0 + $0x2a4] sm:$0xf]
  %v194 = vld [vmem:[%s0 + $0x2a8] sm:$0xf]
  %v195 = vld [vmem:[%s0 + $0x2ac] sm:$0xf]
  %v196 = vld [vmem:[%s0 + $0x2b0] sm:$0xf]
  %v197 = vld [vmem:[%s0 + $0x2b4] sm:$0xf]
  %v198 = vld [vmem:[%s0 + $0x2b8] sm:$0xf]
  %v199 = vld [vmem:[%s0 + $0x2bc] sm:$0xf]
  %v200 = vld [vmem:[%s0 + $0x2c0] sm:$0xf]
  %v201 = vld [vmem:[%s0 + $0x2c4] sm:$0xf]
  %v202 = vld [vmem:[%s0 + $0x2c8] sm:$0xf]
  %v203 = vld [vmem:[%s0 + $0x2cc] sm:$0xf]
  %v204 = vld [vmem:[%s0 + $0x2d0] sm:$0xf]
  %v205 = vld [vmem:[%s0 + $0x2d4] sm:$0xf]
  %v206 = vld [vmem:[%s0 + $0x2d8] sm:$0xf]
  %v207 = vld [vmem:[%s0 + $0x2dc] sm:$0xf]
  %v208 = vld [vmem:[%s0 + $0x2e0] sm:$0xf]
  %v209 = vld [vmem:[%s0 + $0x2e4] sm:$0xf]
  %v210 = vld [vmem:[%s0 + $0x2e8] sm:$0xf]
  %v211 = vld [vmem:[%s0 + $0x2ec] sm:$0xf]
  %v212 = vld [vmem:[%s0 + $0x2f0] sm:$0xf]
  %v213 = vld [vmem:[%s0 + $0x2f4] sm:$0xf]
  %v214 = vld [vmem:[%s0 + $0x2f8] sm:$0xf]
  %v215 = vld [vmem:[%s0 + $0x2fc] sm:$0xf]
  %v216 = vld [vmem:[%s0 + $0x300] sm:$0xf]
  %v217 = vld [vmem:[%s0 + $0x304] sm:$0xf]
  %v218 = vld [vmem:[%s0 + $0x308] sm:$0xf]
  %v219 = vld [vmem:[%s0 + $0x30c] sm:$0xf]
  %v220 = vld [vmem:[%s0 + $0x310] sm:$0xf]
  %v221 = vld [vmem:[%s0 + $0x314] sm:$0xf]
  %v222 = vld [vmem:[%s0 + $0x318] sm:$0xf]
  %v223 = vld [vmem:[%s0 + $0x31c] sm:$0xf]
  %v224 = vld [vmem:[%s0 + $0x320] sm:$0xf]
  %v225 = vld [vmem:[%s0 + $0x324] sm:$0xf]
  %v226 = vld [vmem:[%s0 + $0x328] sm:$0xf]
  %v227 = vld [vmem:[%s0 + $0x32c] sm:$0xf]
  %v228 = vld [vmem:[%s0 + $0x330] sm:$0xf]
  %v229 = vld [vmem:[%s0 + $0x334] sm:$0xf]
  %v230 = vld [vmem:[%s0 + $0x338] sm:$0xf]
  %v231 = vld [vmem:[%s0 + $0x33c] sm:$0xf]
  %v232 = vld [vmem:[%s0 + $0x340] sm:$0xf]
  %v233 = vld [vmem:[%s0 + $0x344] sm:$0xf]
  %v234 = vld [vmem:[%s0 + $0x348] sm:$0xf]
  %v235 = vld [vmem:[%s0 + $0x34c] sm:$0xf]
  %v236 = vld [vmem:[%s0 + $0x350] sm:$0xf]
  %v237 = vld [vmem:[%s0 + $0x354] sm:$0xf]
  %v238 = vld [vmem:[%s0 + $0x358] sm:$0xf]
  %v239 = vld [vmem:[%s0 + $0x35c] sm:$0xf]
  %v240 = vld [vmem:[%s0 + $0x360] sm:$0xf]
  %v241 = vld [vmem:[%s0 + $0x364] sm:$0xf]
  %v242 = vld [vmem:[%s0 + $0x368] sm:$0xf]
  %v243 = vld [vmem:[%s0 + $0x36c] sm:$0xf]
  %v244 = vld [vmem:[%s0 + $0x370] sm:$0xf]
  %v245 = vld [vmem:[%s0 + $0x374] sm:$0xf]
  %v246 = vld [vmem:[%s0 + $0x378] sm:$0xf]
  %v247 = vld [vmem:[%s0 + $0x37c] sm:$0xf]
  %v248 = vld [vmem:[%s0 + $0x380] sm:$0xf]
  %v249 = vld [vmem:[%s0 + $0x384] sm:$0xf]
  %v250 = vld [vmem:[%s0 + $0x388] sm:$0xf]
  %v251 = vld [vmem:[%s0 + $0x38c] sm:$0xf]
  %v252 = vld [vmem:[%s0 + $0x390] sm:$0xf]
  %v253 = vld [vmem:[%s0 + $0x394] sm:$0xf]
  %v254 = vld [vmem:[%s0 + $0x398] sm:$0xf]
  %v255 = vld [vmem:[%s0 + $0x39c] sm:$0xf]
  %v256 = vld [vmem:[%s0 + $0x3a0] sm:$0xf]
  %v257 = vld [vmem:[%s0 + $0x3a4] sm:$0xf]
  %v258 = vld [vmem:[%s0 + $0x3a8] sm:$0xf]
  %v259 = vld [vmem:[%s0 + $0x3ac] sm:$0xf]
  %v260 = vld [vmem:[%s0 + $0x3b0] sm:$0xf]
  %v261 = vld [vmem:[%s0 + $0x3b4] sm:$0xf]
  %v262 = vld [vmem:[%s0 + $0x3b8] sm:$0xf]
  %v263 = vld [vmem:[%s0 + $0x3bc] sm:$0xf]
  %v264 = vunpack.c.l.bf16 %v24
  %v265 = vunpack.c.l.bf16 %v25
  %v266 = vunpack.c.l.bf16 %v26
  %v267 = vunpack.c.l.bf16 %v27
  %v268 = vunpack.c.l.bf16 %v28
  %v269 = vunpack.c.l.bf16 %v29
  %v270 = vunpack.c.l.bf16 %v30
  %v271 = vunpack.c.l.bf16 %v31
  %v272 = vunpack.c.l.bf16 %v32
  %v273 = vunpack.c.l.bf16 %v33
  %v274 = vunpack.c.l.bf16 %v34
  %v275 = vunpack.c.l.bf16 %v35
  %v276 = vunpack.c.l.bf16 %v36
  %v277 = vunpack.c.l.bf16 %v37
  %v278 = vunpack.c.l.bf16 %v38
  %v279 = vunpack.c.l.bf16 %v39
  %v280 = vunpack.c.l.bf16 %v40
  %v281 = vunpack.c.l.bf16 %v41
  %v282 = vunpack.c.l.bf16 %v42
  %v283 = vunpack.c.l.bf16 %v43
  %v284 = vunpack.c.l.bf16 %v44
  %v285 = vunpack.c.l.bf16 %v45
  %v286 = vunpack.c.l.bf16 %v46
  %v287 = vunpack.c.l.bf16 %v47
  %v288 = vunpack.c.l.bf16 %v48
  %v289 = vunpack.c.l.bf16 %v49
  %v290 = vunpack.c.l.bf16 %v50
  %v291 = vunpack.c.l.bf16 %v51
  %v292 = vunpack.c.l.bf16 %v52
  %v293 = vunpack.c.l.bf16 %v53
  %v294 = vunpack.c.l.bf16 %v54
  %v295 = vunpack.c.l.bf16 %v55
  %v296 = vunpack.c.l.bf16 %v56
  %v297 = vunpack.c.l.bf16 %v57
  %v298 = vunpack.c.l.bf16 %v58
  %v299 = vunpack.c.l.bf16 %v59
  %v300 = vunpack.c.l.bf16 %v60
  %v301 = vunpack.c.l.bf16 %v61
  %v302 = vunpack.c.l.bf16 %v62
  %v303 = vunpack.c.l.bf16 %v63
  %v304 = vunpack.c.l.bf16 %v64
  %v305 = vunpack.c.l.bf16 %v65
  %v306 = vunpack.c.l.bf16 %v66
  %v307 = vunpack.c.l.bf16 %v67
  %v308 = vunpack.c.l.bf16 %v68
  %v309 = vunpack.c.l.bf16 %v69
  %v310 = vunpack.c.l.bf16 %v70
  %v311 = vunpack.c.l.bf16 %v71
  %v312 = vunpack.c.l.bf16 %v72
  %v313 = vunpack.c.l.bf16 %v73
  %v314 = vunpack.c.l.bf16 %v74
  %v315 = vunpack.c.l.bf16 %v75
  %v316 = vunpack.c.l.bf16 %v76
  %v317 = vunpack.c.l.bf16 %v77
  %v318 = vunpack.c.l.bf16 %v78
  %v319 = vunpack.c.l.bf16 %v79
  %v320 = vunpack.c.l.bf16 %v80
  %v321 = vunpack.c.l.bf16 %v81
  %v322 = vunpack.c.l.bf16 %v82
  %v323 = vunpack.c.l.bf16 %v83
  %v324 = vunpack.c.l.bf16 %v84
  %v325 = vunpack.c.l.bf16 %v85
  %v326 = vunpack.c.l.bf16 %v86
  %v327 = vunpack.c.l.bf16 %v87
  %v328 = vunpack.c.l.bf16 %v88
  %v329 = vunpack.c.l.bf16 %v89
  %v330 = vunpack.c.l.bf16 %v90
  %v331 = vunpack.c.l.bf16 %v91
  %v332 = vunpack.c.l.bf16 %v92
  %v333 = vunpack.c.l.bf16 %v93
  %v334 = vunpack.c.l.bf16 %v94
  %v335 = vunpack.c.l.bf16 %v95
  %v336 = vunpack.c.l.bf16 %v96
  %v337 = vunpack.c.l.bf16 %v97
  %v338 = vunpack.c.l.bf16 %v98
  %v339 = vunpack.c.l.bf16 %v99
  %v340 = vunpack.c.l.bf16 %v100
  %v341 = vunpack.c.l.bf16 %v101
  %v342 = vunpack.c.l.bf16 %v102
  %v343 = vunpack.c.l.bf16 %v103
  %v344 = vunpack.c.l.bf16 %v104
  %v345 = vunpack.c.l.bf16 %v105
  %v346 = vunpack.c.l.bf16 %v106
  %v347 = vunpack.c.l.bf16 %v107
  %v348 = vunpack.c.l.bf16 %v108
  %v349 = vunpack.c.l.bf16 %v109
  %v350 = vunpack.c.l.bf16 %v110
  %v351 = vunpack.c.l.bf16 %v111
  %v352 = vunpack.c.l.bf16 %v112
  %v353 = vunpack.c.l.bf16 %v113
  %v354 = vunpack.c.l.bf16 %v114
  %v355 = vunpack.c.l.bf16 %v115
  %v356 = vunpack.c.l.bf16 %v116
  %v357 = vunpack.c.l.bf16 %v117
  %v358 = vunpack.c.l.bf16 %v118
  %v359 = vunpack.c.l.bf16 %v119
  %v360 = vunpack.c.l.bf16 %v120
  %v361 = vunpack.c.l.bf16 %v121
  %v362 = vunpack.c.l.bf16 %v122
  %v363 = vunpack.c.l.bf16 %v123
  %v364 = vunpack.c.l.bf16 %v124
  %v365 = vunpack.c.l.bf16 %v125
  %v366 = vunpack.c.l.bf16 %v126
  %v367 = vunpack.c.l.bf16 %v127
  %v368 = vunpack.c.l.bf16 %v128
  %v369 = vunpack.c.l.bf16 %v129
  %v370 = vunpack.c.l.bf16 %v130
  %v371 = vunpack.c.l.bf16 %v131
  %v372 = vunpack.c.l.bf16 %v132
  %v373 = vunpack.c.l.bf16 %v133
  %v374 = vunpack.c.l.bf16 %v134
  %v375 = vunpack.c.l.bf16 %v135
  %v376 = vunpack.c.l.bf16 %v136
  %v377 = vunpack.c.l.bf16 %v137
  %v378 = vunpack.c.l.bf16 %v138
  %v379 = vunpack.c.l.bf16 %v139
  %v380 = vunpack.c.l.bf16 %v140
  %v381 = vunpack.c.l.bf16 %v141
  %v382 = vunpack.c.l.bf16 %v142
  %v383 = vunpack.c.l.bf16 %v143
  %v384 = vunpack.c.l.bf16 %v144
  %v385 = vunpack.c.l.bf16 %v145
  %v386 = vunpack.c.l.bf16 %v146
  %v387 = vunpack.c.l.bf16 %v147
  %v388 = vunpack.c.l.bf16 %v148
  %v389 = vunpack.c.l.bf16 %v149
  %v390 = vunpack.c.l.bf16 %v150
  %v391 = vunpack.c.l.bf16 %v151
  %v392 = vunpack.c.l.bf16 %v152
  %v393 = vunpack.c.l.bf16 %v153
  %v394 = vunpack.c.l.bf16 %v154
  %v395 = vunpack.c.l.bf16 %v155
  %v396 = vunpack.c.l.bf16 %v156
  %v397 = vunpack.c.l.bf16 %v157
  %v398 = vunpack.c.l.bf16 %v158
  %v399 = vunpack.c.l.bf16 %v159
  %v400 = vunpack.c.l.bf16 %v160
  %v401 = vunpack.c.l.bf16 %v161
  %v402 = vunpack.c.l.bf16 %v162
  %v403 = vunpack.c.l.bf16 %v163
  %v404 = vunpack.c.l.bf16 %v164
  %v405 = vunpack.c.l.bf16 %v165
  %v406 = vunpack.c.l.bf16 %v166
  %v407 = vunpack.c.l.bf16 %v167
  %v408 = vunpack.c.l.bf16 %v168
  %v409 = vunpack.c.l.bf16 %v169
  %v410 = vunpack.c.l.bf16 %v170
  %v411 = vunpack.c.l.bf16 %v171
  %v412 = vunpack.c.l.bf16 %v172
  %v413 = vunpack.c.l.bf16 %v173
  %v414 = vunpack.c.l.bf16 %v174
  %v415 = vunpack.c.l.bf16 %v175
  %v416 = vunpack.c.l.bf16 %v176
  %v417 = vunpack.c.l.bf16 %v177
  %v418 = vunpack.c.l.bf16 %v178
  %v419 = vunpack.c.l.bf16 %v179
  %v420 = vunpack.c.l.bf16 %v180
  %v421 = vunpack.c.l.bf16 %v181
  %v422 = vunpack.c.l.bf16 %v182
  %v423 = vunpack.c.l.bf16 %v183
  %v424 = vunpack.c.l.bf16 %v184
  %v425 = vunpack.c.l.bf16 %v185
  %v426 = vunpack.c.l.bf16 %v186
  %v427 = vunpack.c.l.bf16 %v187
  %v428 = vunpack.c.l.bf16 %v188
  %v429 = vunpack.c.l.bf16 %v189
  %v430 = vunpack.c.l.bf16 %v190
  %v431 = vunpack.c.l.bf16 %v191
  %v432 = vunpack.c.l.bf16 %v192
  %v433 = vunpack.c.l.bf16 %v193
  %v434 = vunpack.c.l.bf16 %v194
  %v435 = vunpack.c.l.bf16 %v195
  %v436 = vunpack.c.l.bf16 %v196
  %v437 = vunpack.c.l.bf16 %v197
  %v438 = vunpack.c.l.bf16 %v198
  %v439 = vunpack.c.l.bf16 %v199
  %v440 = vunpack.c.l.bf16 %v200
  %v441 = vunpack.c.l.bf16 %v201
  %v442 = vunpack.c.l.bf16 %v202
  %v443 = vunpack.c.l.bf16 %v203
  %v444 = vunpack.c.l.bf16 %v204
  %v445 = vunpack.c.l.bf16 %v205
  %v446 = vunpack.c.l.bf16 %v206
  %v447 = vunpack.c.l.bf16 %v207
  %v448 = vunpack.c.l.bf16 %v208
  %v449 = vunpack.c.l.bf16 %v209
  %v450 = vunpack.c.l.bf16 %v210
  %v451 = vunpack.c.l.bf16 %v211
  %v452 = vunpack.c.l.bf16 %v212
  %v453 = vunpack.c.l.bf16 %v213
  %v454 = vunpack.c.l.bf16 %v214
  %v455 = vunpack.c.l.bf16 %v215
  %v456 = vunpack.c.l.bf16 %v216
  %v457 = vunpack.c.l.bf16 %v217
  %v458 = vunpack.c.l.bf16 %v218
  %v459 = vunpack.c.l.bf16 %v219
  %v460 = vunpack.c.l.bf16 %v220
  %v461 = vunpack.c.l.bf16 %v221
  %v462 = vunpack.c.l.bf16 %v222
  %v463 = vunpack.c.l.bf16 %v223
  %v464 = vunpack.c.l.bf16 %v224
  %v465 = vunpack.c.l.bf16 %v225
  %v466 = vunpack.c.l.bf16 %v226
  %v467 = vunpack.c.l.bf16 %v227
  %v468 = vunpack.c.l.bf16 %v228
  %v469 = vunpack.c.l.bf16 %v229
  %v470 = vunpack.c.l.bf16 %v230
  %v471 = vunpack.c.l.bf16 %v231
  %v472 = vunpack.c.l.bf16 %v232
  %v473 = vunpack.c.l.bf16 %v233
  %v474 = vunpack.c.l.bf16 %v234
  %v475 = vunpack.c.l.bf16 %v235
  %v476 = vunpack.c.l.bf16 %v236
  %v477 = vunpack.c.l.bf16 %v237
  %v478 = vunpack.c.l.bf16 %v238
  %v479 = vunpack.c.l.bf16 %v239
  %v480 = vunpack.c.l.bf16 %v240
  %v481 = vunpack.c.l.bf16 %v241
  %v482 = vunpack.c.l.bf16 %v242
  %v483 = vunpack.c.l.bf16 %v243
  %v484 = vunpack.c.l.bf16 %v244
  %v485 = vunpack.c.l.bf16 %v245
  %v486 = vunpack.c.l.bf16 %v246
  %v487 = vunpack.c.l.bf16 %v247
  %v488 = vunpack.c.l.bf16 %v248
  %v489 = vunpack.c.l.bf16 %v249
  %v490 = vunpack.c.l.bf16 %v250
  %v491 = vunpack.c.l.bf16 %v251
  %v492 = vunpack.c.l.bf16 %v252
  %v493 = vunpack.c.l.bf16 %v253
  %v494 = vunpack.c.l.bf16 %v254
  %v495 = vunpack.c.l.bf16 %v255
  %v496 = vunpack.c.l.bf16 %v256
  %v497 = vunpack.c.l.bf16 %v257
  %v498 = vunpack.c.l.bf16 %v258
  %v499 = vunpack.c.l.bf16 %v259
  %v500 = vunpack.c.l.bf16 %v260
  %v501 = vunpack.c.l.bf16 %v261
  %v502 = vunpack.c.l.bf16 %v262
  %v503 = vunpack.c.l.bf16 %v263
  %v504 = vmax.f32 %v264, 0.0
  %v505 = vmax.f32 %v265, 0.0
  %v506 = vmax.f32 %v266, 0.0
  %v507 = vmax.f32 %v267, 0.0
  %v508 = vmax.f32 %v268, 0.0
  %v509 = vmax.f32 %v269, 0.0
  %v510 = vmax.f32 %v270, 0.0
  %v511 = vmax.f32 %v271, 0.0
  %v512 = vmax.f32 %v272, 0.0
  %v513 = vmax.f32 %v273, 0.0
  %v514 = vmax.f32 %v274, 0.0
  %v515 = vmax.f32 %v275, 0.0
  %v516 = vmax.f32 %v276, 0.0
  %v517 = vmax.f32 %v277, 0.0
  %v518 = vmax.f32 %v278, 0.0
  %v519 = vmax.f32 %v279, 0.0
  %v520 = vmax.f32 %v280, 0.0
  %v521 = vmax.f32 %v281, 0.0
  %v522 = vmax.f32 %v282, 0.0
  %v523 = vmax.f32 %v283, 0.0
  %v524 = vmax.f32 %v284, 0.0
  %v525 = vmax.f32 %v285, 0.0
  %v526 = vmax.f32 %v286, 0.0
  %v527 = vmax.f32 %v287, 0.0
  %v528 = vmax.f32 %v288, 0.0
  %v529 = vmax.f32 %v289, 0.0
  %v530 = vmax.f32 %v290, 0.0
  %v531 = vmax.f32 %v291, 0.0
  %v532 = vmax.f32 %v292, 0.0
  %v533 = vmax.f32 %v293, 0.0
  %v534 = vmax.f32 %v294, 0.0
  %v535 = vmax.f32 %v295, 0.0
  %v536 = vmax.f32 %v296, 0.0
  %v537 = vmax.f32 %v297, 0.0
  %v538 = vmax.f32 %v298, 0.0
  %v539 = vmax.f32 %v299, 0.0
  %v540 = vmax.f32 %v300, 0.0
  %v541 = vmax.f32 %v301, 0.0
  %v542 = vmax.f32 %v302, 0.0
  %v543 = vmax.f32 %v303, 0.0
  %v544 = vmax.f32 %v304, 0.0
  %v545 = vmax.f32 %v305, 0.0
  %v546 = vmax.f32 %v306, 0.0
  %v547 = vmax.f32 %v307, 0.0
  %v548 = vmax.f32 %v308, 0.0
  %v549 = vmax.f32 %v309, 0.0
  %v550 = vmax.f32 %v310, 0.0
  %v551 = vmax.f32 %v311, 0.0
  %v552 = vmax.f32 %v312, 0.0
  %v553 = vmax.f32 %v313, 0.0
  %v554 = vmax.f32 %v314, 0.0
  %v555 = vmax.f32 %v315, 0.0
  %v556 = vmax.f32 %v316, 0.0
  %v557 = vmax.f32 %v317, 0.0
  %v558 = vmax.f32 %v318, 0.0
  %v559 = vmax.f32 %v319, 0.0
  %v560 = vmax.f32 %v320, 0.0
  %v561 = vmax.f32 %v321, 0.0
  %v562 = vmax.f32 %v322, 0.0
  %v563 = vmax.f32 %v323, 0.0
  %v564 = vmax.f32 %v324, 0.0
  %v565 = vmax.f32 %v325, 0.0
  %v566 = vmax.f32 %v326, 0.0
  %v567 = vmax.f32 %v327, 0.0
  %v568 = vmax.f32 %v328, 0.0
  %v569 = vmax.f32 %v329, 0.0
  %v570 = vmax.f32 %v330, 0.0
  %v571 = vmax.f32 %v331, 0.0
  %v572 = vmax.f32 %v332, 0.0
  %v573 = vmax.f32 %v333, 0.0
  %v574 = vmax.f32 %v334, 0.0
  %v575 = vmax.f32 %v335, 0.0
  %v576 = vmax.f32 %v336, 0.0
  %v577 = vmax.f32 %v337, 0.0
  %v578 = vmax.f32 %v338, 0.0
  %v579 = vmax.f32 %v339, 0.0
  %v580 = vmax.f32 %v340, 0.0
  %v581 = vmax.f32 %v341, 0.0
  %v582 = vmax.f32 %v342, 0.0
  %v583 = vmax.f32 %v343, 0.0
  %v584 = vmax.f32 %v344, 0.0
  %v585 = vmax.f32 %v345, 0.0
  %v586 = vmax.f32 %v346, 0.0
  %v587 = vmax.f32 %v347, 0.0
  %v588 = vmax.f32 %v348, 0.0
  %v589 = vmax.f32 %v349, 0.0
  %v590 = vmax.f32 %v350, 0.0
  %v591 = vmax.f32 %v351, 0.0
  %v592 = vmax.f32 %v352, 0.0
  %v593 = vmax.f32 %v353, 0.0
  %v594 = vmax.f32 %v354, 0.0
  %v595 = vmax.f32 %v355, 0.0
  %v596 = vmax.f32 %v356, 0.0
  %v597 = vmax.f32 %v357, 0.0
  %v598 = vmax.f32 %v358, 0.0
  %v599 = vmax.f32 %v359, 0.0
  %v600 = vmax.f32 %v360, 0.0
  %v601 = vmax.f32 %v361, 0.0
  %v602 = vmax.f32 %v362, 0.0
  %v603 = vmax.f32 %v363, 0.0
  %v604 = vmax.f32 %v364, 0.0
  %v605 = vmax.f32 %v365, 0.0
  %v606 = vmax.f32 %v366, 0.0
  %v607 = vmax.f32 %v367, 0.0
  %v608 = vmax.f32 %v368, 0.0
  %v609 = vmax.f32 %v369, 0.0
  %v610 = vmax.f32 %v370, 0.0
  %v611 = vmax.f32 %v371, 0.0
  %v612 = vmax.f32 %v372, 0.0
  %v613 = vmax.f32 %v373, 0.0
  %v614 = vmax.f32 %v374, 0.0
  %v615 = vmax.f32 %v375, 0.0
  %v616 = vmax.f32 %v376, 0.0
  %v617 = vmax.f32 %v377, 0.0
  %v618 = vmax.f32 %v378, 0.0
  %v619 = vmax.f32 %v379, 0.0
  %v620 = vmax.f32 %v380, 0.0
  %v621 = vmax.f32 %v381, 0.0
  %v622 = vmax.f32 %v382, 0.0
  %v623 = vmax.f32 %v383, 0.0
  %v624 = vmax.f32 %v384, 0.0
  %v625 = vmax.f32 %v385, 0.0
  %v626 = vmax.f32 %v386, 0.0
  %v627 = vmax.f32 %v387, 0.0
  %v628 = vmax.f32 %v388, 0.0
  %v629 = vmax.f32 %v389, 0.0
  %v630 = vmax.f32 %v390, 0.0
  %v631 = vmax.f32 %v391, 0.0
  %v632 = vmax.f32 %v392, 0.0
  %v633 = vmax.f32 %v393, 0.0
  %v634 = vmax.f32 %v394, 0.0
  %v635 = vmax.f32 %v395, 0.0
  %v636 = vmax.f32 %v396, 0.0
  %v637 = vmax.f32 %v397, 0.0
  %v638 = vmax.f32 %v398, 0.0
  %v639 = vmax.f32 %v399, 0.0
  %v640 = vmax.f32 %v400, 0.0
  %v641 = vmax.f32 %v401, 0.0
  %v642 = vmax.f32 %v402, 0.0
  %v643 = vmax.f32 %v403, 0.0
  %v644 = vmax.f32 %v404, 0.0
  %v645 = vmax.f32 %v405, 0.0
  %v646 = vmax.f32 %v406, 0.0
  %v647 = vmax.f32 %v407, 0.0
  %v648 = vmax.f32 %v408, 0.0
  %v649 = vmax.f32 %v409, 0.0
  %v650 = vmax.f32 %v410, 0.0
  %v651 = vmax.f32 %v411, 0.0
  %v652 = vmax.f32 %v412, 0.0
  %v653 = vmax.f32 %v413, 0.0
  %v654 = vmax.f32 %v414, 0.0
  %v655 = vmax.f32 %v415, 0.0
  %v656 = vmax.f32 %v416, 0.0
  %v657 = vmax.f32 %v417, 0.0
  %v658 = vmax.f32 %v418, 0.0
  %v659 = vmax.f32 %v419, 0.0
  %v660 = vmax.f32 %v420, 0.0
  %v661 = vmax.f32 %v421, 0.0
  %v662 = vmax.f32 %v422, 0.0
  %v663 = vmax.f32 %v423, 0.0
  %v664 = vmax.f32 %v424, 0.0
  %v665 = vmax.f32 %v425, 0.0
  %v666 = vmax.f32 %v426, 0.0
  %v667 = vmax.f32 %v427, 0.0
  %v668 = vmax.f32 %v428, 0.0
  %v669 = vmax.f32 %v429, 0.0
  %v670 = vmax.f32 %v430, 0.0
  %v671 = vmax.f32 %v431, 0.0
  %v672 = vmax.f32 %v432, 0.0
  %v673 = vmax.f32 %v433, 0.0
  %v674 = vmax.f32 %v434, 0.0
  %v675 = vmax.f32 %v435, 0.0
  %v676 = vmax.f32 %v436, 0.0
  %v677 = vmax.f32 %v437, 0.0
  %v678 = vmax.f32 %v438, 0.0
  %v679 = vmax.f32 %v439, 0.0
  %v680 = vmax.f32 %v440, 0.0
  %v681 = vmax.f32 %v441, 0.0
  %v682 = vmax.f32 %v442, 0.0
  %v683 = vmax.f32 %v443, 0.0
  %v684 = vmax.f32 %v444, 0.0
  %v685 = vmax.f32 %v445, 0.0
  %v686 = vmax.f32 %v446, 0.0
  %v687 = vmax.f32 %v447, 0.0
  %v688 = vmax.f32 %v448, 0.0
  %v689 = vmax.f32 %v449, 0.0
  %v690 = vmax.f32 %v450, 0.0
  %v691 = vmax.f32 %v451, 0.0
  %v692 = vmax.f32 %v452, 0.0
  %v693 = vmax.f32 %v453, 0.0
  %v694 = vmax.f32 %v454, 0.0
  %v695 = vmax.f32 %v455, 0.0
  %v696 = vmax.f32 %v456, 0.0
  %v697 = vmax.f32 %v457, 0.0
  %v698 = vmax.f32 %v458, 0.0
  %v699 = vmax.f32 %v459, 0.0
  %v700 = vmax.f32 %v460, 0.0
  %v701 = vmax.f32 %v461, 0.0
  %v702 = vmax.f32 %v462, 0.0
  %v703 = vmax.f32 %v463, 0.0
  %v704 = vmax.f32 %v464, 0.0
  %v705 = vmax.f32 %v465, 0.0
  %v706 = vmax.f32 %v466, 0.0
  %v707 = vmax.f32 %v467, 0.0
  %v708 = vmax.f32 %v468, 0.0
  %v709 = vmax.f32 %v469, 0.0
  %v710 = vmax.f32 %v470, 0.0
  %v711 = vmax.f32 %v471, 0.0
  %v712 = vmax.f32 %v472, 0.0
  %v713 = vmax.f32 %v473, 0.0
  %v714 = vmax.f32 %v474, 0.0
  %v715 = vmax.f32 %v475, 0.0
  %v716 = vmax.f32 %v476, 0.0
  %v717 = vmax.f32 %v477, 0.0
  %v718 = vmax.f32 %v478, 0.0
  %v719 = vmax.f32 %v479, 0.0
  %v720 = vmax.f32 %v480, 0.0
  %v721 = vmax.f32 %v481, 0.0
  %v722 = vmax.f32 %v482, 0.0
  %v723 = vmax.f32 %v483, 0.0
  %v724 = vmax.f32 %v484, 0.0
  %v725 = vmax.f32 %v485, 0.0
  %v726 = vmax.f32 %v486, 0.0
  %v727 = vmax.f32 %v487, 0.0
  %v728 = vmax.f32 %v488, 0.0
  %v729 = vmax.f32 %v489, 0.0
  %v730 = vmax.f32 %v490, 0.0
  %v731 = vmax.f32 %v491, 0.0
  %v732 = vmax.f32 %v492, 0.0
  %v733 = vmax.f32 %v493, 0.0
  %v734 = vmax.f32 %v494, 0.0
  %v735 = vmax.f32 %v495, 0.0
  %v736 = vmax.f32 %v496, 0.0
  %v737 = vmax.f32 %v497, 0.0
  %v738 = vmax.f32 %v498, 0.0
  %v739 = vmax.f32 %v499, 0.0
  %v740 = vmax.f32 %v500, 0.0
  %v741 = vmax.f32 %v501, 0.0
  %v742 = vmax.f32 %v502, 0.0
  %v743 = vmax.f32 %v503, 0.0
  %v744 = vpack.c.bf16 %v505, %v504
  %v745 = vpack.c.bf16 %v507, %v506
  %v746 = vpack.c.bf16 %v509, %v508
  %v747 = vpack.c.bf16 %v511, %v510
  %v748 = vpack.c.bf16 %v513, %v512
  %v749 = vpack.c.bf16 %v515, %v514
  %v750 = vpack.c.bf16 %v517, %v516
  %v751 = vpack.c.bf16 %v519, %v518
  %v752 = vpack.c.bf16 %v521, %v520
  %v753 = vpack.c.bf16 %v523, %v522
  %v754 = vpack.c.bf16 %v525, %v524
  %v755 = vpack.c.bf16 %v527, %v526
  %v756 = vpack.c.bf16 %v529, %v528
  %v757 = vpack.c.bf16 %v531, %v530
  %v758 = vpack.c.bf16 %v533, %v532
  %v759 = vpack.c.bf16 %v535, %v534
  %v760 = vpack.c.bf16 %v537, %v536
  %v761 = vpack.c.bf16 %v539, %v538
  %v762 = vpack.c.bf16 %v541, %v540
  %v763 = vpack.c.bf16 %v543, %v542
  %v764 = vpack.c.bf16 %v545, %v544
  %v765 = vpack.c.bf16 %v547, %v546
  %v766 = vpack.c.bf16 %v549, %v548
  %v767 = vpack.c.bf16 %v551, %v550
  %v768 = vpack.c.bf16 %v553, %v552
  %v769 = vpack.c.bf16 %v555, %v554
  %v770 = vpack.c.bf16 %v557, %v556
  %v771 = vpack.c.bf16 %v559, %v558
  %v772 = vpack.c.bf16 %v561, %v560
  %v773 = vpack.c.bf16 %v563, %v562
  %v774 = vpack.c.bf16 %v565, %v564
  %v775 = vpack.c.bf16 %v567, %v566
  %v776 = vpack.c.bf16 %v569, %v568
  %v777 = vpack.c.bf16 %v571, %v570
  %v778 = vpack.c.bf16 %v573, %v572
  %v779 = vpack.c.bf16 %v575, %v574
  %v780 = vpack.c.bf16 %v577, %v576
  %v781 = vpack.c.bf16 %v579, %v578
  %v782 = vpack.c.bf16 %v581, %v580
  %v783 = vpack.c.bf16 %v583, %v582
  %v784 = vpack.c.bf16 %v585, %v584
  %v785 = vpack.c.bf16 %v587, %v586
  %v786 = vpack.c.bf16 %v589, %v588
  %v787 = vpack.c.bf16 %v591, %v590
  %v788 = vpack.c.bf16 %v593, %v592
  %v789 = vpack.c.bf16 %v595, %v594
  %v790 = vpack.c.bf16 %v597, %v596
  %v791 = vpack.c.bf16 %v599, %v598
  %v792 = vpack.c.bf16 %v601, %v600
  %v793 = vpack.c.bf16 %v603, %v602
  %v794 = vpack.c.bf16 %v605, %v604
  %v795 = vpack.c.bf16 %v607, %v606
  %v796 = vpack.c.bf16 %v609, %v608
  %v797 = vpack.c.bf16 %v611, %v610
  %v798 = vpack.c.bf16 %v613, %v612
  %v799 = vpack.c.bf16 %v615, %v614
  %v800 = vpack.c.bf16 %v617, %v616
  %v801 = vpack.c.bf16 %v619, %v618
  %v802 = vpack.c.bf16 %v621, %v620
  %v803 = vpack.c.bf16 %v623, %v622
  %v804 = vpack.c.bf16 %v625, %v624
  %v805 = vpack.c.bf16 %v627, %v626
  %v806 = vpack.c.bf16 %v629, %v628
  %v807 = vpack.c.bf16 %v631, %v630
  %v808 = vpack.c.bf16 %v633, %v632
  %v809 = vpack.c.bf16 %v635, %v634
  %v810 = vpack.c.bf16 %v637, %v636
  %v811 = vpack.c.bf16 %v639, %v638
  %v812 = vpack.c.bf16 %v641, %v640
  %v813 = vpack.c.bf16 %v643, %v642
  %v814 = vpack.c.bf16 %v645, %v644
  %v815 = vpack.c.bf16 %v647, %v646
  %v816 = vpack.c.bf16 %v649, %v648
  %v817 = vpack.c.bf16 %v651, %v650
  %v818 = vpack.c.bf16 %v653, %v652
  %v819 = vpack.c.bf16 %v655, %v654
  %v820 = vpack.c.bf16 %v657, %v656
  %v821 = vpack.c.bf16 %v659, %v658
  %v822 = vpack.c.bf16 %v661, %v660
  %v823 = vpack.c.bf16 %v663, %v662
  %v824 = vpack.c.bf16 %v665, %v664
  %v825 = vpack.c.bf16 %v667, %v666
  %v826 = vpack.c.bf16 %v669, %v668
  %v827 = vpack.c.bf16 %v671, %v670
  %v828 = vpack.c.bf16 %v673, %v672
  %v829 = vpack.c.bf16 %v675, %v674
  %v830 = vpack.c.bf16 %v677, %v676
  %v831 = vpack.c.bf16 %v679, %v678
  %v832 = vpack.c.bf16 %v681, %v680
  %v833 = vpack.c.bf16 %v683, %v682
  %v834 = vpack.c.bf16 %v685, %v684
  %v835 = vpack.c.bf16 %v687, %v686
  %v836 = vpack.c.bf16 %v689, %v688
  %v837 = vpack.c.bf16 %v691, %v690
  %v838 = vpack.c.bf16 %v693, %v692
  %v839 = vpack.c.bf16 %v695, %v694
  %v840 = vpack.c.bf16 %v697, %v696
  %v841 = vpack.c.bf16 %v699, %v698
  %v842 = vpack.c.bf16 %v701, %v700
  %v843 = vpack.c.bf16 %v703, %v702
  %v844 = vpack.c.bf16 %v705, %v704
  %v845 = vpack.c.bf16 %v707, %v706
  %v846 = vpack.c.bf16 %v709, %v708
  %v847 = vpack.c.bf16 %v711, %v710
  %v848 = vpack.c.bf16 %v713, %v712
  %v849 = vpack.c.bf16 %v715, %v714
  %v850 = vpack.c.bf16 %v717, %v716
  %v851 = vpack.c.bf16 %v719, %v718
  %v852 = vpack.c.bf16 %v721, %v720
  %v853 = vpack.c.bf16 %v723, %v722
  %v854 = vpack.c.bf16 %v725, %v724
  %v855 = vpack.c.bf16 %v727, %v726
  %v856 = vpack.c.bf16 %v729, %v728
  %v857 = vpack.c.bf16 %v731, %v730
  %v858 = vpack.c.bf16 %v733, %v732
  %v859 = vpack.c.bf16 %v735, %v734
  %v860 = vpack.c.bf16 %v737, %v736
  %v861 = vpack.c.bf16 %v739, %v738
  %v862 = vpack.c.bf16 %v741, %v740
  %v863 = vpack.c.bf16 %v743, %v742
  %v864 = vld [vmem:[%s1] sm:$0xff]
  %v865 = vld [vmem:[%s1 + $0x8] sm:$0xff]
  %v866 = vld [vmem:[%s1 + $0x10] sm:$0xff]
  %v867 = vld [vmem:[%s1 + $0x18] sm:$0xff]
  %v868 = vld [vmem:[%s1 + $0x20] sm:$0xff]
  %v869 = vld [vmem:[%s1 + $0x28] sm:$0xff]
  %v870 = vld [vmem:[%s1 + $0x30] sm:$0xff]
  %v871 = vld [vmem:[%s1 + $0x38] sm:$0xf]
  %v872 = vld [vmem:[%s1 + $0x3c] sm:$0xff]
  %v873 = vld [vmem:[%s1 + $0x44] sm:$0xff]
  %v874 = vld [vmem:[%s1 + $0x4c] sm:$0xff]
  %v875 = vld [vmem:[%s1 + $0x54] sm:$0xff]
  %v876 = vld [vmem:[%s1 + $0x5c] sm:$0xff]
  %v877 = vld [vmem:[%s1 + $0x64] sm:$0xff]
  %v878 = vld [vmem:[%s1 + $0x6c] sm:$0xff]
  %v879 = vld [vmem:[%s1 + $0x74] sm:$0xf]
  %v880 = vld [vmem:[%s1 + $0x78] sm:$0xff]
  %v881 = vld [vmem:[%s1 + $0x80] sm:$0xff]
  %v882 = vld [vmem:[%s1 + $0x88] sm:$0xff]
  %v883 = vld [vmem:[%s1 + $0x90] sm:$0xff]
  %v884 = vld [vmem:[%s1 + $0x98] sm:$0xff]
  %v885 = vld [vmem:[%s1 + $0xa0] sm:$0xff]
  %v886 = vld [vmem:[%s1 + $0xa8] sm:$0xff]
  %v887 = vld [vmem:[%s1 + $0xb0] sm:$0xf]
  %v888 = vld [vmem:[%s1 + $0xb4] sm:$0xff]
  %v889 = vld [vmem:[%s1 + $0xbc] sm:$0xff]
  %v890 = vld [vmem:[%s1 + $0xc4] sm:$0xff]
  %v891 = vld [vmem:[%s1 + $0xcc] sm:$0xff]
  %v892 = vld [vmem:[%s1 + $0xd4] sm:$0xff]
  %v893 = vld [vmem:[%s1 + $0xdc] sm:$0xff]
  %v894 = vld [vmem:[%s1 + $0xe4] sm:$0xff]
  %v895 = vld [vmem:[%s1 + $0xec] sm:$0xf]
  %v896 = vld [vmem:[%s1 + $0xf0] sm:$0xff]
  %v897 = vld [vmem:[%s1 + $0xf8] sm:$0xff]
  %v898 = vld [vmem:[%s1 + $0x100] sm:$0xff]
  %v899 = vld [vmem:[%s1 + $0x108] sm:$0xff]
  %v900 = vld [vmem:[%s1 + $0x110] sm:$0xff]
  %v901 = vld [vmem:[%s1 + $0x118] sm:$0xff]
  %v902 = vld [vmem:[%s1 + $0x120] sm:$0xff]
  %v903 = vld [vmem:[%s1 + $0x128] sm:$0xf]
  %v904 = vld [vmem:[%s1 + $0x12c] sm:$0xff]
  %v905 = vld [vmem:[%s1 + $0x134] sm:$0xff]
  %v906 = vld [vmem:[%s1 + $0x13c] sm:$0xff]
  %v907 = vld [vmem:[%s1 + $0x144] sm:$0xff]
  %v908 = vld [vmem:[%s1 + $0x14c] sm:$0xff]
  %v909 = vld [vmem:[%s1 + $0x154] sm:$0xff]
  %v910 = vld [vmem:[%s1 + $0x15c] sm:$0xff]
  %v911 = vld [vmem:[%s1 + $0x164] sm:$0xf]
  %v912 = vld [vmem:[%s1 + $0x168] sm:$0xff]
  %v913 = vld [vmem:[%s1 + $0x170] sm:$0xff]
  %v914 = vld [vmem:[%s1 + $0x178] sm:$0xff]
  %v915 = vld [vmem:[%s1 + $0x180] sm:$0xff]
  %v916 = vld [vmem:[%s1 + $0x188] sm:$0xff]
  %v917 = vld [vmem:[%s1 + $0x190] sm:$0xff]
  %v918 = vld [vmem:[%s1 + $0x198] sm:$0xff]
  %v919 = vld [vmem:[%s1 + $0x1a0] sm:$0xf]
  %v920 = vld [vmem:[%s1 + $0x1a4] sm:$0xff]
  %v921 = vld [vmem:[%s1 + $0x1ac] sm:$0xff]
  %v922 = vld [vmem:[%s1 + $0x1b4] sm:$0xff]
  %v923 = vld [vmem:[%s1 + $0x1bc] sm:$0xff]
  %v924 = vld [vmem:[%s1 + $0x1c4] sm:$0xff]
  %v925 = vld [vmem:[%s1 + $0x1cc] sm:$0xff]
  %v926 = vld [vmem:[%s1 + $0x1d4] sm:$0xff]
  %v927 = vld [vmem:[%s1 + $0x1dc] sm:$0xf]
  %v928 = vld [vmem:[%s1 + $0x1e0] sm:$0xff]
  %v929 = vld [vmem:[%s1 + $0x1e8] sm:$0xff]
  %v930 = vld [vmem:[%s1 + $0x1f0] sm:$0xff]
  %v931 = vld [vmem:[%s1 + $0x1f8] sm:$0xff]
  %v932 = vld [vmem:[%s1 + $0x200] sm:$0xff]
  %v933 = vld [vmem:[%s1 + $0x208] sm:$0xff]
  %v934 = vld [vmem:[%s1 + $0x210] sm:$0xff]
  %v935 = vld [vmem:[%s1 + $0x218] sm:$0xf]
  %v936 = vld [vmem:[%s1 + $0x21c] sm:$0xff]
  %v937 = vld [vmem:[%s1 + $0x224] sm:$0xff]
  %v938 = vld [vmem:[%s1 + $0x22c] sm:$0xff]
  %v939 = vld [vmem:[%s1 + $0x234] sm:$0xff]
  %v940 = vld [vmem:[%s1 + $0x23c] sm:$0xff]
  %v941 = vld [vmem:[%s1 + $0x244] sm:$0xff]
  %v942 = vld [vmem:[%s1 + $0x24c] sm:$0xff]
  %v943 = vld [vmem:[%s1 + $0x254] sm:$0xf]
  %v944 = vld [vmem:[%s1 + $0x258] sm:$0xff]
  %v945 = vld [vmem:[%s1 + $0x260] sm:$0xff]
  %v946 = vld [vmem:[%s1 + $0x268] sm:$0xff]
  %v947 = vld [vmem:[%s1 + $0x270] sm:$0xff]
  %v948 = vld [vmem:[%s1 + $0x278] sm:$0xff]
  %v949 = vld [vmem:[%s1 + $0x280] sm:$0xff]
  %v950 = vld [vmem:[%s1 + $0x288] sm:$0xff]
  %v951 = vld [vmem:[%s1 + $0x290] sm:$0xf]
  %v952 = vld [vmem:[%s1 + $0x294] sm:$0xff]
  %v953 = vld [vmem:[%s1 + $0x29c] sm:$0xff]
  %v954 = vld [vmem:[%s1 + $0x2a4] sm:$0xff]
  %v955 = vld [vmem:[%s1 + $0x2ac] sm:$0xff]
  %v956 = vld [vmem:[%s1 + $0x2b4] sm:$0xff]
  %v957 = vld [vmem:[%s1 + $0x2bc] sm:$0xff]
  %v958 = vld [vmem:[%s1 + $0x2c4] sm:$0xff]
  %v959 = vld [vmem:[%s1 + $0x2cc] sm:$0xf]
  %v960 = vld [vmem:[%s1 + $0x2d0] sm:$0xff]
  %v961 = vld [vmem:[%s1 + $0x2d8] sm:$0xff]
  %v962 = vld [vmem:[%s1 + $0x2e0] sm:$0xff]
  %v963 = vld [vmem:[%s1 + $0x2e8] sm:$0xff]
  %v964 = vld [vmem:[%s1 + $0x2f0] sm:$0xff]
  %v965 = vld [vmem:[%s1 + $0x2f8] sm:$0xff]
  %v966 = vld [vmem:[%s1 + $0x300] sm:$0xff]
  %v967 = vld [vmem:[%s1 + $0x308] sm:$0xf]
  %v968 = vld [vmem:[%s1 + $0x30c] sm:$0xff]
  %v969 = vld [vmem:[%s1 + $0x314] sm:$0xff]
  %v970 = vld [vmem:[%s1 + $0x31c] sm:$0xff]
  %v971 = vld [vmem:[%s1 + $0x324] sm:$0xff]
  %v972 = vld [vmem:[%s1 + $0x32c] sm:$0xff]
  %v973 = vld [vmem:[%s1 + $0x334] sm:$0xff]
  %v974 = vld [vmem:[%s1 + $0x33c] sm:$0xff]
  %v975 = vld [vmem:[%s1 + $0x344] sm:$0xf]
  %v976 = vld [vmem:[%s1 + $0x348] sm:$0xff]
  %v977 = vld [vmem:[%s1 + $0x350] sm:$0xff]
  %v978 = vld [vmem:[%s1 + $0x358] sm:$0xff]
  %v979 = vld [vmem:[%s1 + $0x360] sm:$0xff]
  %v980 = vld [vmem:[%s1 + $0x368] sm:$0xff]
  %v981 = vld [vmem:[%s1 + $0x370] sm:$0xff]
  %v982 = vld [vmem:[%s1 + $0x378] sm:$0xff]
  %v983 = vld [vmem:[%s1 + $0x380] sm:$0xf]
  %v984 = vld [vmem:[%s1 + $0x384] sm:$0xff]
  %v985 = vld [vmem:[%s1 + $0x38c] sm:$0xff]
  %v986 = vld [vmem:[%s1 + $0x394] sm:$0xff]
  %v987 = vld [vmem:[%s1 + $0x39c] sm:$0xff]
  %v988 = vld [vmem:[%s1 + $0x3a4] sm:$0xff]
  %v989 = vld [vmem:[%s1 + $0x3ac] sm:$0xff]
  %v990 = vld [vmem:[%s1 + $0x3b4] sm:$0xff]
  %v991 = vld [vmem:[%s1 + $0x3bc] sm:$0xf]
  %v992 = vld [vmem:[%s1 + $0x3c0] sm:$0xff]
  %v993 = vld [vmem:[%s1 + $0x3c8] sm:$0xff]
  %v994 = vld [vmem:[%s1 + $0x3d0] sm:$0xff]
  %v995 = vld [vmem:[%s1 + $0x3d8] sm:$0xff]
  %v996 = vld [vmem:[%s1 + $0x3e0] sm:$0xff]
  %v997 = vld [vmem:[%s1 + $0x3e8] sm:$0xff]
  %v998 = vld [vmem:[%s1 + $0x3f0] sm:$0xff]
  %v999 = vld [vmem:[%s1 + $0x3f8] sm:$0xf]
  %v1000 = vld [vmem:[%s1 + $0x3fc] sm:$0xff]
  %v1001 = vld [vmem:[%s1 + $0x404] sm:$0xff]
  %v1002 = vld [vmem:[%s1 + $0x40c] sm:$0xff]
  %v1003 = vld [vmem:[%s1 + $0x414] sm:$0xff]
  %v1004 = vld [vmem:[%s1 + $0x41c] sm:$0xff]
  %v1005 = vld [vmem:[%s1 + $0x424] sm:$0xff]
  %v1006 = vld [vmem:[%s1 + $0x42c] sm:$0xff]
  %v1007 = vld [vmem:[%s1 + $0x434] sm:$0xf]
  %v1008 = vld [vmem:[%s1 + $0x438] sm:$0xff]
  %v1009 = vld [vmem:[%s1 + $0x440] sm:$0xff]
  %v1010 = vld [vmem:[%s1 + $0x448] sm:$0xff]
  %v1011 = vld [vmem:[%s1 + $0x450] sm:$0xff]
  %v1012 = vld [vmem:[%s1 + $0x458] sm:$0xff]
  %v1013 = vld [vmem:[%s1 + $0x460] sm:$0xff]
  %v1014 = vld [vmem:[%s1 + $0x468] sm:$0xff]
  %v1015 = vld [vmem:[%s1 + $0x470] sm:$0xf]
  %v1016 = vld [vmem:[%s1 + $0x474] sm:$0xff]
  %v1017 = vld [vmem:[%s1 + $0x47c] sm:$0xff]
  %v1018 = vld [vmem:[%s1 + $0x484] sm:$0xff]
  %v1019 = vld [vmem:[%s1 + $0x48c] sm:$0xff]
  %v1020 = vld [vmem:[%s1 + $0x494] sm:$0xff]
  %v1021 = vld [vmem:[%s1 + $0x49c] sm:$0xff]
  %v1022 = vld [vmem:[%s1 + $0x4a4] sm:$0xff]
  %v1023 = vld [vmem:[%s1 + $0x4ac] sm:$0xf]
  %v1024 = vld [vmem:[%s1 + $0x4b0] sm:$0xff]
  %v1025 = vld [vmem:[%s1 + $0x4b8] sm:$0xff]
  %v1026 = vld [vmem:[%s1 + $0x4c0] sm:$0xff]
  %v1027 = vld [vmem:[%s1 + $0x4c8] sm:$0xff]
  %v1028 = vld [vmem:[%s1 + $0x4d0] sm:$0xff]
  %v1029 = vld [vmem:[%s1 + $0x4d8] sm:$0xff]
  %v1030 = vld [vmem:[%s1 + $0x4e0] sm:$0xff]
  %v1031 = vld [vmem:[%s1 + $0x4e8] sm:$0xf]
  %v1032 = vld [vmem:[%s1 + $0x4ec] sm:$0xff]
  %v1033 = vld [vmem:[%s1 + $0x4f4] sm:$0xff]
  %v1034 = vld [vmem:[%s1 + $0x4fc] sm:$0xff]
  %v1035 = vld [vmem:[%s1 + $0x504] sm:$0xff]
  %v1036 = vld [vmem:[%s1 + $0x50c] sm:$0xff]
  %v1037 = vld [vmem:[%s1 + $0x514] sm:$0xff]
  %v1038 = vld [vmem:[%s1 + $0x51c] sm:$0xff]
  %v1039 = vld [vmem:[%s1 + $0x524] sm:$0xf]
  %v1040 = vld [vmem:[%s1 + $0x528] sm:$0xff]
  %v1041 = vld [vmem:[%s1 + $0x530] sm:$0xff]
  %v1042 = vld [vmem:[%s1 + $0x538] sm:$0xff]
  %v1043 = vld [vmem:[%s1 + $0x540] sm:$0xff]
  %v1044 = vld [vmem:[%s1 + $0x548] sm:$0xff]
  %v1045 = vld [vmem:[%s1 + $0x550] sm:$0xff]
  %v1046 = vld [vmem:[%s1 + $0x558] sm:$0xff]
  %v1047 = vld [vmem:[%s1 + $0x560] sm:$0xf]
  %v1048 = vld [vmem:[%s1 + $0x564] sm:$0xff]
  %v1049 = vld [vmem:[%s1 + $0x56c] sm:$0xff]
  %v1050 = vld [vmem:[%s1 + $0x574] sm:$0xff]
  %v1051 = vld [vmem:[%s1 + $0x57c] sm:$0xff]
  %v1052 = vld [vmem:[%s1 + $0x584] sm:$0xff]
  %v1053 = vld [vmem:[%s1 + $0x58c] sm:$0xff]
  %v1054 = vld [vmem:[%s1 + $0x594] sm:$0xff]
  %v1055 = vld [vmem:[%s1 + $0x59c] sm:$0xf]
  %v1248 = vunpack.c.l.b16 %v864
  %v1249 = vunpack.c.h.b16 %v864
  %v1250 = vunpack.c.l.b16 %v865
  %v1251 = vunpack.c.h.b16 %v865
  %v1252 = vunpack.c.l.b16 %v866
  %v1253 = vunpack.c.h.b16 %v866
  %v1254 = vunpack.c.l.b16 %v867
  %v1255 = vunpack.c.h.b16 %v867
  %v1256 = vunpack.c.l.b16 %v868
  %v1257 = vunpack.c.h.b16 %v868
  %v1258 = vunpack.c.l.b16 %v869
  %v1259 = vunpack.c.h.b16 %v869
  %v1260 = vunpack.c.l.b16 %v870
  %v1261 = vunpack.c.h.b16 %v870
  %v1262 = vunpack.c.l.b16 %v871
  %v1263 = vunpack.c.l.b16 %v872
  %v1264 = vunpack.c.h.b16 %v872
  %v1265 = vunpack.c.l.b16 %v873
  %v1266 = vunpack.c.h.b16 %v873
  %v1267 = vunpack.c.l.b16 %v874
  %v1268 = vunpack.c.h.b16 %v874
  %v1269 = vunpack.c.l.b16 %v875
  %v1270 = vunpack.c.h.b16 %v875
  %v1271 = vunpack.c.l.b16 %v876
  %v1272 = vunpack.c.h.b16 %v876
  %v1273 = vunpack.c.l.b16 %v877
  %v1274 = vunpack.c.h.b16 %v877
  %v1275 = vunpack.c.l.b16 %v878
  %v1276 = vunpack.c.h.b16 %v878
  %v1277 = vunpack.c.l.b16 %v879
  %v1278 = vunpack.c.l.b16 %v880
  %v1279 = vunpack.c.h.b16 %v880
  %v1280 = vunpack.c.l.b16 %v881
  %v1281 = vunpack.c.h.b16 %v881
  %v1282 = vunpack.c.l.b16 %v882
  %v1283 = vunpack.c.h.b16 %v882
  %v1284 = vunpack.c.l.b16 %v883
  %v1285 = vunpack.c.h.b16 %v883
  %v1286 = vunpack.c.l.b16 %v884
  %v1287 = vunpack.c.h.b16 %v884
  %v1288 = vunpack.c.l.b16 %v885
  %v1289 = vunpack.c.h.b16 %v885
  %v1290 = vunpack.c.l.b16 %v886
  %v1291 = vunpack.c.h.b16 %v886
  %v1292 = vunpack.c.l.b16 %v887
  %v1293 = vunpack.c.l.b16 %v888
  %v1294 = vunpack.c.h.b16 %v888
  %v1295 = vunpack.c.l.b16 %v889
  %v1296 = vunpack.c.h.b16 %v889
  %v1297 = vunpack.c.l.b16 %v890
  %v1298 = vunpack.c.h.b16 %v890
  %v1299 = vunpack.c.l.b16 %v891
  %v1300 = vunpack.c.h.b16 %v891
  %v1301 = vunpack.c.l.b16 %v892
  %v1302 = vunpack.c.h.b16 %v892
  %v1303 = vunpack.c.l.b16 %v893
  %v1304 = vunpack.c.h.b16 %v893
  %v1305 = vunpack.c.l.b16 %v894
  %v1306 = vunpack.c.h.b16 %v894
  %v1307 = vunpack.c.l.b16 %v895
  %v1308 = vunpack.c.l.b16 %v896
  %v1309 = vunpack.c.h.b16 %v896
  %v1310 = vunpack.c.l.b16 %v897
  %v1311 = vunpack.c.h.b16 %v897
  %v1312 = vunpack.c.l.b16 %v898
  %v1313 = vunpack.c.h.b16 %v898
  %v1314 = vunpack.c.l.b16 %v899
  %v1315 = vunpack.c.h.b16 %v899
  %v1316 = vunpack.c.l.b16 %v900
  %v1317 = vunpack.c.h.b16 %v900
  %v1318 = vunpack.c.l.b16 %v901
  %v1319 = vunpack.c.h.b16 %v901
  %v1320 = vunpack.c.l.b16 %v902
  %v1321 = vunpack.c.h.b16 %v902
  %v1322 = vunpack.c.l.b16 %v903
  %v1323 = vunpack.c.l.b16 %v904
  %v1324 = vunpack.c.h.b16 %v904
  %v1325 = vunpack.c.l.b16 %v905
  %v1326 = vunpack.c.h.b16 %v905
  %v1327 = vunpack.c.l.b16 %v906
  %v1328 = vunpack.c.h.b16 %v906
  %v1329 = vunpack.c.l.b16 %v907
  %v1330 = vunpack.c.h.b16 %v907
  %v1331 = vunpack.c.l.b16 %v908
  %v1332 = vunpack.c.h.b16 %v908
  %v1333 = vunpack.c.l.b16 %v909
  %v1334 = vunpack.c.h.b16 %v909
  %v1335 = vunpack.c.l.b16 %v910
  %v1336 = vunpack.c.h.b16 %v910
  %v1337 = vunpack.c.l.b16 %v911
  %v1338 = vunpack.c.l.b16 %v912
  %v1339 = vunpack.c.h.b16 %v912
  %v1340 = vunpack.c.l.b16 %v913
  %v1341 = vunpack.c.h.b16 %v913
  %v1342 = vunpack.c.l.b16 %v914
  %v1343 = vunpack.c.h.b16 %v914
  %v1344 = vunpack.c.l.b16 %v915
  %v1345 = vunpack.c.h.b16 %v915
  %v1346 = vunpack.c.l.b16 %v916
  %v1347 = vunpack.c.h.b16 %v916
  %v1348 = vunpack.c.l.b16 %v917
  %v1349 = vunpack.c.h.b16 %v917
  %v1350 = vunpack.c.l.b16 %v918
  %v1351 = vunpack.c.h.b16 %v918
  %v1352 = vunpack.c.l.b16 %v919
  %v1353 = vunpack.c.l.b16 %v920
  %v1354 = vunpack.c.h.b16 %v920
  %v1355 = vunpack.c.l.b16 %v921
  %v1356 = vunpack.c.h.b16 %v921
  %v1357 = vunpack.c.l.b16 %v922
  %v1358 = vunpack.c.h.b16 %v922
  %v1359 = vunpack.c.l.b16 %v923
  %v1360 = vunpack.c.h.b16 %v923
  %v1361 = vunpack.c.l.b16 %v924
  %v1362 = vunpack.c.h.b16 %v924
  %v1363 = vunpack.c.l.b16 %v925
  %v1364 = vunpack.c.h.b16 %v925
  %v1365 = vunpack.c.l.b16 %v926
  %v1366 = vunpack.c.h.b16 %v926
  %v1367 = vunpack.c.l.b16 %v927
  %v1368 = vunpack.c.l.b16 %v928
  %v1369 = vunpack.c.h.b16 %v928
  %v1370 = vunpack.c.l.b16 %v929
  %v1371 = vunpack.c.h.b16 %v929
  %v1372 = vunpack.c.l.b16 %v930
  %v1373 = vunpack.c.h.b16 %v930
  %v1374 = vunpack.c.l.b16 %v931
  %v1375 = vunpack.c.h.b16 %v931
  %v1376 = vunpack.c.l.b16 %v932
  %v1377 = vunpack.c.h.b16 %v932
  %v1378 = vunpack.c.l.b16 %v933
  %v1379 = vunpack.c.h.b16 %v933
  %v1380 = vunpack.c.l.b16 %v934
  %v1381 = vunpack.c.h.b16 %v934
  %v1382 = vunpack.c.l.b16 %v935
  %v1383 = vunpack.c.l.b16 %v936
  %v1384 = vunpack.c.h.b16 %v936
  %v1385 = vunpack.c.l.b16 %v937
  %v1386 = vunpack.c.h.b16 %v937
  %v1387 = vunpack.c.l.b16 %v938
  %v1388 = vunpack.c.h.b16 %v938
  %v1389 = vunpack.c.l.b16 %v939
  %v1390 = vunpack.c.h.b16 %v939
  %v1391 = vunpack.c.l.b16 %v940
  %v1392 = vunpack.c.h.b16 %v940
  %v1393 = vunpack.c.l.b16 %v941
  %v1394 = vunpack.c.h.b16 %v941
  %v1395 = vunpack.c.l.b16 %v942
  %v1396 = vunpack.c.h.b16 %v942
  %v1397 = vunpack.c.l.b16 %v943
  %v1398 = vunpack.c.l.b16 %v944
  %v1399 = vunpack.c.h.b16 %v944
  %v1400 = vunpack.c.l.b16 %v945
  %v1401 = vunpack.c.h.b16 %v945
  %v1402 = vunpack.c.l.b16 %v946
  %v1403 = vunpack.c.h.b16 %v946
  %v1404 = vunpack.c.l.b16 %v947
  %v1405 = vunpack.c.h.b16 %v947
  %v1406 = vunpack.c.l.b16 %v948
  %v1407 = vunpack.c.h.b16 %v948
  %v1408 = vunpack.c.l.b16 %v949
  %v1409 = vunpack.c.h.b16 %v949
  %v1410 = vunpack.c.l.b16 %v950
  %v1411 = vunpack.c.h.b16 %v950
  %v1412 = vunpack.c.l.b16 %v951
  %v1413 = vunpack.c.l.b16 %v952
  %v1414 = vunpack.c.h.b16 %v952
  %v1415 = vunpack.c.l.b16 %v953
  %v1416 = vunpack.c.h.b16 %v953
  %v1417 = vunpack.c.l.b16 %v954
  %v1418 = vunpack.c.h.b16 %v954
  %v1419 = vunpack.c.l.b16 %v955
  %v1420 = vunpack.c.h.b16 %v955
  %v1421 = vunpack.c.l.b16 %v956
  %v1422 = vunpack.c.h.b16 %v956
  %v1423 = vunpack.c.l.b16 %v957
  %v1424 = vunpack.c.h.b16 %v957
  %v1425 = vunpack.c.l.b16 %v958
  %v1426 = vunpack.c.h.b16 %v958
  %v1427 = vunpack.c.l.b16 %v959
  %v1428 = vunpack.c.l.b16 %v960
  %v1429 = vunpack.c.h.b16 %v960
  %v1430 = vunpack.c.l.b16 %v961
  %v1431 = vunpack.c.h.b16 %v961
  %v1432 = vunpack.c.l.b16 %v962
  %v1433 = vunpack.c.h.b16 %v962
  %v1434 = vunpack.c.l.b16 %v963
  %v1435 = vunpack.c.h.b16 %v963
  %v1436 = vunpack.c.l.b16 %v964
  %v1437 = vunpack.c.h.b16 %v964
  %v1438 = vunpack.c.l.b16 %v965
  %v1439 = vunpack.c.h.b16 %v965
  %v1440 = vunpack.c.l.b16 %v966
  %v1441 = vunpack.c.h.b16 %v966
  %v1442 = vunpack.c.l.b16 %v967
  %v1443 = vunpack.c.l.b16 %v968
  %v1444 = vunpack.c.h.b16 %v968
  %v1445 = vunpack.c.l.b16 %v969
  %v1446 = vunpack.c.h.b16 %v969
  %v1447 = vunpack.c.l.b16 %v970
  %v1448 = vunpack.c.h.b16 %v970
  %v1449 = vunpack.c.l.b16 %v971
  %v1450 = vunpack.c.h.b16 %v971
  %v1451 = vunpack.c.l.b16 %v972
  %v1452 = vunpack.c.h.b16 %v972
  %v1453 = vunpack.c.l.b16 %v973
  %v1454 = vunpack.c.h.b16 %v973
  %v1455 = vunpack.c.l.b16 %v974
  %v1456 = vunpack.c.h.b16 %v974
  %v1457 = vunpack.c.l.b16 %v975
  %v1458 = vunpack.c.l.b16 %v976
  %v1459 = vunpack.c.h.b16 %v976
  %v1460 = vunpack.c.l.b16 %v977
  %v1461 = vunpack.c.h.b16 %v977
  %v1462 = vunpack.c.l.b16 %v978
  %v1463 = vunpack.c.h.b16 %v978
  %v1464 = vunpack.c.l.b16 %v979
  %v1465 = vunpack.c.h.b16 %v979
  %v1466 = vunpack.c.l.b16 %v980
  %v1467 = vunpack.c.h.b16 %v980
  %v1468 = vunpack.c.l.b16 %v981
  %v1469 = vunpack.c.h.b16 %v981
  %v1470 = vunpack.c.l.b16 %v982
  %v1471 = vunpack.c.h.b16 %v982
  %v1472 = vunpack.c.l.b16 %v983
  %v1473 = vunpack.c.l.b16 %v984
  %v1474 = vunpack.c.h.b16 %v984
  %v1475 = vunpack.c.l.b16 %v985
  %v1476 = vunpack.c.h.b16 %v985
  %v1477 = vunpack.c.l.b16 %v986
  %v1478 = vunpack.c.h.b16 %v986
  %v1479 = vunpack.c.l.b16 %v987
  %v1480 = vunpack.c.h.b16 %v987
  %v1481 = vunpack.c.l.b16 %v988
  %v1482 = vunpack.c.h.b16 %v988
  %v1483 = vunpack.c.l.b16 %v989
  %v1484 = vunpack.c.h.b16 %v989
  %v1485 = vunpack.c.l.b16 %v990
  %v1486 = vunpack.c.h.b16 %v990
  %v1487 = vunpack.c.l.b16 %v991
  %v1488 = vunpack.c.l.b16 %v992
  %v1489 = vunpack.c.h.b16 %v992
  %v1490 = vunpack.c.l.b16 %v993
  %v1491 = vunpack.c.h.b16 %v993
  %v1492 = vunpack.c.l.b16 %v994
  %v1493 = vunpack.c.h.b16 %v994
  %v1494 = vunpack.c.l.b16 %v995
  %v1495 = vunpack.c.h.b16 %v995
  %v1496 = vunpack.c.l.b16 %v996
  %v1497 = vunpack.c.h.b16 %v996
  %v1498 = vunpack.c.l.b16 %v997
  %v1499 = vunpack.c.h.b16 %v997
  %v1500 = vunpack.c.l.b16 %v998
  %v1501 = vunpack.c.h.b16 %v998
  %v1502 = vunpack.c.l.b16 %v999
  %v1503 = vunpack.c.l.b16 %v1000
  %v1504 = vunpack.c.h.b16 %v1000
  %v1505 = vunpack.c.l.b16 %v1001
  %v1506 = vunpack.c.h.b16 %v1001
  %v1507 = vunpack.c.l.b16 %v1002
  %v1508 = vunpack.c.h.b16 %v1002
  %v1509 = vunpack.c.l.b16 %v1003
  %v1510 = vunpack.c.h.b16 %v1003
  %v1511 = vunpack.c.l.b16 %v1004
  %v1512 = vunpack.c.h.b16 %v1004
  %v1513 = vunpack.c.l.b16 %v1005
  %v1514 = vunpack.c.h.b16 %v1005
  %v1515 = vunpack.c.l.b16 %v1006
  %v1516 = vunpack.c.h.b16 %v1006
  %v1517 = vunpack.c.l.b16 %v1007
  %v1518 = vunpack.c.l.b16 %v1008
  %v1519 = vunpack.c.h.b16 %v1008
  %v1520 = vunpack.c.l.b16 %v1009
  %v1521 = vunpack.c.h.b16 %v1009
  %v1522 = vunpack.c.l.b16 %v1010
  %v1523 = vunpack.c.h.b16 %v1010
  %v1524 = vunpack.c.l.b16 %v1011
  %v1525 = vunpack.c.h.b16 %v1011
  %v1526 = vunpack.c.l.b16 %v1012
  %v1527 = vunpack.c.h.b16 %v1012
  %v1528 = vunpack.c.l.b16 %v1013
  %v1529 = vunpack.c.h.b16 %v1013
  %v1530 = vunpack.c.l.b16 %v1014
  %v1531 = vunpack.c.h.b16 %v1014
  %v1532 = vunpack.c.l.b16 %v1015
  %v1533 = vunpack.c.l.b16 %v1016
  %v1534 = vunpack.c.h.b16 %v1016
  %v1535 = vunpack.c.l.b16 %v1017
  %v1536 = vunpack.c.h.b16 %v1017
  %v1537 = vunpack.c.l.b16 %v1018
  %v1538 = vunpack.c.h.b16 %v1018
  %v1539 = vunpack.c.l.b16 %v1019
  %v1540 = vunpack.c.h.b16 %v1019
  %v1541 = vunpack.c.l.b16 %v1020
  %v1542 = vunpack.c.h.b16 %v1020
  %v1543 = vunpack.c.l.b16 %v1021
  %v1544 = vunpack.c.h.b16 %v1021
  %v1545 = vunpack.c.l.b16 %v1022
  %v1546 = vunpack.c.h.b16 %v1022
  %v1547 = vunpack.c.l.b16 %v1023
  %v1548 = vunpack.c.l.b16 %v1024
  %v1549 = vunpack.c.h.b16 %v1024
  %v1550 = vunpack.c.l.b16 %v1025
  %v1551 = vunpack.c.h.b16 %v1025
  %v1552 = vunpack.c.l.b16 %v1026
  %v1553 = vunpack.c.h.b16 %v1026
  %v1554 = vunpack.c.l.b16 %v1027
  %v1555 = vunpack.c.h.b16 %v1027
  %v1556 = vunpack.c.l.b16 %v1028
  %v1557 = vunpack.c.h.b16 %v1028
  %v1558 = vunpack.c.l.b16 %v1029
  %v1559 = vunpack.c.h.b16 %v1029
  %v1560 = vunpack.c.l.b16 %v1030
  %v1561 = vunpack.c.h.b16 %v1030
  %v1562 = vunpack.c.l.b16 %v1031
  %v1563 = vunpack.c.l.b16 %v1032
  %v1564 = vunpack.c.h.b16 %v1032
  %v1565 = vunpack.c.l.b16 %v1033
  %v1566 = vunpack.c.h.b16 %v1033
  %v1567 = vunpack.c.l.b16 %v1034
  %v1568 = vunpack.c.h.b16 %v1034
  %v1569 = vunpack.c.l.b16 %v1035
  %v1570 = vunpack.c.h.b16 %v1035
  %v1571 = vunpack.c.l.b16 %v1036
  %v1572 = vunpack.c.h.b16 %v1036
  %v1573 = vunpack.c.l.b16 %v1037
  %v1574 = vunpack.c.h.b16 %v1037
  %v1575 = vunpack.c.l.b16 %v1038
  %v1576 = vunpack.c.h.b16 %v1038
  %v1577 = vunpack.c.l.b16 %v1039
  %v1578 = vunpack.c.l.b16 %v1040
  %v1579 = vunpack.c.h.b16 %v1040
  %v1580 = vunpack.c.l.b16 %v1041
  %v1581 = vunpack.c.h.b16 %v1041
  %v1582 = vunpack.c.l.b16 %v1042
  %v1583 = vunpack.c.h.b16 %v1042
  %v1584 = vunpack.c.l.b16 %v1043
  %v1585 = vunpack.c.h.b16 %v1043
  %v1586 = vunpack.c.l.b16 %v1044
  %v1587 = vunpack.c.h.b16 %v1044
  %v1588 = vunpack.c.l.b16 %v1045
  %v1589 = vunpack.c.h.b16 %v1045
  %v1590 = vunpack.c.l.b16 %v1046
  %v1591 = vunpack.c.h.b16 %v1046
  %v1592 = vunpack.c.l.b16 %v1047
  %v1593 = vunpack.c.l.b16 %v1048
  %v1594 = vunpack.c.h.b16 %v1048
  %v1595 = vunpack.c.l.b16 %v1049
  %v1596 = vunpack.c.h.b16 %v1049
  %v1597 = vunpack.c.l.b16 %v1050
  %v1598 = vunpack.c.h.b16 %v1050
  %v1599 = vunpack.c.l.b16 %v1051
  %v1600 = vunpack.c.h.b16 %v1051
  %v1601 = vunpack.c.l.b16 %v1052
  %v1602 = vunpack.c.h.b16 %v1052
  %v1603 = vunpack.c.l.b16 %v1053
  %v1604 = vunpack.c.h.b16 %v1053
  %v1605 = vunpack.c.l.b16 %v1054
  %v1606 = vunpack.c.h.b16 %v1054
  %v1607 = vunpack.c.l.b16 %v1055
  %v1608 = vpack.c.b16 %v1263, %v1248
  %v1609 = vpack.c.b16 %v1264, %v1249
  %v1610 = vpack.c.b16 %v1265, %v1250
  %v1611 = vpack.c.b16 %v1266, %v1251
  %v1612 = vpack.c.b16 %v1267, %v1252
  %v1613 = vpack.c.b16 %v1268, %v1253
  %v1614 = vpack.c.b16 %v1269, %v1254
  %v1615 = vpack.c.b16 %v1270, %v1255
  %v1616 = vpack.c.b16 %v1271, %v1256
  %v1617 = vpack.c.b16 %v1272, %v1257
  %v1618 = vpack.c.b16 %v1273, %v1258
  %v1619 = vpack.c.b16 %v1274, %v1259
  %v1620 = vpack.c.b16 %v1275, %v1260
  %v1621 = vpack.c.b16 %v1276, %v1261
  %v1622 = vpack.c.b16 %v1277, %v1262
  %v1623 = vpack.c.b16 %v1293, %v1278
  %v1624 = vpack.c.b16 %v1294, %v1279
  %v1625 = vpack.c.b16 %v1295, %v1280
  %v1626 = vpack.c.b16 %v1296, %v1281
  %v1627 = vpack.c.b16 %v1297, %v1282
  %v1628 = vpack.c.b16 %v1298, %v1283
  %v1629 = vpack.c.b16 %v1299, %v1284
  %v1630 = vpack.c.b16 %v1300, %v1285
  %v1631 = vpack.c.b16 %v1301, %v1286
  %v1632 = vpack.c.b16 %v1302, %v1287
  %v1633 = vpack.c.b16 %v1303, %v1288
  %v1634 = vpack.c.b16 %v1304, %v1289
  %v1635 = vpack.c.b16 %v1305, %v1290
  %v1636 = vpack.c.b16 %v1306, %v1291
  %v1637 = vpack.c.b16 %v1307, %v1292
  %v1638 = vpack.c.b16 %v1323, %v1308
  %v1639 = vpack.c.b16 %v1324, %v1309
  %v1640 = vpack.c.b16 %v1325, %v1310
  %v1641 = vpack.c.b16 %v1326, %v1311
  %v1642 = vpack.c.b16 %v1327, %v1312
  %v1643 = vpack.c.b16 %v1328, %v1313
  %v1644 = vpack.c.b16 %v1329, %v1314
  %v1645 = vpack.c.b16 %v1330, %v1315
  %v1646 = vpack.c.b16 %v1331, %v1316
  %v1647 = vpack.c.b16 %v1332, %v1317
  %v1648 = vpack.c.b16 %v1333, %v1318
  %v1649 = vpack.c.b16 %v1334, %v1319
  %v1650 = vpack.c.b16 %v1335, %v1320
  %v1651 = vpack.c.b16 %v1336, %v1321
  %v1652 = vpack.c.b16 %v1337, %v1322
  %v1653 = vpack.c.b16 %v1353, %v1338
  %v1654 = vpack.c.b16 %v1354, %v1339
  %v1655 = vpack.c.b16 %v1355, %v1340
  %v1656 = vpack.c.b16 %v1356, %v1341
  %v1657 = vpack.c.b16 %v1357, %v1342
  %v1658 = vpack.c.b16 %v1358, %v1343
  %v1659 = vpack.c.b16 %v1359, %v1344
  %v1660 = vpack.c.b16 %v1360, %v1345
  %v1661 = vpack.c.b16 %v1361, %v1346
  %v1662 = vpack.c.b16 %v1362, %v1347
  %v1663 = vpack.c.b16 %v1363, %v1348
  %v1664 = vpack.c.b16 %v1364, %v1349
  %v1665 = vpack.c.b16 %v1365, %v1350
  %v1666 = vpack.c.b16 %v1366, %v1351
  %v1667 = vpack.c.b16 %v1367, %v1352
  %v1668 = vpack.c.b16 %v1383, %v1368
  %v1669 = vpack.c.b16 %v1384, %v1369
  %v1670 = vpack.c.b16 %v1385, %v1370
  %v1671 = vpack.c.b16 %v1386, %v1371
  %v1672 = vpack.c.b16 %v1387, %v1372
  %v1673 = vpack.c.b16 %v1388, %v1373
  %v1674 = vpack.c.b16 %v1389, %v1374
  %v1675 = vpack.c.b16 %v1390, %v1375
  %v1676 = vpack.c.b16 %v1391, %v1376
  %v1677 = vpack.c.b16 %v1392, %v1377
  %v1678 = vpack.c.b16 %v1393, %v1378
  %v1679 = vpack.c.b16 %v1394, %v1379
  %v1680 = vpack.c.b16 %v1395, %v1380
  %v1681 = vpack.c.b16 %v1396, %v1381
  %v1682 = vpack.c.b16 %v1397, %v1382
  %v1683 = vpack.c.b16 %v1413, %v1398
  %v1684 = vpack.c.b16 %v1414, %v1399
  %v1685 = vpack.c.b16 %v1415, %v1400
  %v1686 = vpack.c.b16 %v1416, %v1401
  %v1687 = vpack.c.b16 %v1417, %v1402
  %v1688 = vpack.c.b16 %v1418, %v1403
  %v1689 = vpack.c.b16 %v1419, %v1404
  %v1690 = vpack.c.b16 %v1420, %v1405
  %v1691 = vpack.c.b16 %v1421, %v1406
  %v1692 = vpack.c.b16 %v1422, %v1407
  %v1693 = vpack.c.b16 %v1423, %v1408
  %v1694 = vpack.c.b16 %v1424, %v1409
  %v1695 = vpack.c.b16 %v1425, %v1410
  %v1696 = vpack.c.b16 %v1426, %v1411
  %v1697 = vpack.c.b16 %v1427, %v1412
  %v1698 = vpack.c.b16 %v1443, %v1428
  %v1699 = vpack.c.b16 %v1444, %v1429
  %v1700 = vpack.c.b16 %v1445, %v1430
  %v1701 = vpack.c.b16 %v1446, %v1431
  %v1702 = vpack.c.b16 %v1447, %v1432
  %v1703 = vpack.c.b16 %v1448, %v1433
  %v1704 = vpack.c.b16 %v1449, %v1434
  %v1705 = vpack.c.b16 %v1450, %v1435
  %v1706 = vpack.c.b16 %v1451, %v1436
  %v1707 = vpack.c.b16 %v1452, %v1437
  %v1708 = vpack.c.b16 %v1453, %v1438
  %v1709 = vpack.c.b16 %v1454, %v1439
  %v1710 = vpack.c.b16 %v1455, %v1440
  %v1711 = vpack.c.b16 %v1456, %v1441
  %v1712 = vpack.c.b16 %v1457, %v1442
  %v1713 = vpack.c.b16 %v1473, %v1458
  %v1714 = vpack.c.b16 %v1474, %v1459
  %v1715 = vpack.c.b16 %v1475, %v1460
  %v1716 = vpack.c.b16 %v1476, %v1461
  %v1717 = vpack.c.b16 %v1477, %v1462
  %v1718 = vpack.c.b16 %v1478, %v1463
  %v1719 = vpack.c.b16 %v1479, %v1464
  %v1720 = vpack.c.b16 %v1480, %v1465
  %v1721 = vpack.c.b16 %v1481, %v1466
  %v1722 = vpack.c.b16 %v1482, %v1467
  %v1723 = vpack.c.b16 %v1483, %v1468
  %v1724 = vpack.c.b16 %v1484, %v1469
  %v1725 = vpack.c.b16 %v1485, %v1470
  %v1726 = vpack.c.b16 %v1486, %v1471
  %v1727 = vpack.c.b16 %v1487, %v1472
  %v1728 = vpack.c.b16 %v1503, %v1488
  %v1729 = vpack.c.b16 %v1504, %v1489
  %v1730 = vpack.c.b16 %v1505, %v1490
  %v1731 = vpack.c.b16 %v1506, %v1491
  %v1732 = vpack.c.b16 %v1507, %v1492
  %v1733 = vpack.c.b16 %v1508, %v1493
  %v1734 = vpack.c.b16 %v1509, %v1494
  %v1735 = vpack.c.b16 %v1510, %v1495
  %v1736 = vpack.c.b16 %v1511, %v1496
  %v1737 = vpack.c.b16 %v1512, %v1497
  %v1738 = vpack.c.b16 %v1513, %v1498
  %v1739 = vpack.c.b16 %v1514, %v1499
  %v1740 = vpack.c.b16 %v1515, %v1500
  %v1741 = vpack.c.b16 %v1516, %v1501
  %v1742 = vpack.c.b16 %v1517, %v1502
  %v1743 = vpack.c.b16 %v1533, %v1518
  %v1744 = vpack.c.b16 %v1534, %v1519
  %v1745 = vpack.c.b16 %v1535, %v1520
  %v1746 = vpack.c.b16 %v1536, %v1521
  %v1747 = vpack.c.b16 %v1537, %v1522
  %v1748 = vpack.c.b16 %v1538, %v1523
  %v1749 = vpack.c.b16 %v1539, %v1524
  %v1750 = vpack.c.b16 %v1540, %v1525
  %v1751 = vpack.c.b16 %v1541, %v1526
  %v1752 = vpack.c.b16 %v1542, %v1527
  %v1753 = vpack.c.b16 %v1543, %v1528
  %v1754 = vpack.c.b16 %v1544, %v1529
  %v1755 = vpack.c.b16 %v1545, %v1530
  %v1756 = vpack.c.b16 %v1546, %v1531
  %v1757 = vpack.c.b16 %v1547, %v1532
  %v1758 = vpack.c.b16 %v1563, %v1548
  %v1759 = vpack.c.b16 %v1564, %v1549
  %v1760 = vpack.c.b16 %v1565, %v1550
  %v1761 = vpack.c.b16 %v1566, %v1551
  %v1762 = vpack.c.b16 %v1567, %v1552
  %v1763 = vpack.c.b16 %v1568, %v1553
  %v1764 = vpack.c.b16 %v1569, %v1554
  %v1765 = vpack.c.b16 %v1570, %v1555
  %v1766 = vpack.c.b16 %v1571, %v1556
  %v1767 = vpack.c.b16 %v1572, %v1557
  %v1768 = vpack.c.b16 %v1573, %v1558
  %v1769 = vpack.c.b16 %v1574, %v1559
  %v1770 = vpack.c.b16 %v1575, %v1560
  %v1771 = vpack.c.b16 %v1576, %v1561
  %v1772 = vpack.c.b16 %v1577, %v1562
  %v1773 = vpack.c.b16 %v1593, %v1578
  %v1774 = vpack.c.b16 %v1594, %v1579
  %v1775 = vpack.c.b16 %v1595, %v1580
  %v1776 = vpack.c.b16 %v1596, %v1581
  %v1777 = vpack.c.b16 %v1597, %v1582
  %v1778 = vpack.c.b16 %v1598, %v1583
  %v1779 = vpack.c.b16 %v1599, %v1584
  %v1780 = vpack.c.b16 %v1600, %v1585
  %v1781 = vpack.c.b16 %v1601, %v1586
  %v1782 = vpack.c.b16 %v1602, %v1587
  %v1783 = vpack.c.b16 %v1603, %v1588
  %v1784 = vpack.c.b16 %v1604, %v1589
  %v1785 = vpack.c.b16 %v1605, %v1590
  %v1786 = vpack.c.b16 %v1606, %v1591
  %v1787 = vpack.c.b16 %v1607, %v1592
  %1968 = vmatpush.bf16.msra.mxu0 %v751
  %1969 = vmatpush.bf16.msra.mxu0 %v750
  %1970 = vmatpush.bf16.msra.mxu0 %v749
  %1971 = vmatpush.bf16.msra.mxu0 %v748
  %1972 = vmatpush.bf16.msra.mxu0 %v747
  %1973 = vmatpush.bf16.msra.mxu0 %v746
  %1974 = vmatpush.bf16.msra.mxu0 %v745
  %1975 = vmatpush.bf16.msra.mxu0 %v744
  %1976 = vmatmul.bf16.gmra.mxu0 %v1608
  %v1977 = vpop.f32.mrf.mxu0
  %v1978 = vadd.f32 0.0, %v1977
  %v1979 = vpop.f32.mrf.mxu0
  %v1980 = vadd.f32 0.0, %v1979
  %1981 = vmatmul.bf16.gmra.mxu0 %v1623
  %v1982 = vpop.f32.mrf.mxu0
  %v1983 = vadd.f32 0.0, %v1982
  %v1984 = vpop.f32.mrf.mxu0
  %v1985 = vadd.f32 0.0, %v1984
  %1986 = vmatmul.bf16.gmra.mxu0 %v1638
  %v1987 = vpop.f32.mrf.mxu0
  %v1988 = vadd.f32 0.0, %v1987
  %v1989 = vpop.f32.mrf.mxu0
  %v1990 = vadd.f32 0.0, %v1989
  %1991 = vmatmul.bf16.gmra.mxu0 %v1653
  %v1992 = vpop.f32.mrf.mxu0
  %v1993 = vadd.f32 0.0, %v1992
  %v1994 = vpop.f32.mrf.mxu0
  %v1995 = vadd.f32 0.0, %v1994
  %1996 = vmatmul.bf16.gmra.mxu0 %v1668
  %v1997 = vpop.f32.mrf.mxu0
  %v1998 = vadd.f32 0.0, %v1997
  %v1999 = vpop.f32.mrf.mxu0
  %v2000 = vadd.f32 0.0, %v1999
  %2001 = vmatmul.bf16.gmra.mxu0 %v1683
  %v2002 = vpop.f32.mrf.mxu0
  %v2003 = vadd.f32 0.0, %v2002
  %v2004 = vpop.f32.mrf.mxu0
  %v2005 = vadd.f32 0.0, %v2004
  %2006 = vmatmul.bf16.gmra.mxu0 %v1698
  %v2007 = vpop.f32.mrf.mxu0
  %v2008 = vadd.f32 0.0, %v2007
  %v2009 = vpop.f32.mrf.mxu0
  %v2010 = vadd.f32 0.0, %v2009
  %2011 = vmatmul.bf16.gmra.mxu0 %v1713
  %v2012 = vpop.f32.mrf.mxu0
  %v2013 = vadd.f32 0.0, %v2012
  %v2014 = vpop.f32.mrf.mxu0
  %v2015 = vadd.f32 0.0, %v2014
  %2016 = vmatmul.bf16.gmra.mxu0 %v1728
  %v2017 = vpop.f32.mrf.mxu0
  %v2018 = vadd.f32 0.0, %v2017
  %v2019 = vpop.f32.mrf.mxu0
  %v2020 = vadd.f32 0.0, %v2019
  %2021 = vmatmul.bf16.gmra.mxu0 %v1743
  %v2022 = vpop.f32.mrf.mxu0
  %v2023 = vadd.f32 0.0, %v2022
  %v2024 = vpop.f32.mrf.mxu0
  %v2025 = vadd.f32 0.0, %v2024
  %2026 = vmatmul.bf16.gmra.mxu0 %v1758
  %v2027 = vpop.f32.mrf.mxu0
  %v2028 = vadd.f32 0.0, %v2027
  %v2029 = vpop.f32.mrf.mxu0
  %v2030 = vadd.f32 0.0, %v2029
  %2031 = vmatmul.bf16.gmra.mxu0 %v1773
  %v2032 = vpop.f32.mrf.mxu0
  %v2033 = vadd.f32 0.0, %v2032
  %v2034 = vpop.f32.mrf.mxu0
  %v2035 = vadd.f32 0.0, %v2034
  %2036 = vdwg.mxu0
  %2037 = vmatpush.bf16.msra.mxu0 %v759
  %2038 = vmatpush.bf16.msra.mxu0 %v758
  %2039 = vmatpush.bf16.msra.mxu0 %v757
  %2040 = vmatpush.bf16.msra.mxu0 %v756
  %2041 = vmatpush.bf16.msra.mxu0 %v755
  %2042 = vmatpush.bf16.msra.mxu0 %v754
  %2043 = vmatpush.bf16.msra.mxu0 %v753
  %2044 = vmatpush.bf16.msra.mxu0 %v752
  %2045 = vmatmul.bf16.gmra.mxu0 %v1609
  %v2046 = vpop.f32.mrf.mxu0
  %v2047 = vadd.f32 %v1978, %v2046
  %v2048 = vpop.f32.mrf.mxu0
  %v2049 = vadd.f32 %v1980, %v2048
  %2050 = vmatmul.bf16.gmra.mxu0 %v1624
  %v2051 = vpop.f32.mrf.mxu0
  %v2052 = vadd.f32 %v1983, %v2051
  %v2053 = vpop.f32.mrf.mxu0
  %v2054 = vadd.f32 %v1985, %v2053
  %2055 = vmatmul.bf16.gmra.mxu0 %v1639
  %v2056 = vpop.f32.mrf.mxu0
  %v2057 = vadd.f32 %v1988, %v2056
  %v2058 = vpop.f32.mrf.mxu0
  %v2059 = vadd.f32 %v1990, %v2058
  %2060 = vmatmul.bf16.gmra.mxu0 %v1654
  %v2061 = vpop.f32.mrf.mxu0
  %v2062 = vadd.f32 %v1993, %v2061
  %v2063 = vpop.f32.mrf.mxu0
  %v2064 = vadd.f32 %v1995, %v2063
  %2065 = vmatmul.bf16.gmra.mxu0 %v1669
  %v2066 = vpop.f32.mrf.mxu0
  %v2067 = vadd.f32 %v1998, %v2066
  %v2068 = vpop.f32.mrf.mxu0
  %v2069 = vadd.f32 %v2000, %v2068
  %2070 = vmatmul.bf16.gmra.mxu0 %v1684
  %v2071 = vpop.f32.mrf.mxu0
  %v2072 = vadd.f32 %v2003, %v2071
  %v2073 = vpop.f32.mrf.mxu0
  %v2074 = vadd.f32 %v2005, %v2073
  %2075 = vmatmul.bf16.gmra.mxu0 %v1699
  %v2076 = vpop.f32.mrf.mxu0
  %v2077 = vadd.f32 %v2008, %v2076
  %v2078 = vpop.f32.mrf.mxu0
  %v2079 = vadd.f32 %v2010, %v2078
  %2080 = vmatmul.bf16.gmra.mxu0 %v1714
  %v2081 = vpop.f32.mrf.mxu0
  %v2082 = vadd.f32 %v2013, %v2081
  %v2083 = vpop.f32.mrf.mxu0
  %v2084 = vadd.f32 %v2015, %v2083
  %2085 = vmatmul.bf16.gmra.mxu0 %v1729
  %v2086 = vpop.f32.mrf.mxu0
  %v2087 = vadd.f32 %v2018, %v2086
  %v2088 = vpop.f32.mrf.mxu0
  %v2089 = vadd.f32 %v2020, %v2088
  %2090 = vmatmul.bf16.gmra.mxu0 %v1744
  %v2091 = vpop.f32.mrf.mxu0
  %v2092 = vadd.f32 %v2023, %v2091
  %v2093 = vpop.f32.mrf.mxu0
  %v2094 = vadd.f32 %v2025, %v2093
  %2095 = vmatmul.bf16.gmra.mxu0 %v1759
  %v2096 = vpop.f32.mrf.mxu0
  %v2097 = vadd.f32 %v2028, %v2096
  %v2098 = vpop.f32.mrf.mxu0
  %v2099 = vadd.f32 %v2030, %v2098
  %2100 = vmatmul.bf16.gmra.mxu0 %v1774
  %v2101 = vpop.f32.mrf.mxu0
  %v2102 = vadd.f32 %v2033, %v2101
  %v2103 = vpop.f32.mrf.mxu0
  %v2104 = vadd.f32 %v2035, %v2103
  %2105 = vdwg.mxu0
  %2106 = vmatpush.bf16.msra.mxu0 %v767
  %2107 = vmatpush.bf16.msra.mxu0 %v766
  %2108 = vmatpush.bf16.msra.mxu0 %v765
  %2109 = vmatpush.bf16.msra.mxu0 %v764
  %2110 = vmatpush.bf16.msra.mxu0 %v763
  %2111 = vmatpush.bf16.msra.mxu0 %v762
  %2112 = vmatpush.bf16.msra.mxu0 %v761
  %2113 = vmatpush.bf16.msra.mxu0 %v760
  %2114 = vmatmul.bf16.gmra.mxu0 %v1610
  %v2115 = vpop.f32.mrf.mxu0
  %v2116 = vadd.f32 %v2047, %v2115
  %v2117 = vpop.f32.mrf.mxu0
  %v2118 = vadd.f32 %v2049, %v2117
  %2119 = vmatmul.bf16.gmra.mxu0 %v1625
  %v2120 = vpop.f32.mrf.mxu0
  %v2121 = vadd.f32 %v2052, %v2120
  %v2122 = vpop.f32.mrf.mxu0
  %v2123 = vadd.f32 %v2054, %v2122
  %2124 = vmatmul.bf16.gmra.mxu0 %v1640
  %v2125 = vpop.f32.mrf.mxu0
  %v2126 = vadd.f32 %v2057, %v2125
  %v2127 = vpop.f32.mrf.mxu0
  %v2128 = vadd.f32 %v2059, %v2127
  %2129 = vmatmul.bf16.gmra.mxu0 %v1655
  %v2130 = vpop.f32.mrf.mxu0
  %v2131 = vadd.f32 %v2062, %v2130
  %v2132 = vpop.f32.mrf.mxu0
  %v2133 = vadd.f32 %v2064, %v2132
  %2134 = vmatmul.bf16.gmra.mxu0 %v1670
  %v2135 = vpop.f32.mrf.mxu0
  %v2136 = vadd.f32 %v2067, %v2135
  %v2137 = vpop.f32.mrf.mxu0
  %v2138 = vadd.f32 %v2069, %v2137
  %2139 = vmatmul.bf16.gmra.mxu0 %v1685
  %v2140 = vpop.f32.mrf.mxu0
  %v2141 = vadd.f32 %v2072, %v2140
  %v2142 = vpop.f32.mrf.mxu0
  %v2143 = vadd.f32 %v2074, %v2142
  %2144 = vmatmul.bf16.gmra.mxu0 %v1700
  %v2145 = vpop.f32.mrf.mxu0
  %v2146 = vadd.f32 %v2077, %v2145
  %v2147 = vpop.f32.mrf.mxu0
  %v2148 = vadd.f32 %v2079, %v2147
  %2149 = vmatmul.bf16.gmra.mxu0 %v1715
  %v2150 = vpop.f32.mrf.mxu0
  %v2151 = vadd.f32 %v2082, %v2150
  %v2152 = vpop.f32.mrf.mxu0
  %v2153 = vadd.f32 %v2084, %v2152
  %2154 = vmatmul.bf16.gmra.mxu0 %v1730
  %v2155 = vpop.f32.mrf.mxu0
  %v2156 = vadd.f32 %v2087, %v2155
  %v2157 = vpop.f32.mrf.mxu0
  %v2158 = vadd.f32 %v2089, %v2157
  %2159 = vmatmul.bf16.gmra.mxu0 %v1745
  %v2160 = vpop.f32.mrf.mxu0
  %v2161 = vadd.f32 %v2092, %v2160
  %v2162 = vpop.f32.mrf.mxu0
  %v2163 = vadd.f32 %v2094, %v2162
  %2164 = vmatmul.bf16.gmra.mxu0 %v1760
  %v2165 = vpop.f32.mrf.mxu0
  %v2166 = vadd.f32 %v2097, %v2165
  %v2167 = vpop.f32.mrf.mxu0
  %v2168 = vadd.f32 %v2099, %v2167
  %2169 = vmatmul.bf16.gmra.mxu0 %v1775
  %v2170 = vpop.f32.mrf.mxu0
  %v2171 = vadd.f32 %v2102, %v2170
  %v2172 = vpop.f32.mrf.mxu0
  %v2173 = vadd.f32 %v2104, %v2172
  %2174 = vdwg.mxu0
  %2175 = vmatpush.bf16.msra.mxu0 %v775
  %2176 = vmatpush.bf16.msra.mxu0 %v774
  %2177 = vmatpush.bf16.msra.mxu0 %v773
  %2178 = vmatpush.bf16.msra.mxu0 %v772
  %2179 = vmatpush.bf16.msra.mxu0 %v771
  %2180 = vmatpush.bf16.msra.mxu0 %v770
  %2181 = vmatpush.bf16.msra.mxu0 %v769
  %2182 = vmatpush.bf16.msra.mxu0 %v768
  %2183 = vmatmul.bf16.gmra.mxu0 %v1611
  %v2184 = vpop.f32.mrf.mxu0
  %v2185 = vadd.f32 %v2116, %v2184
  %v2186 = vpop.f32.mrf.mxu0
  %v2187 = vadd.f32 %v2118, %v2186
  %2188 = vmatmul.bf16.gmra.mxu0 %v1626
  %v2189 = vpop.f32.mrf.mxu0
  %v2190 = vadd.f32 %v2121, %v2189
  %v2191 = vpop.f32.mrf.mxu0
  %v2192 = vadd.f32 %v2123, %v2191
  %2193 = vmatmul.bf16.gmra.mxu0 %v1641
  %v2194 = vpop.f32.mrf.mxu0
  %v2195 = vadd.f32 %v2126, %v2194
  %v2196 = vpop.f32.mrf.mxu0
  %v2197 = vadd.f32 %v2128, %v2196
  %2198 = vmatmul.bf16.gmra.mxu0 %v1656
  %v2199 = vpop.f32.mrf.mxu0
  %v2200 = vadd.f32 %v2131, %v2199
  %v2201 = vpop.f32.mrf.mxu0
  %v2202 = vadd.f32 %v2133, %v2201
  %2203 = vmatmul.bf16.gmra.mxu0 %v1671
  %v2204 = vpop.f32.mrf.mxu0
  %v2205 = vadd.f32 %v2136, %v2204
  %v2206 = vpop.f32.mrf.mxu0
  %v2207 = vadd.f32 %v2138, %v2206
  %2208 = vmatmul.bf16.gmra.mxu0 %v1686
  %v2209 = vpop.f32.mrf.mxu0
  %v2210 = vadd.f32 %v2141, %v2209
  %v2211 = vpop.f32.mrf.mxu0
  %v2212 = vadd.f32 %v2143, %v2211
  %2213 = vmatmul.bf16.gmra.mxu0 %v1701
  %v2214 = vpop.f32.mrf.mxu0
  %v2215 = vadd.f32 %v2146, %v2214
  %v2216 = vpop.f32.mrf.mxu0
  %v2217 = vadd.f32 %v2148, %v2216
  %2218 = vmatmul.bf16.gmra.mxu0 %v1716
  %v2219 = vpop.f32.mrf.mxu0
  %v2220 = vadd.f32 %v2151, %v2219
  %v2221 = vpop.f32.mrf.mxu0
  %v2222 = vadd.f32 %v2153, %v2221
  %2223 = vmatmul.bf16.gmra.mxu0 %v1731
  %v2224 = vpop.f32.mrf.mxu0
  %v2225 = vadd.f32 %v2156, %v2224
  %v2226 = vpop.f32.mrf.mxu0
  %v2227 = vadd.f32 %v2158, %v2226
  %2228 = vmatmul.bf16.gmra.mxu0 %v1746
  %v2229 = vpop.f32.mrf.mxu0
  %v2230 = vadd.f32 %v2161, %v2229
  %v2231 = vpop.f32.mrf.mxu0
  %v2232 = vadd.f32 %v2163, %v2231
  %2233 = vmatmul.bf16.gmra.mxu0 %v1761
  %v2234 = vpop.f32.mrf.mxu0
  %v2235 = vadd.f32 %v2166, %v2234
  %v2236 = vpop.f32.mrf.mxu0
  %v2237 = vadd.f32 %v2168, %v2236
  %2238 = vmatmul.bf16.gmra.mxu0 %v1776
  %v2239 = vpop.f32.mrf.mxu0
  %v2240 = vadd.f32 %v2171, %v2239
  %v2241 = vpop.f32.mrf.mxu0
  %v2242 = vadd.f32 %v2173, %v2241
  %2243 = vdwg.mxu0
  %2244 = vmatpush.bf16.msra.mxu0 %v783
  %2245 = vmatpush.bf16.msra.mxu0 %v782
  %2246 = vmatpush.bf16.msra.mxu0 %v781
  %2247 = vmatpush.bf16.msra.mxu0 %v780
  %2248 = vmatpush.bf16.msra.mxu0 %v779
  %2249 = vmatpush.bf16.msra.mxu0 %v778
  %2250 = vmatpush.bf16.msra.mxu0 %v777
  %2251 = vmatpush.bf16.msra.mxu0 %v776
  %2252 = vmatmul.bf16.gmra.mxu0 %v1612
  %v2253 = vpop.f32.mrf.mxu0
  %v2254 = vadd.f32 %v2185, %v2253
  %v2255 = vpop.f32.mrf.mxu0
  %v2256 = vadd.f32 %v2187, %v2255
  %2257 = vmatmul.bf16.gmra.mxu0 %v1627
  %v2258 = vpop.f32.mrf.mxu0
  %v2259 = vadd.f32 %v2190, %v2258
  %v2260 = vpop.f32.mrf.mxu0
  %v2261 = vadd.f32 %v2192, %v2260
  %2262 = vmatmul.bf16.gmra.mxu0 %v1642
  %v2263 = vpop.f32.mrf.mxu0
  %v2264 = vadd.f32 %v2195, %v2263
  %v2265 = vpop.f32.mrf.mxu0
  %v2266 = vadd.f32 %v2197, %v2265
  %2267 = vmatmul.bf16.gmra.mxu0 %v1657
  %v2268 = vpop.f32.mrf.mxu0
  %v2269 = vadd.f32 %v2200, %v2268
  %v2270 = vpop.f32.mrf.mxu0
  %v2271 = vadd.f32 %v2202, %v2270
  %2272 = vmatmul.bf16.gmra.mxu0 %v1672
  %v2273 = vpop.f32.mrf.mxu0
  %v2274 = vadd.f32 %v2205, %v2273
  %v2275 = vpop.f32.mrf.mxu0
  %v2276 = vadd.f32 %v2207, %v2275
  %2277 = vmatmul.bf16.gmra.mxu0 %v1687
  %v2278 = vpop.f32.mrf.mxu0
  %v2279 = vadd.f32 %v2210, %v2278
  %v2280 = vpop.f32.mrf.mxu0
  %v2281 = vadd.f32 %v2212, %v2280
  %2282 = vmatmul.bf16.gmra.mxu0 %v1702
  %v2283 = vpop.f32.mrf.mxu0
  %v2284 = vadd.f32 %v2215, %v2283
  %v2285 = vpop.f32.mrf.mxu0
  %v2286 = vadd.f32 %v2217, %v2285
  %2287 = vmatmul.bf16.gmra.mxu0 %v1717
  %v2288 = vpop.f32.mrf.mxu0
  %v2289 = vadd.f32 %v2220, %v2288
  %v2290 = vpop.f32.mrf.mxu0
  %v2291 = vadd.f32 %v2222, %v2290
  %2292 = vmatmul.bf16.gmra.mxu0 %v1732
  %v2293 = vpop.f32.mrf.mxu0
  %v2294 = vadd.f32 %v2225, %v2293
  %v2295 = vpop.f32.mrf.mxu0
  %v2296 = vadd.f32 %v2227, %v2295
  %2297 = vmatmul.bf16.gmra.mxu0 %v1747
  %v2298 = vpop.f32.mrf.mxu0
  %v2299 = vadd.f32 %v2230, %v2298
  %v2300 = vpop.f32.mrf.mxu0
  %v2301 = vadd.f32 %v2232, %v2300
  %2302 = vmatmul.bf16.gmra.mxu0 %v1762
  %v2303 = vpop.f32.mrf.mxu0
  %v2304 = vadd.f32 %v2235, %v2303
  %v2305 = vpop.f32.mrf.mxu0
  %v2306 = vadd.f32 %v2237, %v2305
  %2307 = vmatmul.bf16.gmra.mxu0 %v1777
  %v2308 = vpop.f32.mrf.mxu0
  %v2309 = vadd.f32 %v2240, %v2308
  %v2310 = vpop.f32.mrf.mxu0
  %v2311 = vadd.f32 %v2242, %v2310
  %2312 = vdwg.mxu0
  %2313 = vmatpush.bf16.msra.mxu0 %v791
  %2314 = vmatpush.bf16.msra.mxu0 %v790
  %2315 = vmatpush.bf16.msra.mxu0 %v789
  %2316 = vmatpush.bf16.msra.mxu0 %v788
  %2317 = vmatpush.bf16.msra.mxu0 %v787
  %2318 = vmatpush.bf16.msra.mxu0 %v786
  %2319 = vmatpush.bf16.msra.mxu0 %v785
  %2320 = vmatpush.bf16.msra.mxu0 %v784
  %2321 = vmatmul.bf16.gmra.mxu0 %v1613
  %v2322 = vpop.f32.mrf.mxu0
  %v2323 = vadd.f32 %v2254, %v2322
  %v2324 = vpop.f32.mrf.mxu0
  %v2325 = vadd.f32 %v2256, %v2324
  %2326 = vmatmul.bf16.gmra.mxu0 %v1628
  %v2327 = vpop.f32.mrf.mxu0
  %v2328 = vadd.f32 %v2259, %v2327
  %v2329 = vpop.f32.mrf.mxu0
  %v2330 = vadd.f32 %v2261, %v2329
  %2331 = vmatmul.bf16.gmra.mxu0 %v1643
  %v2332 = vpop.f32.mrf.mxu0
  %v2333 = vadd.f32 %v2264, %v2332
  %v2334 = vpop.f32.mrf.mxu0
  %v2335 = vadd.f32 %v2266, %v2334
  %2336 = vmatmul.bf16.gmra.mxu0 %v1658
  %v2337 = vpop.f32.mrf.mxu0
  %v2338 = vadd.f32 %v2269, %v2337
  %v2339 = vpop.f32.mrf.mxu0
  %v2340 = vadd.f32 %v2271, %v2339
  %2341 = vmatmul.bf16.gmra.mxu0 %v1673
  %v2342 = vpop.f32.mrf.mxu0
  %v2343 = vadd.f32 %v2274, %v2342
  %v2344 = vpop.f32.mrf.mxu0
  %v2345 = vadd.f32 %v2276, %v2344
  %2346 = vmatmul.bf16.gmra.mxu0 %v1688
  %v2347 = vpop.f32.mrf.mxu0
  %v2348 = vadd.f32 %v2279, %v2347
  %v2349 = vpop.f32.mrf.mxu0
  %v2350 = vadd.f32 %v2281, %v2349
  %2351 = vmatmul.bf16.gmra.mxu0 %v1703
  %v2352 = vpop.f32.mrf.mxu0
  %v2353 = vadd.f32 %v2284, %v2352
  %v2354 = vpop.f32.mrf.mxu0
  %v2355 = vadd.f32 %v2286, %v2354
  %2356 = vmatmul.bf16.gmra.mxu0 %v1718
  %v2357 = vpop.f32.mrf.mxu0
  %v2358 = vadd.f32 %v2289, %v2357
  %v2359 = vpop.f32.mrf.mxu0
  %v2360 = vadd.f32 %v2291, %v2359
  %2361 = vmatmul.bf16.gmra.mxu0 %v1733
  %v2362 = vpop.f32.mrf.mxu0
  %v2363 = vadd.f32 %v2294, %v2362
  %v2364 = vpop.f32.mrf.mxu0
  %v2365 = vadd.f32 %v2296, %v2364
  %2366 = vmatmul.bf16.gmra.mxu0 %v1748
  %v2367 = vpop.f32.mrf.mxu0
  %v2368 = vadd.f32 %v2299, %v2367
  %v2369 = vpop.f32.mrf.mxu0
  %v2370 = vadd.f32 %v2301, %v2369
  %2371 = vmatmul.bf16.gmra.mxu0 %v1763
  %v2372 = vpop.f32.mrf.mxu0
  %v2373 = vadd.f32 %v2304, %v2372
  %v2374 = vpop.f32.mrf.mxu0
  %v2375 = vadd.f32 %v2306, %v2374
  %2376 = vmatmul.bf16.gmra.mxu0 %v1778
  %v2377 = vpop.f32.mrf.mxu0
  %v2378 = vadd.f32 %v2309, %v2377
  %v2379 = vpop.f32.mrf.mxu0
  %v2380 = vadd.f32 %v2311, %v2379
  %2381 = vdwg.mxu0
  %2382 = vmatpush.bf16.msra.mxu0 %v799
  %2383 = vmatpush.bf16.msra.mxu0 %v798
  %2384 = vmatpush.bf16.msra.mxu0 %v797
  %2385 = vmatpush.bf16.msra.mxu0 %v796
  %2386 = vmatpush.bf16.msra.mxu0 %v795
  %2387 = vmatpush.bf16.msra.mxu0 %v794
  %2388 = vmatpush.bf16.msra.mxu0 %v793
  %2389 = vmatpush.bf16.msra.mxu0 %v792
  %2390 = vmatmul.bf16.gmra.mxu0 %v1614
  %v2391 = vpop.f32.mrf.mxu0
  %v2392 = vadd.f32 %v2323, %v2391
  %v2393 = vpop.f32.mrf.mxu0
  %v2394 = vadd.f32 %v2325, %v2393
  %2395 = vmatmul.bf16.gmra.mxu0 %v1629
  %v2396 = vpop.f32.mrf.mxu0
  %v2397 = vadd.f32 %v2328, %v2396
  %v2398 = vpop.f32.mrf.mxu0
  %v2399 = vadd.f32 %v2330, %v2398
  %2400 = vmatmul.bf16.gmra.mxu0 %v1644
  %v2401 = vpop.f32.mrf.mxu0
  %v2402 = vadd.f32 %v2333, %v2401
  %v2403 = vpop.f32.mrf.mxu0
  %v2404 = vadd.f32 %v2335, %v2403
  %2405 = vmatmul.bf16.gmra.mxu0 %v1659
  %v2406 = vpop.f32.mrf.mxu0
  %v2407 = vadd.f32 %v2338, %v2406
  %v2408 = vpop.f32.mrf.mxu0
  %v2409 = vadd.f32 %v2340, %v2408
  %2410 = vmatmul.bf16.gmra.mxu0 %v1674
  %v2411 = vpop.f32.mrf.mxu0
  %v2412 = vadd.f32 %v2343, %v2411
  %v2413 = vpop.f32.mrf.mxu0
  %v2414 = vadd.f32 %v2345, %v2413
  %2415 = vmatmul.bf16.gmra.mxu0 %v1689
  %v2416 = vpop.f32.mrf.mxu0
  %v2417 = vadd.f32 %v2348, %v2416
  %v2418 = vpop.f32.mrf.mxu0
  %v2419 = vadd.f32 %v2350, %v2418
  %2420 = vmatmul.bf16.gmra.mxu0 %v1704
  %v2421 = vpop.f32.mrf.mxu0
  %v2422 = vadd.f32 %v2353, %v2421
  %v2423 = vpop.f32.mrf.mxu0
  %v2424 = vadd.f32 %v2355, %v2423
  %2425 = vmatmul.bf16.gmra.mxu0 %v1719
  %v2426 = vpop.f32.mrf.mxu0
  %v2427 = vadd.f32 %v2358, %v2426
  %v2428 = vpop.f32.mrf.mxu0
  %v2429 = vadd.f32 %v2360, %v2428
  %2430 = vmatmul.bf16.gmra.mxu0 %v1734
  %v2431 = vpop.f32.mrf.mxu0
  %v2432 = vadd.f32 %v2363, %v2431
  %v2433 = vpop.f32.mrf.mxu0
  %v2434 = vadd.f32 %v2365, %v2433
  %2435 = vmatmul.bf16.gmra.mxu0 %v1749
  %v2436 = vpop.f32.mrf.mxu0
  %v2437 = vadd.f32 %v2368, %v2436
  %v2438 = vpop.f32.mrf.mxu0
  %v2439 = vadd.f32 %v2370, %v2438
  %2440 = vmatmul.bf16.gmra.mxu0 %v1764
  %v2441 = vpop.f32.mrf.mxu0
  %v2442 = vadd.f32 %v2373, %v2441
  %v2443 = vpop.f32.mrf.mxu0
  %v2444 = vadd.f32 %v2375, %v2443
  %2445 = vmatmul.bf16.gmra.mxu0 %v1779
  %v2446 = vpop.f32.mrf.mxu0
  %v2447 = vadd.f32 %v2378, %v2446
  %v2448 = vpop.f32.mrf.mxu0
  %v2449 = vadd.f32 %v2380, %v2448
  %2450 = vdwg.mxu0
  %2451 = vmatpush.bf16.msra.mxu0 %v807
  %2452 = vmatpush.bf16.msra.mxu0 %v806
  %2453 = vmatpush.bf16.msra.mxu0 %v805
  %2454 = vmatpush.bf16.msra.mxu0 %v804
  %2455 = vmatpush.bf16.msra.mxu0 %v803
  %2456 = vmatpush.bf16.msra.mxu0 %v802
  %2457 = vmatpush.bf16.msra.mxu0 %v801
  %2458 = vmatpush.bf16.msra.mxu0 %v800
  %2459 = vmatmul.bf16.gmra.mxu0 %v1615
  %v2460 = vpop.f32.mrf.mxu0
  %v2461 = vadd.f32 %v2392, %v2460
  %v2462 = vpop.f32.mrf.mxu0
  %v2463 = vadd.f32 %v2394, %v2462
  %2464 = vmatmul.bf16.gmra.mxu0 %v1630
  %v2465 = vpop.f32.mrf.mxu0
  %v2466 = vadd.f32 %v2397, %v2465
  %v2467 = vpop.f32.mrf.mxu0
  %v2468 = vadd.f32 %v2399, %v2467
  %2469 = vmatmul.bf16.gmra.mxu0 %v1645
  %v2470 = vpop.f32.mrf.mxu0
  %v2471 = vadd.f32 %v2402, %v2470
  %v2472 = vpop.f32.mrf.mxu0
  %v2473 = vadd.f32 %v2404, %v2472
  %2474 = vmatmul.bf16.gmra.mxu0 %v1660
  %v2475 = vpop.f32.mrf.mxu0
  %v2476 = vadd.f32 %v2407, %v2475
  %v2477 = vpop.f32.mrf.mxu0
  %v2478 = vadd.f32 %v2409, %v2477
  %2479 = vmatmul.bf16.gmra.mxu0 %v1675
  %v2480 = vpop.f32.mrf.mxu0
  %v2481 = vadd.f32 %v2412, %v2480
  %v2482 = vpop.f32.mrf.mxu0
  %v2483 = vadd.f32 %v2414, %v2482
  %2484 = vmatmul.bf16.gmra.mxu0 %v1690
  %v2485 = vpop.f32.mrf.mxu0
  %v2486 = vadd.f32 %v2417, %v2485
  %v2487 = vpop.f32.mrf.mxu0
  %v2488 = vadd.f32 %v2419, %v2487
  %2489 = vmatmul.bf16.gmra.mxu0 %v1705
  %v2490 = vpop.f32.mrf.mxu0
  %v2491 = vadd.f32 %v2422, %v2490
  %v2492 = vpop.f32.mrf.mxu0
  %v2493 = vadd.f32 %v2424, %v2492
  %2494 = vmatmul.bf16.gmra.mxu0 %v1720
  %v2495 = vpop.f32.mrf.mxu0
  %v2496 = vadd.f32 %v2427, %v2495
  %v2497 = vpop.f32.mrf.mxu0
  %v2498 = vadd.f32 %v2429, %v2497
  %2499 = vmatmul.bf16.gmra.mxu0 %v1735
  %v2500 = vpop.f32.mrf.mxu0
  %v2501 = vadd.f32 %v2432, %v2500
  %v2502 = vpop.f32.mrf.mxu0
  %v2503 = vadd.f32 %v2434, %v2502
  %2504 = vmatmul.bf16.gmra.mxu0 %v1750
  %v2505 = vpop.f32.mrf.mxu0
  %v2506 = vadd.f32 %v2437, %v2505
  %v2507 = vpop.f32.mrf.mxu0
  %v2508 = vadd.f32 %v2439, %v2507
  %2509 = vmatmul.bf16.gmra.mxu0 %v1765
  %v2510 = vpop.f32.mrf.mxu0
  %v2511 = vadd.f32 %v2442, %v2510
  %v2512 = vpop.f32.mrf.mxu0
  %v2513 = vadd.f32 %v2444, %v2512
  %2514 = vmatmul.bf16.gmra.mxu0 %v1780
  %v2515 = vpop.f32.mrf.mxu0
  %v2516 = vadd.f32 %v2447, %v2515
  %v2517 = vpop.f32.mrf.mxu0
  %v2518 = vadd.f32 %v2449, %v2517
  %2519 = vdwg.mxu0
  %2520 = vmatpush.bf16.msra.mxu0 %v815
  %2521 = vmatpush.bf16.msra.mxu0 %v814
  %2522 = vmatpush.bf16.msra.mxu0 %v813
  %2523 = vmatpush.bf16.msra.mxu0 %v812
  %2524 = vmatpush.bf16.msra.mxu0 %v811
  %2525 = vmatpush.bf16.msra.mxu0 %v810
  %2526 = vmatpush.bf16.msra.mxu0 %v809
  %2527 = vmatpush.bf16.msra.mxu0 %v808
  %2528 = vmatmul.bf16.gmra.mxu0 %v1616
  %v2529 = vpop.f32.mrf.mxu0
  %v2530 = vadd.f32 %v2461, %v2529
  %v2531 = vpop.f32.mrf.mxu0
  %v2532 = vadd.f32 %v2463, %v2531
  %2533 = vmatmul.bf16.gmra.mxu0 %v1631
  %v2534 = vpop.f32.mrf.mxu0
  %v2535 = vadd.f32 %v2466, %v2534
  %v2536 = vpop.f32.mrf.mxu0
  %v2537 = vadd.f32 %v2468, %v2536
  %2538 = vmatmul.bf16.gmra.mxu0 %v1646
  %v2539 = vpop.f32.mrf.mxu0
  %v2540 = vadd.f32 %v2471, %v2539
  %v2541 = vpop.f32.mrf.mxu0
  %v2542 = vadd.f32 %v2473, %v2541
  %2543 = vmatmul.bf16.gmra.mxu0 %v1661
  %v2544 = vpop.f32.mrf.mxu0
  %v2545 = vadd.f32 %v2476, %v2544
  %v2546 = vpop.f32.mrf.mxu0
  %v2547 = vadd.f32 %v2478, %v2546
  %2548 = vmatmul.bf16.gmra.mxu0 %v1676
  %v2549 = vpop.f32.mrf.mxu0
  %v2550 = vadd.f32 %v2481, %v2549
  %v2551 = vpop.f32.mrf.mxu0
  %v2552 = vadd.f32 %v2483, %v2551
  %2553 = vmatmul.bf16.gmra.mxu0 %v1691
  %v2554 = vpop.f32.mrf.mxu0
  %v2555 = vadd.f32 %v2486, %v2554
  %v2556 = vpop.f32.mrf.mxu0
  %v2557 = vadd.f32 %v2488, %v2556
  %2558 = vmatmul.bf16.gmra.mxu0 %v1706
  %v2559 = vpop.f32.mrf.mxu0
  %v2560 = vadd.f32 %v2491, %v2559
  %v2561 = vpop.f32.mrf.mxu0
  %v2562 = vadd.f32 %v2493, %v2561
  %2563 = vmatmul.bf16.gmra.mxu0 %v1721
  %v2564 = vpop.f32.mrf.mxu0
  %v2565 = vadd.f32 %v2496, %v2564
  %v2566 = vpop.f32.mrf.mxu0
  %v2567 = vadd.f32 %v2498, %v2566
  %2568 = vmatmul.bf16.gmra.mxu0 %v1736
  %v2569 = vpop.f32.mrf.mxu0
  %v2570 = vadd.f32 %v2501, %v2569
  %v2571 = vpop.f32.mrf.mxu0
  %v2572 = vadd.f32 %v2503, %v2571
  %2573 = vmatmul.bf16.gmra.mxu0 %v1751
  %v2574 = vpop.f32.mrf.mxu0
  %v2575 = vadd.f32 %v2506, %v2574
  %v2576 = vpop.f32.mrf.mxu0
  %v2577 = vadd.f32 %v2508, %v2576
  %2578 = vmatmul.bf16.gmra.mxu0 %v1766
  %v2579 = vpop.f32.mrf.mxu0
  %v2580 = vadd.f32 %v2511, %v2579
  %v2581 = vpop.f32.mrf.mxu0
  %v2582 = vadd.f32 %v2513, %v2581
  %2583 = vmatmul.bf16.gmra.mxu0 %v1781
  %v2584 = vpop.f32.mrf.mxu0
  %v2585 = vadd.f32 %v2516, %v2584
  %v2586 = vpop.f32.mrf.mxu0
  %v2587 = vadd.f32 %v2518, %v2586
  %2588 = vdwg.mxu0
  %2589 = vmatpush.bf16.msra.mxu0 %v823
  %2590 = vmatpush.bf16.msra.mxu0 %v822
  %2591 = vmatpush.bf16.msra.mxu0 %v821
  %2592 = vmatpush.bf16.msra.mxu0 %v820
  %2593 = vmatpush.bf16.msra.mxu0 %v819
  %2594 = vmatpush.bf16.msra.mxu0 %v818
  %2595 = vmatpush.bf16.msra.mxu0 %v817
  %2596 = vmatpush.bf16.msra.mxu0 %v816
  %2597 = vmatmul.bf16.gmra.mxu0 %v1617
  %v2598 = vpop.f32.mrf.mxu0
  %v2599 = vadd.f32 %v2530, %v2598
  %v2600 = vpop.f32.mrf.mxu0
  %v2601 = vadd.f32 %v2532, %v2600
  %2602 = vmatmul.bf16.gmra.mxu0 %v1632
  %v2603 = vpop.f32.mrf.mxu0
  %v2604 = vadd.f32 %v2535, %v2603
  %v2605 = vpop.f32.mrf.mxu0
  %v2606 = vadd.f32 %v2537, %v2605
  %2607 = vmatmul.bf16.gmra.mxu0 %v1647
  %v2608 = vpop.f32.mrf.mxu0
  %v2609 = vadd.f32 %v2540, %v2608
  %v2610 = vpop.f32.mrf.mxu0
  %v2611 = vadd.f32 %v2542, %v2610
  %2612 = vmatmul.bf16.gmra.mxu0 %v1662
  %v2613 = vpop.f32.mrf.mxu0
  %v2614 = vadd.f32 %v2545, %v2613
  %v2615 = vpop.f32.mrf.mxu0
  %v2616 = vadd.f32 %v2547, %v2615
  %2617 = vmatmul.bf16.gmra.mxu0 %v1677
  %v2618 = vpop.f32.mrf.mxu0
  %v2619 = vadd.f32 %v2550, %v2618
  %v2620 = vpop.f32.mrf.mxu0
  %v2621 = vadd.f32 %v2552, %v2620
  %2622 = vmatmul.bf16.gmra.mxu0 %v1692
  %v2623 = vpop.f32.mrf.mxu0
  %v2624 = vadd.f32 %v2555, %v2623
  %v2625 = vpop.f32.mrf.mxu0
  %v2626 = vadd.f32 %v2557, %v2625
  %2627 = vmatmul.bf16.gmra.mxu0 %v1707
  %v2628 = vpop.f32.mrf.mxu0
  %v2629 = vadd.f32 %v2560, %v2628
  %v2630 = vpop.f32.mrf.mxu0
  %v2631 = vadd.f32 %v2562, %v2630
  %2632 = vmatmul.bf16.gmra.mxu0 %v1722
  %v2633 = vpop.f32.mrf.mxu0
  %v2634 = vadd.f32 %v2565, %v2633
  %v2635 = vpop.f32.mrf.mxu0
  %v2636 = vadd.f32 %v2567, %v2635
  %2637 = vmatmul.bf16.gmra.mxu0 %v1737
  %v2638 = vpop.f32.mrf.mxu0
  %v2639 = vadd.f32 %v2570, %v2638
  %v2640 = vpop.f32.mrf.mxu0
  %v2641 = vadd.f32 %v2572, %v2640
  %2642 = vmatmul.bf16.gmra.mxu0 %v1752
  %v2643 = vpop.f32.mrf.mxu0
  %v2644 = vadd.f32 %v2575, %v2643
  %v2645 = vpop.f32.mrf.mxu0
  %v2646 = vadd.f32 %v2577, %v2645
  %2647 = vmatmul.bf16.gmra.mxu0 %v1767
  %v2648 = vpop.f32.mrf.mxu0
  %v2649 = vadd.f32 %v2580, %v2648
  %v2650 = vpop.f32.mrf.mxu0
  %v2651 = vadd.f32 %v2582, %v2650
  %2652 = vmatmul.bf16.gmra.mxu0 %v1782
  %v2653 = vpop.f32.mrf.mxu0
  %v2654 = vadd.f32 %v2585, %v2653
  %v2655 = vpop.f32.mrf.mxu0
  %v2656 = vadd.f32 %v2587, %v2655
  %2657 = vdwg.mxu0
  %2658 = vmatpush.bf16.msra.mxu0 %v831
  %2659 = vmatpush.bf16.msra.mxu0 %v830
  %2660 = vmatpush.bf16.msra.mxu0 %v829
  %2661 = vmatpush.bf16.msra.mxu0 %v828
  %2662 = vmatpush.bf16.msra.mxu0 %v827
  %2663 = vmatpush.bf16.msra.mxu0 %v826
  %2664 = vmatpush.bf16.msra.mxu0 %v825
  %2665 = vmatpush.bf16.msra.mxu0 %v824
  %2666 = vmatmul.bf16.gmra.mxu0 %v1618
  %v2667 = vpop.f32.mrf.mxu0
  %v2668 = vadd.f32 %v2599, %v2667
  %v2669 = vpop.f32.mrf.mxu0
  %v2670 = vadd.f32 %v2601, %v2669
  %2671 = vmatmul.bf16.gmra.mxu0 %v1633
  %v2672 = vpop.f32.mrf.mxu0
  %v2673 = vadd.f32 %v2604, %v2672
  %v2674 = vpop.f32.mrf.mxu0
  %v2675 = vadd.f32 %v2606, %v2674
  %2676 = vmatmul.bf16.gmra.mxu0 %v1648
  %v2677 = vpop.f32.mrf.mxu0
  %v2678 = vadd.f32 %v2609, %v2677
  %v2679 = vpop.f32.mrf.mxu0
  %v2680 = vadd.f32 %v2611, %v2679
  %2681 = vmatmul.bf16.gmra.mxu0 %v1663
  %v2682 = vpop.f32.mrf.mxu0
  %v2683 = vadd.f32 %v2614, %v2682
  %v2684 = vpop.f32.mrf.mxu0
  %v2685 = vadd.f32 %v2616, %v2684
  %2686 = vmatmul.bf16.gmra.mxu0 %v1678
  %v2687 = vpop.f32.mrf.mxu0
  %v2688 = vadd.f32 %v2619, %v2687
  %v2689 = vpop.f32.mrf.mxu0
  %v2690 = vadd.f32 %v2621, %v2689
  %2691 = vmatmul.bf16.gmra.mxu0 %v1693
  %v2692 = vpop.f32.mrf.mxu0
  %v2693 = vadd.f32 %v2624, %v2692
  %v2694 = vpop.f32.mrf.mxu0
  %v2695 = vadd.f32 %v2626, %v2694
  %2696 = vmatmul.bf16.gmra.mxu0 %v1708
  %v2697 = vpop.f32.mrf.mxu0
  %v2698 = vadd.f32 %v2629, %v2697
  %v2699 = vpop.f32.mrf.mxu0
  %v2700 = vadd.f32 %v2631, %v2699
  %2701 = vmatmul.bf16.gmra.mxu0 %v1723
  %v2702 = vpop.f32.mrf.mxu0
  %v2703 = vadd.f32 %v2634, %v2702
  %v2704 = vpop.f32.mrf.mxu0
  %v2705 = vadd.f32 %v2636, %v2704
  %2706 = vmatmul.bf16.gmra.mxu0 %v1738
  %v2707 = vpop.f32.mrf.mxu0
  %v2708 = vadd.f32 %v2639, %v2707
  %v2709 = vpop.f32.mrf.mxu0
  %v2710 = vadd.f32 %v2641, %v2709
  %2711 = vmatmul.bf16.gmra.mxu0 %v1753
  %v2712 = vpop.f32.mrf.mxu0
  %v2713 = vadd.f32 %v2644, %v2712
  %v2714 = vpop.f32.mrf.mxu0
  %v2715 = vadd.f32 %v2646, %v2714
  %2716 = vmatmul.bf16.gmra.mxu0 %v1768
  %v2717 = vpop.f32.mrf.mxu0
  %v2718 = vadd.f32 %v2649, %v2717
  %v2719 = vpop.f32.mrf.mxu0
  %v2720 = vadd.f32 %v2651, %v2719
  %2721 = vmatmul.bf16.gmra.mxu0 %v1783
  %v2722 = vpop.f32.mrf.mxu0
  %v2723 = vadd.f32 %v2654, %v2722
  %v2724 = vpop.f32.mrf.mxu0
  %v2725 = vadd.f32 %v2656, %v2724
  %2726 = vdwg.mxu0
  %2727 = vmatpush.bf16.msra.mxu0 %v839
  %2728 = vmatpush.bf16.msra.mxu0 %v838
  %2729 = vmatpush.bf16.msra.mxu0 %v837
  %2730 = vmatpush.bf16.msra.mxu0 %v836
  %2731 = vmatpush.bf16.msra.mxu0 %v835
  %2732 = vmatpush.bf16.msra.mxu0 %v834
  %2733 = vmatpush.bf16.msra.mxu0 %v833
  %2734 = vmatpush.bf16.msra.mxu0 %v832
  %2735 = vmatmul.bf16.gmra.mxu0 %v1619
  %v2736 = vpop.f32.mrf.mxu0
  %v2737 = vadd.f32 %v2668, %v2736
  %v2738 = vpop.f32.mrf.mxu0
  %v2739 = vadd.f32 %v2670, %v2738
  %2740 = vmatmul.bf16.gmra.mxu0 %v1634
  %v2741 = vpop.f32.mrf.mxu0
  %v2742 = vadd.f32 %v2673, %v2741
  %v2743 = vpop.f32.mrf.mxu0
  %v2744 = vadd.f32 %v2675, %v2743
  %2745 = vmatmul.bf16.gmra.mxu0 %v1649
  %v2746 = vpop.f32.mrf.mxu0
  %v2747 = vadd.f32 %v2678, %v2746
  %v2748 = vpop.f32.mrf.mxu0
  %v2749 = vadd.f32 %v2680, %v2748
  %2750 = vmatmul.bf16.gmra.mxu0 %v1664
  %v2751 = vpop.f32.mrf.mxu0
  %v2752 = vadd.f32 %v2683, %v2751
  %v2753 = vpop.f32.mrf.mxu0
  %v2754 = vadd.f32 %v2685, %v2753
  %2755 = vmatmul.bf16.gmra.mxu0 %v1679
  %v2756 = vpop.f32.mrf.mxu0
  %v2757 = vadd.f32 %v2688, %v2756
  %v2758 = vpop.f32.mrf.mxu0
  %v2759 = vadd.f32 %v2690, %v2758
  %2760 = vmatmul.bf16.gmra.mxu0 %v1694
  %v2761 = vpop.f32.mrf.mxu0
  %v2762 = vadd.f32 %v2693, %v2761
  %v2763 = vpop.f32.mrf.mxu0
  %v2764 = vadd.f32 %v2695, %v2763
  %2765 = vmatmul.bf16.gmra.mxu0 %v1709
  %v2766 = vpop.f32.mrf.mxu0
  %v2767 = vadd.f32 %v2698, %v2766
  %v2768 = vpop.f32.mrf.mxu0
  %v2769 = vadd.f32 %v2700, %v2768
  %2770 = vmatmul.bf16.gmra.mxu0 %v1724
  %v2771 = vpop.f32.mrf.mxu0
  %v2772 = vadd.f32 %v2703, %v2771
  %v2773 = vpop.f32.mrf.mxu0
  %v2774 = vadd.f32 %v2705, %v2773
  %2775 = vmatmul.bf16.gmra.mxu0 %v1739
  %v2776 = vpop.f32.mrf.mxu0
  %v2777 = vadd.f32 %v2708, %v2776
  %v2778 = vpop.f32.mrf.mxu0
  %v2779 = vadd.f32 %v2710, %v2778
  %2780 = vmatmul.bf16.gmra.mxu0 %v1754
  %v2781 = vpop.f32.mrf.mxu0
  %v2782 = vadd.f32 %v2713, %v2781
  %v2783 = vpop.f32.mrf.mxu0
  %v2784 = vadd.f32 %v2715, %v2783
  %2785 = vmatmul.bf16.gmra.mxu0 %v1769
  %v2786 = vpop.f32.mrf.mxu0
  %v2787 = vadd.f32 %v2718, %v2786
  %v2788 = vpop.f32.mrf.mxu0
  %v2789 = vadd.f32 %v2720, %v2788
  %2790 = vmatmul.bf16.gmra.mxu0 %v1784
  %v2791 = vpop.f32.mrf.mxu0
  %v2792 = vadd.f32 %v2723, %v2791
  %v2793 = vpop.f32.mrf.mxu0
  %v2794 = vadd.f32 %v2725, %v2793
  %2795 = vdwg.mxu0
  %2796 = vmatpush.bf16.msra.mxu0 %v847
  %2797 = vmatpush.bf16.msra.mxu0 %v846
  %2798 = vmatpush.bf16.msra.mxu0 %v845
  %2799 = vmatpush.bf16.msra.mxu0 %v844
  %2800 = vmatpush.bf16.msra.mxu0 %v843
  %2801 = vmatpush.bf16.msra.mxu0 %v842
  %2802 = vmatpush.bf16.msra.mxu0 %v841
  %2803 = vmatpush.bf16.msra.mxu0 %v840
  %2804 = vmatmul.bf16.gmra.mxu0 %v1620
  %v2805 = vpop.f32.mrf.mxu0
  %v2806 = vadd.f32 %v2737, %v2805
  %v2807 = vpop.f32.mrf.mxu0
  %v2808 = vadd.f32 %v2739, %v2807
  %2809 = vmatmul.bf16.gmra.mxu0 %v1635
  %v2810 = vpop.f32.mrf.mxu0
  %v2811 = vadd.f32 %v2742, %v2810
  %v2812 = vpop.f32.mrf.mxu0
  %v2813 = vadd.f32 %v2744, %v2812
  %2814 = vmatmul.bf16.gmra.mxu0 %v1650
  %v2815 = vpop.f32.mrf.mxu0
  %v2816 = vadd.f32 %v2747, %v2815
  %v2817 = vpop.f32.mrf.mxu0
  %v2818 = vadd.f32 %v2749, %v2817
  %2819 = vmatmul.bf16.gmra.mxu0 %v1665
  %v2820 = vpop.f32.mrf.mxu0
  %v2821 = vadd.f32 %v2752, %v2820
  %v2822 = vpop.f32.mrf.mxu0
  %v2823 = vadd.f32 %v2754, %v2822
  %2824 = vmatmul.bf16.gmra.mxu0 %v1680
  %v2825 = vpop.f32.mrf.mxu0
  %v2826 = vadd.f32 %v2757, %v2825
  %v2827 = vpop.f32.mrf.mxu0
  %v2828 = vadd.f32 %v2759, %v2827
  %2829 = vmatmul.bf16.gmra.mxu0 %v1695
  %v2830 = vpop.f32.mrf.mxu0
  %v2831 = vadd.f32 %v2762, %v2830
  %v2832 = vpop.f32.mrf.mxu0
  %v2833 = vadd.f32 %v2764, %v2832
  %2834 = vmatmul.bf16.gmra.mxu0 %v1710
  %v2835 = vpop.f32.mrf.mxu0
  %v2836 = vadd.f32 %v2767, %v2835
  %v2837 = vpop.f32.mrf.mxu0
  %v2838 = vadd.f32 %v2769, %v2837
  %2839 = vmatmul.bf16.gmra.mxu0 %v1725
  %v2840 = vpop.f32.mrf.mxu0
  %v2841 = vadd.f32 %v2772, %v2840
  %v2842 = vpop.f32.mrf.mxu0
  %v2843 = vadd.f32 %v2774, %v2842
  %2844 = vmatmul.bf16.gmra.mxu0 %v1740
  %v2845 = vpop.f32.mrf.mxu0
  %v2846 = vadd.f32 %v2777, %v2845
  %v2847 = vpop.f32.mrf.mxu0
  %v2848 = vadd.f32 %v2779, %v2847
  %2849 = vmatmul.bf16.gmra.mxu0 %v1755
  %v2850 = vpop.f32.mrf.mxu0
  %v2851 = vadd.f32 %v2782, %v2850
  %v2852 = vpop.f32.mrf.mxu0
  %v2853 = vadd.f32 %v2784, %v2852
  %2854 = vmatmul.bf16.gmra.mxu0 %v1770
  %v2855 = vpop.f32.mrf.mxu0
  %v2856 = vadd.f32 %v2787, %v2855
  %v2857 = vpop.f32.mrf.mxu0
  %v2858 = vadd.f32 %v2789, %v2857
  %2859 = vmatmul.bf16.gmra.mxu0 %v1785
  %v2860 = vpop.f32.mrf.mxu0
  %v2861 = vadd.f32 %v2792, %v2860
  %v2862 = vpop.f32.mrf.mxu0
  %v2863 = vadd.f32 %v2794, %v2862
  %2864 = vdwg.mxu0
  %2865 = vmatpush.bf16.msra.mxu0 %v855
  %2866 = vmatpush.bf16.msra.mxu0 %v854
  %2867 = vmatpush.bf16.msra.mxu0 %v853
  %2868 = vmatpush.bf16.msra.mxu0 %v852
  %2869 = vmatpush.bf16.msra.mxu0 %v851
  %2870 = vmatpush.bf16.msra.mxu0 %v850
  %2871 = vmatpush.bf16.msra.mxu0 %v849
  %2872 = vmatpush.bf16.msra.mxu0 %v848
  %2873 = vmatmul.bf16.gmra.mxu0 %v1621
  %v2874 = vpop.f32.mrf.mxu0
  %v2875 = vadd.f32 %v2806, %v2874
  %v2876 = vpop.f32.mrf.mxu0
  %v2877 = vadd.f32 %v2808, %v2876
  %2878 = vmatmul.bf16.gmra.mxu0 %v1636
  %v2879 = vpop.f32.mrf.mxu0
  %v2880 = vadd.f32 %v2811, %v2879
  %v2881 = vpop.f32.mrf.mxu0
  %v2882 = vadd.f32 %v2813, %v2881
  %2883 = vmatmul.bf16.gmra.mxu0 %v1651
  %v2884 = vpop.f32.mrf.mxu0
  %v2885 = vadd.f32 %v2816, %v2884
  %v2886 = vpop.f32.mrf.mxu0
  %v2887 = vadd.f32 %v2818, %v2886
  %2888 = vmatmul.bf16.gmra.mxu0 %v1666
  %v2889 = vpop.f32.mrf.mxu0
  %v2890 = vadd.f32 %v2821, %v2889
  %v2891 = vpop.f32.mrf.mxu0
  %v2892 = vadd.f32 %v2823, %v2891
  %2893 = vmatmul.bf16.gmra.mxu0 %v1681
  %v2894 = vpop.f32.mrf.mxu0
  %v2895 = vadd.f32 %v2826, %v2894
  %v2896 = vpop.f32.mrf.mxu0
  %v2897 = vadd.f32 %v2828, %v2896
  %2898 = vmatmul.bf16.gmra.mxu0 %v1696
  %v2899 = vpop.f32.mrf.mxu0
  %v2900 = vadd.f32 %v2831, %v2899
  %v2901 = vpop.f32.mrf.mxu0
  %v2902 = vadd.f32 %v2833, %v2901
  %2903 = vmatmul.bf16.gmra.mxu0 %v1711
  %v2904 = vpop.f32.mrf.mxu0
  %v2905 = vadd.f32 %v2836, %v2904
  %v2906 = vpop.f32.mrf.mxu0
  %v2907 = vadd.f32 %v2838, %v2906
  %2908 = vmatmul.bf16.gmra.mxu0 %v1726
  %v2909 = vpop.f32.mrf.mxu0
  %v2910 = vadd.f32 %v2841, %v2909
  %v2911 = vpop.f32.mrf.mxu0
  %v2912 = vadd.f32 %v2843, %v2911
  %2913 = vmatmul.bf16.gmra.mxu0 %v1741
  %v2914 = vpop.f32.mrf.mxu0
  %v2915 = vadd.f32 %v2846, %v2914
  %v2916 = vpop.f32.mrf.mxu0
  %v2917 = vadd.f32 %v2848, %v2916
  %2918 = vmatmul.bf16.gmra.mxu0 %v1756
  %v2919 = vpop.f32.mrf.mxu0
  %v2920 = vadd.f32 %v2851, %v2919
  %v2921 = vpop.f32.mrf.mxu0
  %v2922 = vadd.f32 %v2853, %v2921
  %2923 = vmatmul.bf16.gmra.mxu0 %v1771
  %v2924 = vpop.f32.mrf.mxu0
  %v2925 = vadd.f32 %v2856, %v2924
  %v2926 = vpop.f32.mrf.mxu0
  %v2927 = vadd.f32 %v2858, %v2926
  %2928 = vmatmul.bf16.gmra.mxu0 %v1786
  %v2929 = vpop.f32.mrf.mxu0
  %v2930 = vadd.f32 %v2861, %v2929
  %v2931 = vpop.f32.mrf.mxu0
  %v2932 = vadd.f32 %v2863, %v2931
  %2933 = vdwg.mxu0
  %2934 = vmatpush.bf16.msra.mxu0 %v863
  %2935 = vmatpush.bf16.msra.mxu0 %v862
  %2936 = vmatpush.bf16.msra.mxu0 %v861
  %2937 = vmatpush.bf16.msra.mxu0 %v860
  %2938 = vmatpush.bf16.msra.mxu0 %v859
  %2939 = vmatpush.bf16.msra.mxu0 %v858
  %2940 = vmatpush.bf16.msra.mxu0 %v857
  %2941 = vmatpush.bf16.msra.mxu0 %v856
  %2942 = vmatmul.bf16.gmra.mxu0 %v1622
  %v2943 = vpop.f32.mrf.mxu0
  %v2944 = vadd.f32 %v2875, %v2943
  %v2945 = vpop.f32.mrf.mxu0
  %v2946 = vadd.f32 %v2877, %v2945
  %2947 = vmatmul.bf16.gmra.mxu0 %v1637
  %v2948 = vpop.f32.mrf.mxu0
  %v2949 = vadd.f32 %v2880, %v2948
  %v2950 = vpop.f32.mrf.mxu0
  %v2951 = vadd.f32 %v2882, %v2950
  %2952 = vmatmul.bf16.gmra.mxu0 %v1652
  %v2953 = vpop.f32.mrf.mxu0
  %v2954 = vadd.f32 %v2885, %v2953
  %v2955 = vpop.f32.mrf.mxu0
  %v2956 = vadd.f32 %v2887, %v2955
  %2957 = vmatmul.bf16.gmra.mxu0 %v1667
  %v2958 = vpop.f32.mrf.mxu0
  %v2959 = vadd.f32 %v2890, %v2958
  %v2960 = vpop.f32.mrf.mxu0
  %v2961 = vadd.f32 %v2892, %v2960
  %2962 = vmatmul.bf16.gmra.mxu0 %v1682
  %v2963 = vpop.f32.mrf.mxu0
  %v2964 = vadd.f32 %v2895, %v2963
  %v2965 = vpop.f32.mrf.mxu0
  %v2966 = vadd.f32 %v2897, %v2965
  %2967 = vmatmul.bf16.gmra.mxu0 %v1697
  %v2968 = vpop.f32.mrf.mxu0
  %v2969 = vadd.f32 %v2900, %v2968
  %v2970 = vpop.f32.mrf.mxu0
  %v2971 = vadd.f32 %v2902, %v2970
  %2972 = vmatmul.bf16.gmra.mxu0 %v1712
  %v2973 = vpop.f32.mrf.mxu0
  %v2974 = vadd.f32 %v2905, %v2973
  %v2975 = vpop.f32.mrf.mxu0
  %v2976 = vadd.f32 %v2907, %v2975
  %2977 = vmatmul.bf16.gmra.mxu0 %v1727
  %v2978 = vpop.f32.mrf.mxu0
  %v2979 = vadd.f32 %v2910, %v2978
  %v2980 = vpop.f32.mrf.mxu0
  %v2981 = vadd.f32 %v2912, %v2980
  %2982 = vmatmul.bf16.gmra.mxu0 %v1742
  %v2983 = vpop.f32.mrf.mxu0
  %v2984 = vadd.f32 %v2915, %v2983
  %v2985 = vpop.f32.mrf.mxu0
  %v2986 = vadd.f32 %v2917, %v2985
  %2987 = vmatmul.bf16.gmra.mxu0 %v1757
  %v2988 = vpop.f32.mrf.mxu0
  %v2989 = vadd.f32 %v2920, %v2988
  %v2990 = vpop.f32.mrf.mxu0
  %v2991 = vadd.f32 %v2922, %v2990
  %2992 = vmatmul.bf16.gmra.mxu0 %v1772
  %v2993 = vpop.f32.mrf.mxu0
  %v2994 = vadd.f32 %v2925, %v2993
  %v2995 = vpop.f32.mrf.mxu0
  %v2996 = vadd.f32 %v2927, %v2995
  %2997 = vmatmul.bf16.gmra.mxu0 %v1787
  %v2998 = vpop.f32.mrf.mxu0
  %v2999 = vadd.f32 %v2930, %v2998
  %v3000 = vpop.f32.mrf.mxu0
  %v3001 = vadd.f32 %v2932, %v3000
  %3002 = vdwg.mxu0
  %vm3003 = vcmask 400384
  %v3004 = vsel %vm3003, %v2944, 0.0
  %3005 = vadd.xlane.f32.xlu0 %v3004
  %v3006 = vpop.xlane.xlu0 %3005
  %v3007 = vsel %vm3003, %v2946, 0.0
  %3008 = vadd.xlane.f32.xlu0 %v3007
  %v3009 = vpop.xlane.xlu0 %3008
  %v3010 = vsel %vm3003, %v2949, 0.0
  %3011 = vadd.xlane.f32.xlu0 %v3010
  %v3012 = vpop.xlane.xlu0 %3011
  %v3013 = vsel %vm3003, %v2951, 0.0
  %3014 = vadd.xlane.f32.xlu0 %v3013
  %v3015 = vpop.xlane.xlu0 %3014
  %v3016 = vsel %vm3003, %v2954, 0.0
  %3017 = vadd.xlane.f32.xlu0 %v3016
  %v3018 = vpop.xlane.xlu0 %3017
  %v3019 = vsel %vm3003, %v2956, 0.0
  %3020 = vadd.xlane.f32.xlu0 %v3019
  %v3021 = vpop.xlane.xlu0 %3020
  %v3022 = vsel %vm3003, %v2959, 0.0
  %3023 = vadd.xlane.f32.xlu0 %v3022
  %v3024 = vpop.xlane.xlu0 %3023
  %v3025 = vsel %vm3003, %v2961, 0.0
  %3026 = vadd.xlane.f32.xlu0 %v3025
  %v3027 = vpop.xlane.xlu0 %3026
  %v3028 = vsel %vm3003, %v2964, 0.0
  %3029 = vadd.xlane.f32.xlu0 %v3028
  %v3030 = vpop.xlane.xlu0 %3029
  %v3031 = vsel %vm3003, %v2966, 0.0
  %3032 = vadd.xlane.f32.xlu0 %v3031
  %v3033 = vpop.xlane.xlu0 %3032
  %v3034 = vsel %vm3003, %v2969, 0.0
  %3035 = vadd.xlane.f32.xlu0 %v3034
  %v3036 = vpop.xlane.xlu0 %3035
  %v3037 = vsel %vm3003, %v2971, 0.0
  %3038 = vadd.xlane.f32.xlu0 %v3037
  %v3039 = vpop.xlane.xlu0 %3038
  %v3040 = vsel %vm3003, %v2974, 0.0
  %3041 = vadd.xlane.f32.xlu0 %v3040
  %v3042 = vpop.xlane.xlu0 %3041
  %v3043 = vsel %vm3003, %v2976, 0.0
  %3044 = vadd.xlane.f32.xlu0 %v3043
  %v3045 = vpop.xlane.xlu0 %3044
  %v3046 = vsel %vm3003, %v2979, 0.0
  %3047 = vadd.xlane.f32.xlu0 %v3046
  %v3048 = vpop.xlane.xlu0 %3047
  %v3049 = vsel %vm3003, %v2981, 0.0
  %3050 = vadd.xlane.f32.xlu0 %v3049
  %v3051 = vpop.xlane.xlu0 %3050
  %v3052 = vsel %vm3003, %v2984, 0.0
  %3053 = vadd.xlane.f32.xlu0 %v3052
  %v3054 = vpop.xlane.xlu0 %3053
  %v3055 = vsel %vm3003, %v2986, 0.0
  %3056 = vadd.xlane.f32.xlu0 %v3055
  %v3057 = vpop.xlane.xlu0 %3056
  %v3058 = vsel %vm3003, %v2989, 0.0
  %3059 = vadd.xlane.f32.xlu0 %v3058
  %v3060 = vpop.xlane.xlu0 %3059
  %v3061 = vsel %vm3003, %v2991, 0.0
  %3062 = vadd.xlane.f32.xlu0 %v3061
  %v3063 = vpop.xlane.xlu0 %3062
  %v3064 = vsel %vm3003, %v2994, 0.0
  %3065 = vadd.xlane.f32.xlu0 %v3064
  %v3066 = vpop.xlane.xlu0 %3065
  %v3067 = vsel %vm3003, %v2996, 0.0
  %3068 = vadd.xlane.f32.xlu0 %v3067
  %v3069 = vpop.xlane.xlu0 %3068
  %v3070 = vsel %vm3003, %v2999, 0.0
  %3071 = vadd.xlane.f32.xlu0 %v3070
  %v3072 = vpop.xlane.xlu0 %3071
  %v3073 = vsel %vm3003, %v3001, 0.0
  %3074 = vadd.xlane.f32.xlu0 %v3073
  %v3075 = vpop.xlane.xlu0 %3074
  %v3076 = vmul.f32 %v3006, 0.020408163
  %v3077 = vmul.f32 %v3009, 0.020408163
  %v3078 = vmul.f32 %v3012, 0.020408163
  %v3079 = vmul.f32 %v3015, 0.020408163
  %v3080 = vmul.f32 %v3018, 0.020408163
  %v3081 = vmul.f32 %v3021, 0.020408163
  %v3082 = vmul.f32 %v3024, 0.020408163
  %v3083 = vmul.f32 %v3027, 0.020408163
  %v3084 = vmul.f32 %v3030, 0.020408163
  %v3085 = vmul.f32 %v3033, 0.020408163
  %v3086 = vmul.f32 %v3036, 0.020408163
  %v3087 = vmul.f32 %v3039, 0.020408163
  %v3088 = vmul.f32 %v3042, 0.020408163
  %v3089 = vmul.f32 %v3045, 0.020408163
  %v3090 = vmul.f32 %v3048, 0.020408163
  %v3091 = vmul.f32 %v3051, 0.020408163
  %v3092 = vmul.f32 %v3054, 0.020408163
  %v3093 = vmul.f32 %v3057, 0.020408163
  %v3094 = vmul.f32 %v3060, 0.020408163
  %v3095 = vmul.f32 %v3063, 0.020408163
  %v3096 = vmul.f32 %v3066, 0.020408163
  %v3097 = vmul.f32 %v3069, 0.020408163
  %v3098 = vmul.f32 %v3072, 0.020408163
  %v3099 = vmul.f32 %v3075, 0.020408163
  %v3100 = vmul.f32 %v2944, %v2944
  %v3101 = vmul.f32 %v2946, %v2946
  %v3102 = vmul.f32 %v2949, %v2949
  %v3103 = vmul.f32 %v2951, %v2951
  %v3104 = vmul.f32 %v2954, %v2954
  %v3105 = vmul.f32 %v2956, %v2956
  %v3106 = vmul.f32 %v2959, %v2959
  %v3107 = vmul.f32 %v2961, %v2961
  %v3108 = vmul.f32 %v2964, %v2964
  %v3109 = vmul.f32 %v2966, %v2966
  %v3110 = vmul.f32 %v2969, %v2969
  %v3111 = vmul.f32 %v2971, %v2971
  %v3112 = vmul.f32 %v2974, %v2974
  %v3113 = vmul.f32 %v2976, %v2976
  %v3114 = vmul.f32 %v2979, %v2979
  %v3115 = vmul.f32 %v2981, %v2981
  %v3116 = vmul.f32 %v2984, %v2984
  %v3117 = vmul.f32 %v2986, %v2986
  %v3118 = vmul.f32 %v2989, %v2989
  %v3119 = vmul.f32 %v2991, %v2991
  %v3120 = vmul.f32 %v2994, %v2994
  %v3121 = vmul.f32 %v2996, %v2996
  %v3122 = vmul.f32 %v2999, %v2999
  %v3123 = vmul.f32 %v3001, %v3001
  %v3124 = vsel %vm3003, %v3100, 0.0
  %3125 = vadd.xlane.f32.xlu0 %v3124
  %v3126 = vpop.xlane.xlu0 %3125
  %v3127 = vsel %vm3003, %v3101, 0.0
  %3128 = vadd.xlane.f32.xlu0 %v3127
  %v3129 = vpop.xlane.xlu0 %3128
  %v3130 = vsel %vm3003, %v3102, 0.0
  %3131 = vadd.xlane.f32.xlu0 %v3130
  %v3132 = vpop.xlane.xlu0 %3131
  %v3133 = vsel %vm3003, %v3103, 0.0
  %3134 = vadd.xlane.f32.xlu0 %v3133
  %v3135 = vpop.xlane.xlu0 %3134
  %v3136 = vsel %vm3003, %v3104, 0.0
  %3137 = vadd.xlane.f32.xlu0 %v3136
  %v3138 = vpop.xlane.xlu0 %3137
  %v3139 = vsel %vm3003, %v3105, 0.0
  %3140 = vadd.xlane.f32.xlu0 %v3139
  %v3141 = vpop.xlane.xlu0 %3140
  %v3142 = vsel %vm3003, %v3106, 0.0
  %3143 = vadd.xlane.f32.xlu0 %v3142
  %v3144 = vpop.xlane.xlu0 %3143
  %v3145 = vsel %vm3003, %v3107, 0.0
  %3146 = vadd.xlane.f32.xlu0 %v3145
  %v3147 = vpop.xlane.xlu0 %3146
  %v3148 = vsel %vm3003, %v3108, 0.0
  %3149 = vadd.xlane.f32.xlu0 %v3148
  %v3150 = vpop.xlane.xlu0 %3149
  %v3151 = vsel %vm3003, %v3109, 0.0
  %3152 = vadd.xlane.f32.xlu0 %v3151
  %v3153 = vpop.xlane.xlu0 %3152
  %v3154 = vsel %vm3003, %v3110, 0.0
  %3155 = vadd.xlane.f32.xlu0 %v3154
  %v3156 = vpop.xlane.xlu0 %3155
  %v3157 = vsel %vm3003, %v3111, 0.0
  %3158 = vadd.xlane.f32.xlu0 %v3157
  %v3159 = vpop.xlane.xlu0 %3158
  %v3160 = vsel %vm3003, %v3112, 0.0
  %3161 = vadd.xlane.f32.xlu0 %v3160
  %v3162 = vpop.xlane.xlu0 %3161
  %v3163 = vsel %vm3003, %v3113, 0.0
  %3164 = vadd.xlane.f32.xlu0 %v3163
  %v3165 = vpop.xlane.xlu0 %3164
  %v3166 = vsel %vm3003, %v3114, 0.0
  %3167 = vadd.xlane.f32.xlu0 %v3166
  %v3168 = vpop.xlane.xlu0 %3167
  %v3169 = vsel %vm3003, %v3115, 0.0
  %3170 = vadd.xlane.f32.xlu0 %v3169
  %v3171 = vpop.xlane.xlu0 %3170
  %v3172 = vsel %vm3003, %v3116, 0.0
  %3173 = vadd.xlane.f32.xlu0 %v3172
  %v3174 = vpop.xlane.xlu0 %3173
  %v3175 = vsel %vm3003, %v3117, 0.0
  %3176 = vadd.xlane.f32.xlu0 %v3175
  %v3177 = vpop.xlane.xlu0 %3176
  %v3178 = vsel %vm3003, %v3118, 0.0
  %3179 = vadd.xlane.f32.xlu0 %v3178
  %v3180 = vpop.xlane.xlu0 %3179
  %v3181 = vsel %vm3003, %v3119, 0.0
  %3182 = vadd.xlane.f32.xlu0 %v3181
  %v3183 = vpop.xlane.xlu0 %3182
  %v3184 = vsel %vm3003, %v3120, 0.0
  %3185 = vadd.xlane.f32.xlu0 %v3184
  %v3186 = vpop.xlane.xlu0 %3185
  %v3187 = vsel %vm3003, %v3121, 0.0
  %3188 = vadd.xlane.f32.xlu0 %v3187
  %v3189 = vpop.xlane.xlu0 %3188
  %v3190 = vsel %vm3003, %v3122, 0.0
  %3191 = vadd.xlane.f32.xlu0 %v3190
  %v3192 = vpop.xlane.xlu0 %3191
  %v3193 = vsel %vm3003, %v3123, 0.0
  %3194 = vadd.xlane.f32.xlu0 %v3193
  %v3195 = vpop.xlane.xlu0 %3194
  %v3196 = vmul.f32 %v3126, 0.020408163
  %v3197 = vmul.f32 %v3129, 0.020408163
  %v3198 = vmul.f32 %v3132, 0.020408163
  %v3199 = vmul.f32 %v3135, 0.020408163
  %v3200 = vmul.f32 %v3138, 0.020408163
  %v3201 = vmul.f32 %v3141, 0.020408163
  %v3202 = vmul.f32 %v3144, 0.020408163
  %v3203 = vmul.f32 %v3147, 0.020408163
  %v3204 = vmul.f32 %v3150, 0.020408163
  %v3205 = vmul.f32 %v3153, 0.020408163
  %v3206 = vmul.f32 %v3156, 0.020408163
  %v3207 = vmul.f32 %v3159, 0.020408163
  %v3208 = vmul.f32 %v3162, 0.020408163
  %v3209 = vmul.f32 %v3165, 0.020408163
  %v3210 = vmul.f32 %v3168, 0.020408163
  %v3211 = vmul.f32 %v3171, 0.020408163
  %v3212 = vmul.f32 %v3174, 0.020408163
  %v3213 = vmul.f32 %v3177, 0.020408163
  %v3214 = vmul.f32 %v3180, 0.020408163
  %v3215 = vmul.f32 %v3183, 0.020408163
  %v3216 = vmul.f32 %v3186, 0.020408163
  %v3217 = vmul.f32 %v3189, 0.020408163
  %v3218 = vmul.f32 %v3192, 0.020408163
  %v3219 = vmul.f32 %v3195, 0.020408163
  %v3220 = vmul.f32 %v3076, %v3076
  %v3221 = vmul.f32 %v3077, %v3077
  %v3222 = vmul.f32 %v3078, %v3078
  %v3223 = vmul.f32 %v3079, %v3079
  %v3224 = vmul.f32 %v3080, %v3080
  %v3225 = vmul.f32 %v3081, %v3081
  %v3226 = vmul.f32 %v3082, %v3082
  %v3227 = vmul.f32 %v3083, %v3083
  %v3228 = vmul.f32 %v3084, %v3084
  %v3229 = vmul.f32 %v3085, %v3085
  %v3230 = vmul.f32 %v3086, %v3086
  %v3231 = vmul.f32 %v3087, %v3087
  %v3232 = vmul.f32 %v3088, %v3088
  %v3233 = vmul.f32 %v3089, %v3089
  %v3234 = vmul.f32 %v3090, %v3090
  %v3235 = vmul.f32 %v3091, %v3091
  %v3236 = vmul.f32 %v3092, %v3092
  %v3237 = vmul.f32 %v3093, %v3093
  %v3238 = vmul.f32 %v3094, %v3094
  %v3239 = vmul.f32 %v3095, %v3095
  %v3240 = vmul.f32 %v3096, %v3096
  %v3241 = vmul.f32 %v3097, %v3097
  %v3242 = vmul.f32 %v3098, %v3098
  %v3243 = vmul.f32 %v3099, %v3099
  %v3244 = vsub.f32 %v3196, %v3220
  %v3245 = vsub.f32 %v3197, %v3221
  %v3246 = vsub.f32 %v3198, %v3222
  %v3247 = vsub.f32 %v3199, %v3223
  %v3248 = vsub.f32 %v3200, %v3224
  %v3249 = vsub.f32 %v3201, %v3225
  %v3250 = vsub.f32 %v3202, %v3226
  %v3251 = vsub.f32 %v3203, %v3227
  %v3252 = vsub.f32 %v3204, %v3228
  %v3253 = vsub.f32 %v3205, %v3229
  %v3254 = vsub.f32 %v3206, %v3230
  %v3255 = vsub.f32 %v3207, %v3231
  %v3256 = vsub.f32 %v3208, %v3232
  %v3257 = vsub.f32 %v3209, %v3233
  %v3258 = vsub.f32 %v3210, %v3234
  %v3259 = vsub.f32 %v3211, %v3235
  %v3260 = vsub.f32 %v3212, %v3236
  %v3261 = vsub.f32 %v3213, %v3237
  %v3262 = vsub.f32 %v3214, %v3238
  %v3263 = vsub.f32 %v3215, %v3239
  %v3264 = vsub.f32 %v3216, %v3240
  %v3265 = vsub.f32 %v3217, %v3241
  %v3266 = vsub.f32 %v3218, %v3242
  %v3267 = vsub.f32 %v3219, %v3243
  %v3268 = vld [vmem:[%s2] sm:$0xff]
  %v3269 = vld [vmem:[%s2 + $0x8] sm:$0xff]
  %v3270 = vld [vmem:[%s2 + $0x10] sm:$0xff]
  %v3271 = vld [vmem:[%s2 + $0x18] sm:$0xff]
  %v3272 = vld [vmem:[%s2 + $0x20] sm:$0xff]
  %v3273 = vld [vmem:[%s2 + $0x28] sm:$0xff]
  %v3274 = vld [vmem:[%s2 + $0x30] sm:$0xff]
  %v3275 = vld [vmem:[%s2 + $0x38] sm:$0xff]
  %v3276 = vld [vmem:[%s2 + $0x40] sm:$0xff]
  %v3277 = vld [vmem:[%s2 + $0x48] sm:$0xff]
  %v3278 = vld [vmem:[%s2 + $0x50] sm:$0xff]
  %v3279 = vld [vmem:[%s2 + $0x58] sm:$0xff]
  %v3280 = vld [vmem:[%s2 + $0x60] sm:$0xff]
  %v3281 = vld [vmem:[%s2 + $0x68] sm:$0xff]
  %v3282 = vld [vmem:[%s2 + $0x70] sm:$0xff]
  %v3283 = vld [vmem:[%s2 + $0x78] sm:$0xff]
  %v3284 = vld [vmem:[%s2 + $0x80] sm:$0xff]
  %v3285 = vld [vmem:[%s2 + $0x88] sm:$0xff]
  %v3286 = vld [vmem:[%s2 + $0x90] sm:$0xff]
  %v3287 = vld [vmem:[%s2 + $0x98] sm:$0xff]
  %v3288 = vld [vmem:[%s2 + $0xa0] sm:$0xff]
  %v3289 = vld [vmem:[%s2 + $0xa8] sm:$0xff]
  %v3290 = vld [vmem:[%s2 + $0xb0] sm:$0xff]
  %v3291 = vld [vmem:[%s2 + $0xb8] sm:$0xff]
  %v3292 = vadd.f32 %v3244, 1e-05
  %v3293 = vadd.f32 %v3245, 1e-05
  %v3294 = vadd.f32 %v3246, 1e-05
  %v3295 = vadd.f32 %v3247, 1e-05
  %v3296 = vadd.f32 %v3248, 1e-05
  %v3297 = vadd.f32 %v3249, 1e-05
  %v3298 = vadd.f32 %v3250, 1e-05
  %v3299 = vadd.f32 %v3251, 1e-05
  %v3300 = vadd.f32 %v3252, 1e-05
  %v3301 = vadd.f32 %v3253, 1e-05
  %v3302 = vadd.f32 %v3254, 1e-05
  %v3303 = vadd.f32 %v3255, 1e-05
  %v3304 = vadd.f32 %v3256, 1e-05
  %v3305 = vadd.f32 %v3257, 1e-05
  %v3306 = vadd.f32 %v3258, 1e-05
  %v3307 = vadd.f32 %v3259, 1e-05
  %v3308 = vadd.f32 %v3260, 1e-05
  %v3309 = vadd.f32 %v3261, 1e-05
  %v3310 = vadd.f32 %v3262, 1e-05
  %v3311 = vadd.f32 %v3263, 1e-05
  %v3312 = vadd.f32 %v3264, 1e-05
  %v3313 = vadd.f32 %v3265, 1e-05
  %v3314 = vadd.f32 %v3266, 1e-05
  %v3315 = vadd.f32 %v3267, 1e-05
  %v3316 = vrsqrt.pop %v3292
  %v3317 = vmul.f32 %v3316, %v3292
  %v3318 = vmul.f32 %v3317, %v3316
  %v3319 = vmul.f32 0.5, %v3318
  %v3320 = vsub.f32 1.5, %v3319
  %v3321 = vmul.f32 %v3316, %v3320
  %vm3322 = vweird.f32 %v3292
  %vm3323 = vweird.f32 %v3316
  %vm3324 = vmor %vm3322, %vm3323
  %v3325 = vsel %vm3324, %v3316, %v3321
  %v3326 = vrsqrt.pop %v3293
  %v3327 = vmul.f32 %v3326, %v3293
  %v3328 = vmul.f32 %v3327, %v3326
  %v3329 = vmul.f32 0.5, %v3328
  %v3330 = vsub.f32 1.5, %v3329
  %v3331 = vmul.f32 %v3326, %v3330
  %vm3332 = vweird.f32 %v3293
  %vm3333 = vweird.f32 %v3326
  %vm3334 = vmor %vm3332, %vm3333
  %v3335 = vsel %vm3334, %v3326, %v3331
  %v3336 = vrsqrt.pop %v3294
  %v3337 = vmul.f32 %v3336, %v3294
  %v3338 = vmul.f32 %v3337, %v3336
  %v3339 = vmul.f32 0.5, %v3338
  %v3340 = vsub.f32 1.5, %v3339
  %v3341 = vmul.f32 %v3336, %v3340
  %vm3342 = vweird.f32 %v3294
  %vm3343 = vweird.f32 %v3336
  %vm3344 = vmor %vm3342, %vm3343
  %v3345 = vsel %vm3344, %v3336, %v3341
  %v3346 = vrsqrt.pop %v3295
  %v3347 = vmul.f32 %v3346, %v3295
  %v3348 = vmul.f32 %v3347, %v3346
  %v3349 = vmul.f32 0.5, %v3348
  %v3350 = vsub.f32 1.5, %v3349
  %v3351 = vmul.f32 %v3346, %v3350
  %vm3352 = vweird.f32 %v3295
  %vm3353 = vweird.f32 %v3346
  %vm3354 = vmor %vm3352, %vm3353
  %v3355 = vsel %vm3354, %v3346, %v3351
  %v3356 = vrsqrt.pop %v3296
  %v3357 = vmul.f32 %v3356, %v3296
  %v3358 = vmul.f32 %v3357, %v3356
  %v3359 = vmul.f32 0.5, %v3358
  %v3360 = vsub.f32 1.5, %v3359
  %v3361 = vmul.f32 %v3356, %v3360
  %vm3362 = vweird.f32 %v3296
  %vm3363 = vweird.f32 %v3356
  %vm3364 = vmor %vm3362, %vm3363
  %v3365 = vsel %vm3364, %v3356, %v3361
  %v3366 = vrsqrt.pop %v3297
  %v3367 = vmul.f32 %v3366, %v3297
  %v3368 = vmul.f32 %v3367, %v3366
  %v3369 = vmul.f32 0.5, %v3368
  %v3370 = vsub.f32 1.5, %v3369
  %v3371 = vmul.f32 %v3366, %v3370
  %vm3372 = vweird.f32 %v3297
  %vm3373 = vweird.f32 %v3366
  %vm3374 = vmor %vm3372, %vm3373
  %v3375 = vsel %vm3374, %v3366, %v3371
  %v3376 = vrsqrt.pop %v3298
  %v3377 = vmul.f32 %v3376, %v3298
  %v3378 = vmul.f32 %v3377, %v3376
  %v3379 = vmul.f32 0.5, %v3378
  %v3380 = vsub.f32 1.5, %v3379
  %v3381 = vmul.f32 %v3376, %v3380
  %vm3382 = vweird.f32 %v3298
  %vm3383 = vweird.f32 %v3376
  %vm3384 = vmor %vm3382, %vm3383
  %v3385 = vsel %vm3384, %v3376, %v3381
  %v3386 = vrsqrt.pop %v3299
  %v3387 = vmul.f32 %v3386, %v3299
  %v3388 = vmul.f32 %v3387, %v3386
  %v3389 = vmul.f32 0.5, %v3388
  %v3390 = vsub.f32 1.5, %v3389
  %v3391 = vmul.f32 %v3386, %v3390
  %vm3392 = vweird.f32 %v3299
  %vm3393 = vweird.f32 %v3386
  %vm3394 = vmor %vm3392, %vm3393
  %v3395 = vsel %vm3394, %v3386, %v3391
  %v3396 = vrsqrt.pop %v3300
  %v3397 = vmul.f32 %v3396, %v3300
  %v3398 = vmul.f32 %v3397, %v3396
  %v3399 = vmul.f32 0.5, %v3398
  %v3400 = vsub.f32 1.5, %v3399
  %v3401 = vmul.f32 %v3396, %v3400
  %vm3402 = vweird.f32 %v3300
  %vm3403 = vweird.f32 %v3396
  %vm3404 = vmor %vm3402, %vm3403
  %v3405 = vsel %vm3404, %v3396, %v3401
  %v3406 = vrsqrt.pop %v3301
  %v3407 = vmul.f32 %v3406, %v3301
  %v3408 = vmul.f32 %v3407, %v3406
  %v3409 = vmul.f32 0.5, %v3408
  %v3410 = vsub.f32 1.5, %v3409
  %v3411 = vmul.f32 %v3406, %v3410
  %vm3412 = vweird.f32 %v3301
  %vm3413 = vweird.f32 %v3406
  %vm3414 = vmor %vm3412, %vm3413
  %v3415 = vsel %vm3414, %v3406, %v3411
  %v3416 = vrsqrt.pop %v3302
  %v3417 = vmul.f32 %v3416, %v3302
  %v3418 = vmul.f32 %v3417, %v3416
  %v3419 = vmul.f32 0.5, %v3418
  %v3420 = vsub.f32 1.5, %v3419
  %v3421 = vmul.f32 %v3416, %v3420
  %vm3422 = vweird.f32 %v3302
  %vm3423 = vweird.f32 %v3416
  %vm3424 = vmor %vm3422, %vm3423
  %v3425 = vsel %vm3424, %v3416, %v3421
  %v3426 = vrsqrt.pop %v3303
  %v3427 = vmul.f32 %v3426, %v3303
  %v3428 = vmul.f32 %v3427, %v3426
  %v3429 = vmul.f32 0.5, %v3428
  %v3430 = vsub.f32 1.5, %v3429
  %v3431 = vmul.f32 %v3426, %v3430
  %vm3432 = vweird.f32 %v3303
  %vm3433 = vweird.f32 %v3426
  %vm3434 = vmor %vm3432, %vm3433
  %v3435 = vsel %vm3434, %v3426, %v3431
  %v3436 = vrsqrt.pop %v3304
  %v3437 = vmul.f32 %v3436, %v3304
  %v3438 = vmul.f32 %v3437, %v3436
  %v3439 = vmul.f32 0.5, %v3438
  %v3440 = vsub.f32 1.5, %v3439
  %v3441 = vmul.f32 %v3436, %v3440
  %vm3442 = vweird.f32 %v3304
  %vm3443 = vweird.f32 %v3436
  %vm3444 = vmor %vm3442, %vm3443
  %v3445 = vsel %vm3444, %v3436, %v3441
  %v3446 = vrsqrt.pop %v3305
  %v3447 = vmul.f32 %v3446, %v3305
  %v3448 = vmul.f32 %v3447, %v3446
  %v3449 = vmul.f32 0.5, %v3448
  %v3450 = vsub.f32 1.5, %v3449
  %v3451 = vmul.f32 %v3446, %v3450
  %vm3452 = vweird.f32 %v3305
  %vm3453 = vweird.f32 %v3446
  %vm3454 = vmor %vm3452, %vm3453
  %v3455 = vsel %vm3454, %v3446, %v3451
  %v3456 = vrsqrt.pop %v3306
  %v3457 = vmul.f32 %v3456, %v3306
  %v3458 = vmul.f32 %v3457, %v3456
  %v3459 = vmul.f32 0.5, %v3458
  %v3460 = vsub.f32 1.5, %v3459
  %v3461 = vmul.f32 %v3456, %v3460
  %vm3462 = vweird.f32 %v3306
  %vm3463 = vweird.f32 %v3456
  %vm3464 = vmor %vm3462, %vm3463
  %v3465 = vsel %vm3464, %v3456, %v3461
  %v3466 = vrsqrt.pop %v3307
  %v3467 = vmul.f32 %v3466, %v3307
  %v3468 = vmul.f32 %v3467, %v3466
  %v3469 = vmul.f32 0.5, %v3468
  %v3470 = vsub.f32 1.5, %v3469
  %v3471 = vmul.f32 %v3466, %v3470
  %vm3472 = vweird.f32 %v3307
  %vm3473 = vweird.f32 %v3466
  %vm3474 = vmor %vm3472, %vm3473
  %v3475 = vsel %vm3474, %v3466, %v3471
  %v3476 = vrsqrt.pop %v3308
  %v3477 = vmul.f32 %v3476, %v3308
  %v3478 = vmul.f32 %v3477, %v3476
  %v3479 = vmul.f32 0.5, %v3478
  %v3480 = vsub.f32 1.5, %v3479
  %v3481 = vmul.f32 %v3476, %v3480
  %vm3482 = vweird.f32 %v3308
  %vm3483 = vweird.f32 %v3476
  %vm3484 = vmor %vm3482, %vm3483
  %v3485 = vsel %vm3484, %v3476, %v3481
  %v3486 = vrsqrt.pop %v3309
  %v3487 = vmul.f32 %v3486, %v3309
  %v3488 = vmul.f32 %v3487, %v3486
  %v3489 = vmul.f32 0.5, %v3488
  %v3490 = vsub.f32 1.5, %v3489
  %v3491 = vmul.f32 %v3486, %v3490
  %vm3492 = vweird.f32 %v3309
  %vm3493 = vweird.f32 %v3486
  %vm3494 = vmor %vm3492, %vm3493
  %v3495 = vsel %vm3494, %v3486, %v3491
  %v3496 = vrsqrt.pop %v3310
  %v3497 = vmul.f32 %v3496, %v3310
  %v3498 = vmul.f32 %v3497, %v3496
  %v3499 = vmul.f32 0.5, %v3498
  %v3500 = vsub.f32 1.5, %v3499
  %v3501 = vmul.f32 %v3496, %v3500
  %vm3502 = vweird.f32 %v3310
  %vm3503 = vweird.f32 %v3496
  %vm3504 = vmor %vm3502, %vm3503
  %v3505 = vsel %vm3504, %v3496, %v3501
  %v3506 = vrsqrt.pop %v3311
  %v3507 = vmul.f32 %v3506, %v3311
  %v3508 = vmul.f32 %v3507, %v3506
  %v3509 = vmul.f32 0.5, %v3508
  %v3510 = vsub.f32 1.5, %v3509
  %v3511 = vmul.f32 %v3506, %v3510
  %vm3512 = vweird.f32 %v3311
  %vm3513 = vweird.f32 %v3506
  %vm3514 = vmor %vm3512, %vm3513
  %v3515 = vsel %vm3514, %v3506, %v3511
  %v3516 = vrsqrt.pop %v3312
  %v3517 = vmul.f32 %v3516, %v3312
  %v3518 = vmul.f32 %v3517, %v3516
  %v3519 = vmul.f32 0.5, %v3518
  %v3520 = vsub.f32 1.5, %v3519
  %v3521 = vmul.f32 %v3516, %v3520
  %vm3522 = vweird.f32 %v3312
  %vm3523 = vweird.f32 %v3516
  %vm3524 = vmor %vm3522, %vm3523
  %v3525 = vsel %vm3524, %v3516, %v3521
  %v3526 = vrsqrt.pop %v3313
  %v3527 = vmul.f32 %v3526, %v3313
  %v3528 = vmul.f32 %v3527, %v3526
  %v3529 = vmul.f32 0.5, %v3528
  %v3530 = vsub.f32 1.5, %v3529
  %v3531 = vmul.f32 %v3526, %v3530
  %vm3532 = vweird.f32 %v3313
  %vm3533 = vweird.f32 %v3526
  %vm3534 = vmor %vm3532, %vm3533
  %v3535 = vsel %vm3534, %v3526, %v3531
  %v3536 = vrsqrt.pop %v3314
  %v3537 = vmul.f32 %v3536, %v3314
  %v3538 = vmul.f32 %v3537, %v3536
  %v3539 = vmul.f32 0.5, %v3538
  %v3540 = vsub.f32 1.5, %v3539
  %v3541 = vmul.f32 %v3536, %v3540
  %vm3542 = vweird.f32 %v3314
  %vm3543 = vweird.f32 %v3536
  %vm3544 = vmor %vm3542, %vm3543
  %v3545 = vsel %vm3544, %v3536, %v3541
  %v3546 = vrsqrt.pop %v3315
  %v3547 = vmul.f32 %v3546, %v3315
  %v3548 = vmul.f32 %v3547, %v3546
  %v3549 = vmul.f32 0.5, %v3548
  %v3550 = vsub.f32 1.5, %v3549
  %v3551 = vmul.f32 %v3546, %v3550
  %vm3552 = vweird.f32 %v3315
  %vm3553 = vweird.f32 %v3546
  %vm3554 = vmor %vm3552, %vm3553
  %v3555 = vsel %vm3554, %v3546, %v3551
  %v3556 = vmul.f32 %v3268, %v3325
  %v3557 = vmul.f32 %v3269, %v3335
  %v3558 = vmul.f32 %v3270, %v3345
  %v3559 = vmul.f32 %v3271, %v3355
  %v3560 = vmul.f32 %v3272, %v3365
  %v3561 = vmul.f32 %v3273, %v3375
  %v3562 = vmul.f32 %v3274, %v3385
  %v3563 = vmul.f32 %v3275, %v3395
  %v3564 = vmul.f32 %v3276, %v3405
  %v3565 = vmul.f32 %v3277, %v3415
  %v3566 = vmul.f32 %v3278, %v3425
  %v3567 = vmul.f32 %v3279, %v3435
  %v3568 = vmul.f32 %v3280, %v3445
  %v3569 = vmul.f32 %v3281, %v3455
  %v3570 = vmul.f32 %v3282, %v3465
  %v3571 = vmul.f32 %v3283, %v3475
  %v3572 = vmul.f32 %v3284, %v3485
  %v3573 = vmul.f32 %v3285, %v3495
  %v3574 = vmul.f32 %v3286, %v3505
  %v3575 = vmul.f32 %v3287, %v3515
  %v3576 = vmul.f32 %v3288, %v3525
  %v3577 = vmul.f32 %v3289, %v3535
  %v3578 = vmul.f32 %v3290, %v3545
  %v3579 = vmul.f32 %v3291, %v3555
  %v3580 = vld [vmem:[%s3] sm:$0xff]
  %v3581 = vld [vmem:[%s3 + $0x8] sm:$0xff]
  %v3582 = vld [vmem:[%s3 + $0x10] sm:$0xff]
  %v3583 = vld [vmem:[%s3 + $0x18] sm:$0xff]
  %v3584 = vld [vmem:[%s3 + $0x20] sm:$0xff]
  %v3585 = vld [vmem:[%s3 + $0x28] sm:$0xff]
  %v3586 = vld [vmem:[%s3 + $0x30] sm:$0xff]
  %v3587 = vld [vmem:[%s3 + $0x38] sm:$0xff]
  %v3588 = vld [vmem:[%s3 + $0x40] sm:$0xff]
  %v3589 = vld [vmem:[%s3 + $0x48] sm:$0xff]
  %v3590 = vld [vmem:[%s3 + $0x50] sm:$0xff]
  %v3591 = vld [vmem:[%s3 + $0x58] sm:$0xff]
  %v3592 = vld [vmem:[%s3 + $0x60] sm:$0xff]
  %v3593 = vld [vmem:[%s3 + $0x68] sm:$0xff]
  %v3594 = vld [vmem:[%s3 + $0x70] sm:$0xff]
  %v3595 = vld [vmem:[%s3 + $0x78] sm:$0xff]
  %v3596 = vld [vmem:[%s3 + $0x80] sm:$0xff]
  %v3597 = vld [vmem:[%s3 + $0x88] sm:$0xff]
  %v3598 = vld [vmem:[%s3 + $0x90] sm:$0xff]
  %v3599 = vld [vmem:[%s3 + $0x98] sm:$0xff]
  %v3600 = vld [vmem:[%s3 + $0xa0] sm:$0xff]
  %v3601 = vld [vmem:[%s3 + $0xa8] sm:$0xff]
  %v3602 = vld [vmem:[%s3 + $0xb0] sm:$0xff]
  %v3603 = vld [vmem:[%s3 + $0xb8] sm:$0xff]
  %v3604 = vmul.f32 %v3076, %v3556
  %v3605 = vmul.f32 %v3077, %v3557
  %v3606 = vmul.f32 %v3078, %v3558
  %v3607 = vmul.f32 %v3079, %v3559
  %v3608 = vmul.f32 %v3080, %v3560
  %v3609 = vmul.f32 %v3081, %v3561
  %v3610 = vmul.f32 %v3082, %v3562
  %v3611 = vmul.f32 %v3083, %v3563
  %v3612 = vmul.f32 %v3084, %v3564
  %v3613 = vmul.f32 %v3085, %v3565
  %v3614 = vmul.f32 %v3086, %v3566
  %v3615 = vmul.f32 %v3087, %v3567
  %v3616 = vmul.f32 %v3088, %v3568
  %v3617 = vmul.f32 %v3089, %v3569
  %v3618 = vmul.f32 %v3090, %v3570
  %v3619 = vmul.f32 %v3091, %v3571
  %v3620 = vmul.f32 %v3092, %v3572
  %v3621 = vmul.f32 %v3093, %v3573
  %v3622 = vmul.f32 %v3094, %v3574
  %v3623 = vmul.f32 %v3095, %v3575
  %v3624 = vmul.f32 %v3096, %v3576
  %v3625 = vmul.f32 %v3097, %v3577
  %v3626 = vmul.f32 %v3098, %v3578
  %v3627 = vmul.f32 %v3099, %v3579
  %v3628 = vsub.f32 %v3580, %v3604
  %v3629 = vsub.f32 %v3581, %v3605
  %v3630 = vsub.f32 %v3582, %v3606
  %v3631 = vsub.f32 %v3583, %v3607
  %v3632 = vsub.f32 %v3584, %v3608
  %v3633 = vsub.f32 %v3585, %v3609
  %v3634 = vsub.f32 %v3586, %v3610
  %v3635 = vsub.f32 %v3587, %v3611
  %v3636 = vsub.f32 %v3588, %v3612
  %v3637 = vsub.f32 %v3589, %v3613
  %v3638 = vsub.f32 %v3590, %v3614
  %v3639 = vsub.f32 %v3591, %v3615
  %v3640 = vsub.f32 %v3592, %v3616
  %v3641 = vsub.f32 %v3593, %v3617
  %v3642 = vsub.f32 %v3594, %v3618
  %v3643 = vsub.f32 %v3595, %v3619
  %v3644 = vsub.f32 %v3596, %v3620
  %v3645 = vsub.f32 %v3597, %v3621
  %v3646 = vsub.f32 %v3598, %v3622
  %v3647 = vsub.f32 %v3599, %v3623
  %v3648 = vsub.f32 %v3600, %v3624
  %v3649 = vsub.f32 %v3601, %v3625
  %v3650 = vsub.f32 %v3602, %v3626
  %v3651 = vsub.f32 %v3603, %v3627
  %3653 = vset.pattern.permute.xlu0 0
  %3654 = vperm.xlu0 %3653, %v3556
  %v3655 = vpop.permute.xlu0 %3654
  %3658 = vset.pattern.permute.xlu0 0
  %3659 = vperm.xlu0 %3658, %v3557
  %v3660 = vpop.permute.xlu0 %3659
  %3663 = vset.pattern.permute.xlu0 0
  %3664 = vperm.xlu0 %3663, %v3558
  %v3665 = vpop.permute.xlu0 %3664
  %3668 = vset.pattern.permute.xlu0 0
  %3669 = vperm.xlu0 %3668, %v3559
  %v3670 = vpop.permute.xlu0 %3669
  %3673 = vset.pattern.permute.xlu0 0
  %3674 = vperm.xlu0 %3673, %v3560
  %v3675 = vpop.permute.xlu0 %3674
  %3678 = vset.pattern.permute.xlu0 0
  %3679 = vperm.xlu0 %3678, %v3561
  %v3680 = vpop.permute.xlu0 %3679
  %3683 = vset.pattern.permute.xlu0 0
  %3684 = vperm.xlu0 %3683, %v3562
  %v3685 = vpop.permute.xlu0 %3684
  %3688 = vset.pattern.permute.xlu0 0
  %3689 = vperm.xlu0 %3688, %v3563
  %v3690 = vpop.permute.xlu0 %3689
  %3693 = vset.pattern.permute.xlu0 0
  %3694 = vperm.xlu0 %3693, %v3564
  %v3695 = vpop.permute.xlu0 %3694
  %3698 = vset.pattern.permute.xlu0 0
  %3699 = vperm.xlu0 %3698, %v3565
  %v3700 = vpop.permute.xlu0 %3699
  %3703 = vset.pattern.permute.xlu0 0
  %3704 = vperm.xlu0 %3703, %v3566
  %v3705 = vpop.permute.xlu0 %3704
  %3708 = vset.pattern.permute.xlu0 0
  %3709 = vperm.xlu0 %3708, %v3567
  %v3710 = vpop.permute.xlu0 %3709
  %3713 = vset.pattern.permute.xlu0 0
  %3714 = vperm.xlu0 %3713, %v3568
  %v3715 = vpop.permute.xlu0 %3714
  %3718 = vset.pattern.permute.xlu0 0
  %3719 = vperm.xlu0 %3718, %v3569
  %v3720 = vpop.permute.xlu0 %3719
  %3723 = vset.pattern.permute.xlu0 0
  %3724 = vperm.xlu0 %3723, %v3570
  %v3725 = vpop.permute.xlu0 %3724
  %3728 = vset.pattern.permute.xlu0 0
  %3729 = vperm.xlu0 %3728, %v3571
  %v3730 = vpop.permute.xlu0 %3729
  %3733 = vset.pattern.permute.xlu0 0
  %3734 = vperm.xlu0 %3733, %v3572
  %v3735 = vpop.permute.xlu0 %3734
  %3738 = vset.pattern.permute.xlu0 0
  %3739 = vperm.xlu0 %3738, %v3573
  %v3740 = vpop.permute.xlu0 %3739
  %3743 = vset.pattern.permute.xlu0 0
  %3744 = vperm.xlu0 %3743, %v3574
  %v3745 = vpop.permute.xlu0 %3744
  %3748 = vset.pattern.permute.xlu0 0
  %3749 = vperm.xlu0 %3748, %v3575
  %v3750 = vpop.permute.xlu0 %3749
  %3753 = vset.pattern.permute.xlu0 0
  %3754 = vperm.xlu0 %3753, %v3576
  %v3755 = vpop.permute.xlu0 %3754
  %3758 = vset.pattern.permute.xlu0 0
  %3759 = vperm.xlu0 %3758, %v3577
  %v3760 = vpop.permute.xlu0 %3759
  %3763 = vset.pattern.permute.xlu0 0
  %3764 = vperm.xlu0 %3763, %v3578
  %v3765 = vpop.permute.xlu0 %3764
  %3768 = vset.pattern.permute.xlu0 0
  %3769 = vperm.xlu0 %3768, %v3579
  %v3770 = vpop.permute.xlu0 %3769
  %v3772 = vmul.f32 %v2944, %v3655
  %v3773 = vmul.f32 %v2946, %v3660
  %v3774 = vmul.f32 %v2949, %v3665
  %v3775 = vmul.f32 %v2951, %v3670
  %v3776 = vmul.f32 %v2954, %v3675
  %v3777 = vmul.f32 %v2956, %v3680
  %v3778 = vmul.f32 %v2959, %v3685
  %v3779 = vmul.f32 %v2961, %v3690
  %v3780 = vmul.f32 %v2964, %v3695
  %v3781 = vmul.f32 %v2966, %v3700
  %v3782 = vmul.f32 %v2969, %v3705
  %v3783 = vmul.f32 %v2971, %v3710
  %v3784 = vmul.f32 %v2974, %v3715
  %v3785 = vmul.f32 %v2976, %v3720
  %v3786 = vmul.f32 %v2979, %v3725
  %v3787 = vmul.f32 %v2981, %v3730
  %v3788 = vmul.f32 %v2984, %v3735
  %v3789 = vmul.f32 %v2986, %v3740
  %v3790 = vmul.f32 %v2989, %v3745
  %v3791 = vmul.f32 %v2991, %v3750
  %v3792 = vmul.f32 %v2994, %v3755
  %v3793 = vmul.f32 %v2996, %v3760
  %v3794 = vmul.f32 %v2999, %v3765
  %v3795 = vmul.f32 %v3001, %v3770
  %3797 = vset.pattern.permute.xlu0 0
  %3798 = vperm.xlu0 %3797, %v3628
  %v3799 = vpop.permute.xlu0 %3798
  %3802 = vset.pattern.permute.xlu0 0
  %3803 = vperm.xlu0 %3802, %v3629
  %v3804 = vpop.permute.xlu0 %3803
  %3807 = vset.pattern.permute.xlu0 0
  %3808 = vperm.xlu0 %3807, %v3630
  %v3809 = vpop.permute.xlu0 %3808
  %3812 = vset.pattern.permute.xlu0 0
  %3813 = vperm.xlu0 %3812, %v3631
  %v3814 = vpop.permute.xlu0 %3813
  %3817 = vset.pattern.permute.xlu0 0
  %3818 = vperm.xlu0 %3817, %v3632
  %v3819 = vpop.permute.xlu0 %3818
  %3822 = vset.pattern.permute.xlu0 0
  %3823 = vperm.xlu0 %3822, %v3633
  %v3824 = vpop.permute.xlu0 %3823
  %3827 = vset.pattern.permute.xlu0 0
  %3828 = vperm.xlu0 %3827, %v3634
  %v3829 = vpop.permute.xlu0 %3828
  %3832 = vset.pattern.permute.xlu0 0
  %3833 = vperm.xlu0 %3832, %v3635
  %v3834 = vpop.permute.xlu0 %3833
  %3837 = vset.pattern.permute.xlu0 0
  %3838 = vperm.xlu0 %3837, %v3636
  %v3839 = vpop.permute.xlu0 %3838
  %3842 = vset.pattern.permute.xlu0 0
  %3843 = vperm.xlu0 %3842, %v3637
  %v3844 = vpop.permute.xlu0 %3843
  %3847 = vset.pattern.permute.xlu0 0
  %3848 = vperm.xlu0 %3847, %v3638
  %v3849 = vpop.permute.xlu0 %3848
  %3852 = vset.pattern.permute.xlu0 0
  %3853 = vperm.xlu0 %3852, %v3639
  %v3854 = vpop.permute.xlu0 %3853
  %3857 = vset.pattern.permute.xlu0 0
  %3858 = vperm.xlu0 %3857, %v3640
  %v3859 = vpop.permute.xlu0 %3858
  %3862 = vset.pattern.permute.xlu0 0
  %3863 = vperm.xlu0 %3862, %v3641
  %v3864 = vpop.permute.xlu0 %3863
  %3867 = vset.pattern.permute.xlu0 0
  %3868 = vperm.xlu0 %3867, %v3642
  %v3869 = vpop.permute.xlu0 %3868
  %3872 = vset.pattern.permute.xlu0 0
  %3873 = vperm.xlu0 %3872, %v3643
  %v3874 = vpop.permute.xlu0 %3873
  %3877 = vset.pattern.permute.xlu0 0
  %3878 = vperm.xlu0 %3877, %v3644
  %v3879 = vpop.permute.xlu0 %3878
  %3882 = vset.pattern.permute.xlu0 0
  %3883 = vperm.xlu0 %3882, %v3645
  %v3884 = vpop.permute.xlu0 %3883
  %3887 = vset.pattern.permute.xlu0 0
  %3888 = vperm.xlu0 %3887, %v3646
  %v3889 = vpop.permute.xlu0 %3888
  %3892 = vset.pattern.permute.xlu0 0
  %3893 = vperm.xlu0 %3892, %v3647
  %v3894 = vpop.permute.xlu0 %3893
  %3897 = vset.pattern.permute.xlu0 0
  %3898 = vperm.xlu0 %3897, %v3648
  %v3899 = vpop.permute.xlu0 %3898
  %3902 = vset.pattern.permute.xlu0 0
  %3903 = vperm.xlu0 %3902, %v3649
  %v3904 = vpop.permute.xlu0 %3903
  %3907 = vset.pattern.permute.xlu0 0
  %3908 = vperm.xlu0 %3907, %v3650
  %v3909 = vpop.permute.xlu0 %3908
  %3912 = vset.pattern.permute.xlu0 0
  %3913 = vperm.xlu0 %3912, %v3651
  %v3914 = vpop.permute.xlu0 %3913
  %v3916 = vadd.f32 %v3772, %v3799
  %v3917 = vadd.f32 %v3773, %v3804
  %v3918 = vadd.f32 %v3774, %v3809
  %v3919 = vadd.f32 %v3775, %v3814
  %v3920 = vadd.f32 %v3776, %v3819
  %v3921 = vadd.f32 %v3777, %v3824
  %v3922 = vadd.f32 %v3778, %v3829
  %v3923 = vadd.f32 %v3779, %v3834
  %v3924 = vadd.f32 %v3780, %v3839
  %v3925 = vadd.f32 %v3781, %v3844
  %v3926 = vadd.f32 %v3782, %v3849
  %v3927 = vadd.f32 %v3783, %v3854
  %v3928 = vadd.f32 %v3784, %v3859
  %v3929 = vadd.f32 %v3785, %v3864
  %v3930 = vadd.f32 %v3786, %v3869
  %v3931 = vadd.f32 %v3787, %v3874
  %v3932 = vadd.f32 %v3788, %v3879
  %v3933 = vadd.f32 %v3789, %v3884
  %v3934 = vadd.f32 %v3790, %v3889
  %v3935 = vadd.f32 %v3791, %v3894
  %v3936 = vadd.f32 %v3792, %v3899
  %v3937 = vadd.f32 %v3793, %v3904
  %v3938 = vadd.f32 %v3794, %v3909
  %v3939 = vadd.f32 %v3795, %v3914
  %v3940 = vmax.f32 %v3916, 0.0
  %v3941 = vmax.f32 %v3917, 0.0
  %v3942 = vmax.f32 %v3918, 0.0
  %v3943 = vmax.f32 %v3919, 0.0
  %v3944 = vmax.f32 %v3920, 0.0
  %v3945 = vmax.f32 %v3921, 0.0
  %v3946 = vmax.f32 %v3922, 0.0
  %v3947 = vmax.f32 %v3923, 0.0
  %v3948 = vmax.f32 %v3924, 0.0
  %v3949 = vmax.f32 %v3925, 0.0
  %v3950 = vmax.f32 %v3926, 0.0
  %v3951 = vmax.f32 %v3927, 0.0
  %v3952 = vmax.f32 %v3928, 0.0
  %v3953 = vmax.f32 %v3929, 0.0
  %v3954 = vmax.f32 %v3930, 0.0
  %v3955 = vmax.f32 %v3931, 0.0
  %v3956 = vmax.f32 %v3932, 0.0
  %v3957 = vmax.f32 %v3933, 0.0
  %v3958 = vmax.f32 %v3934, 0.0
  %v3959 = vmax.f32 %v3935, 0.0
  %v3960 = vmax.f32 %v3936, 0.0
  %v3961 = vmax.f32 %v3937, 0.0
  %v3962 = vmax.f32 %v3938, 0.0
  %v3963 = vmax.f32 %v3939, 0.0
  %3988 = vrot.lane.b32.xlu0 %v3940, 87
  %v3989 = vpop.permute.xlu0 %3988
  %3990 = vrot.lane.b32.xlu0 %v3941, 87
  %v3991 = vpop.permute.xlu0 %3990
  %3992 = vrot.lane.b32.xlu0 %v3942, 87
  %v3993 = vpop.permute.xlu0 %3992
  %3994 = vrot.lane.b32.xlu0 %v3943, 87
  %v3995 = vpop.permute.xlu0 %3994
  %3996 = vrot.lane.b32.xlu0 %v3944, 87
  %v3997 = vpop.permute.xlu0 %3996
  %3998 = vrot.lane.b32.xlu0 %v3945, 87
  %v3999 = vpop.permute.xlu0 %3998
  %4000 = vrot.lane.b32.xlu0 %v3946, 87
  %v4001 = vpop.permute.xlu0 %4000
  %4002 = vrot.lane.b32.xlu0 %v3947, 87
  %v4003 = vpop.permute.xlu0 %4002
  %4004 = vrot.lane.b32.xlu0 %v3948, 87
  %v4005 = vpop.permute.xlu0 %4004
  %4006 = vrot.lane.b32.xlu0 %v3949, 87
  %v4007 = vpop.permute.xlu0 %4006
  %4008 = vrot.lane.b32.xlu0 %v3950, 87
  %v4009 = vpop.permute.xlu0 %4008
  %4010 = vrot.lane.b32.xlu0 %v3951, 87
  %v4011 = vpop.permute.xlu0 %4010
  %4012 = vrot.lane.b32.xlu0 %v3952, 87
  %v4013 = vpop.permute.xlu0 %4012
  %4014 = vrot.lane.b32.xlu0 %v3953, 87
  %v4015 = vpop.permute.xlu0 %4014
  %4016 = vrot.lane.b32.xlu0 %v3954, 87
  %v4017 = vpop.permute.xlu0 %4016
  %4018 = vrot.lane.b32.xlu0 %v3955, 87
  %v4019 = vpop.permute.xlu0 %4018
  %4020 = vrot.lane.b32.xlu0 %v3956, 87
  %v4021 = vpop.permute.xlu0 %4020
  %4022 = vrot.lane.b32.xlu0 %v3957, 87
  %v4023 = vpop.permute.xlu0 %4022
  %4024 = vrot.lane.b32.xlu0 %v3958, 87
  %v4025 = vpop.permute.xlu0 %4024
  %4026 = vrot.lane.b32.xlu0 %v3959, 87
  %v4027 = vpop.permute.xlu0 %4026
  %4028 = vrot.lane.b32.xlu0 %v3960, 87
  %v4029 = vpop.permute.xlu0 %4028
  %4030 = vrot.lane.b32.xlu0 %v3961, 87
  %v4031 = vpop.permute.xlu0 %4030
  %4032 = vrot.lane.b32.xlu0 %v3962, 87
  %v4033 = vpop.permute.xlu0 %4032
  %4034 = vrot.lane.b32.xlu0 %v3963, 87
  %v4035 = vpop.permute.xlu0 %4034
  %4060 = vrot.lane.b32.xlu0 %v3940, 8
  %v4061 = vpop.permute.xlu0 %4060
  %4062 = vrot.lane.b32.xlu0 %v3941, 8
  %v4063 = vpop.permute.xlu0 %4062
  %4064 = vrot.lane.b32.xlu0 %v3942, 8
  %v4065 = vpop.permute.xlu0 %4064
  %4066 = vrot.lane.b32.xlu0 %v3943, 8
  %v4067 = vpop.permute.xlu0 %4066
  %4068 = vrot.lane.b32.xlu0 %v3944, 8
  %v4069 = vpop.permute.xlu0 %4068
  %4070 = vrot.lane.b32.xlu0 %v3945, 8
  %v4071 = vpop.permute.xlu0 %4070
  %4072 = vrot.lane.b32.xlu0 %v3946, 8
  %v4073 = vpop.permute.xlu0 %4072
  %4074 = vrot.lane.b32.xlu0 %v3947, 8
  %v4075 = vpop.permute.xlu0 %4074
  %4076 = vrot.lane.b32.xlu0 %v3948, 8
  %v4077 = vpop.permute.xlu0 %4076
  %4078 = vrot.lane.b32.xlu0 %v3949, 8
  %v4079 = vpop.permute.xlu0 %4078
  %4080 = vrot.lane.b32.xlu0 %v3950, 8
  %v4081 = vpop.permute.xlu0 %4080
  %4082 = vrot.lane.b32.xlu0 %v3951, 8
  %v4083 = vpop.permute.xlu0 %4082
  %4084 = vrot.lane.b32.xlu0 %v3952, 8
  %v4085 = vpop.permute.xlu0 %4084
  %4086 = vrot.lane.b32.xlu0 %v3953, 8
  %v4087 = vpop.permute.xlu0 %4086
  %4088 = vrot.lane.b32.xlu0 %v3954, 8
  %v4089 = vpop.permute.xlu0 %4088
  %4090 = vrot.lane.b32.xlu0 %v3955, 8
  %v4091 = vpop.permute.xlu0 %4090
  %4092 = vrot.lane.b32.xlu0 %v3956, 8
  %v4093 = vpop.permute.xlu0 %4092
  %4094 = vrot.lane.b32.xlu0 %v3957, 8
  %v4095 = vpop.permute.xlu0 %4094
  %4096 = vrot.lane.b32.xlu0 %v3958, 8
  %v4097 = vpop.permute.xlu0 %4096
  %4098 = vrot.lane.b32.xlu0 %v3959, 8
  %v4099 = vpop.permute.xlu0 %4098
  %4100 = vrot.lane.b32.xlu0 %v3960, 8
  %v4101 = vpop.permute.xlu0 %4100
  %4102 = vrot.lane.b32.xlu0 %v3961, 8
  %v4103 = vpop.permute.xlu0 %4102
  %4104 = vrot.lane.b32.xlu0 %v3962, 8
  %v4105 = vpop.permute.xlu0 %4104
  %4106 = vrot.lane.b32.xlu0 %v3963, 8
  %v4107 = vpop.permute.xlu0 %4106
  %vm4132 = vcmask 64512
  %v4133 = vsel %vm4132, %v3989, %v4061
  %v4134 = vsel %vm4132, %v3991, %v4063
  %v4135 = vsel %vm4132, %v3993, %v4065
  %v4136 = vsel %vm4132, %v3995, %v4067
  %v4137 = vsel %vm4132, %v3997, %v4069
  %v4138 = vsel %vm4132, %v3999, %v4071
  %v4139 = vsel %vm4132, %v4001, %v4073
  %v4140 = vsel %vm4132, %v4003, %v4075
  %v4141 = vsel %vm4132, %v4005, %v4077
  %v4142 = vsel %vm4132, %v4007, %v4079
  %v4143 = vsel %vm4132, %v4009, %v4081
  %v4144 = vsel %vm4132, %v4011, %v4083
  %v4145 = vsel %vm4132, %v4013, %v4085
  %v4146 = vsel %vm4132, %v4015, %v4087
  %v4147 = vsel %vm4132, %v4017, %v4089
  %v4148 = vsel %vm4132, %v4019, %v4091
  %v4149 = vsel %vm4132, %v4021, %v4093
  %v4150 = vsel %vm4132, %v4023, %v4095
  %v4151 = vsel %vm4132, %v4025, %v4097
  %v4152 = vsel %vm4132, %v4027, %v4099
  %v4153 = vsel %vm4132, %v4029, %v4101
  %v4154 = vsel %vm4132, %v4031, %v4103
  %v4155 = vsel %vm4132, %v4033, %v4105
  %v4156 = vsel %vm4132, %v4035, %v4107
  %v4157 = vld [vmem:[%s5] sm:$0x1]
  %v4158 = vperm.slane %v4157, 0
  %v4159 = vmul.f32 %v4133, %v4158
  %v4160 = vmul.f32 %v4134, %v4158
  %v4161 = vmul.f32 %v4135, %v4158
  %v4162 = vmul.f32 %v4136, %v4158
  %v4163 = vmul.f32 %v4137, %v4158
  %v4164 = vmul.f32 %v4138, %v4158
  %v4165 = vmul.f32 %v4139, %v4158
  %v4166 = vmul.f32 %v4140, %v4158
  %v4167 = vmul.f32 %v4141, %v4158
  %v4168 = vmul.f32 %v4142, %v4158
  %v4169 = vmul.f32 %v4143, %v4158
  %v4170 = vmul.f32 %v4144, %v4158
  %v4171 = vmul.f32 %v4145, %v4158
  %v4172 = vmul.f32 %v4146, %v4158
  %v4173 = vmul.f32 %v4147, %v4158
  %v4174 = vmul.f32 %v4148, %v4158
  %v4175 = vmul.f32 %v4149, %v4158
  %v4176 = vmul.f32 %v4150, %v4158
  %v4177 = vmul.f32 %v4151, %v4158
  %v4178 = vmul.f32 %v4152, %v4158
  %v4179 = vmul.f32 %v4153, %v4158
  %v4180 = vmul.f32 %v4154, %v4158
  %v4181 = vmul.f32 %v4155, %v4158
  %v4182 = vmul.f32 %v4156, %v4158
  %v4183 = vld [vmem:[%s4] sm:$0xff]
  %v4184 = vld [vmem:[%s4 + $0x8] sm:$0xff]
  %v4185 = vld [vmem:[%s4 + $0x10] sm:$0xff]
  %v4186 = vld [vmem:[%s4 + $0x18] sm:$0xff]
  %v4187 = vld [vmem:[%s4 + $0x20] sm:$0xff]
  %v4188 = vld [vmem:[%s4 + $0x28] sm:$0xff]
  %v4189 = vpack.c.bf16 %v4160, %v4159
  %v4190 = vpack.c.bf16 %v4162, %v4161
  %v4191 = vpack.c.bf16 %v4164, %v4163
  %v4192 = vpack.c.bf16 %v4166, %v4165
  %v4193 = vpack.c.bf16 %v4168, %v4167
  %v4194 = vpack.c.bf16 %v4170, %v4169
  %v4195 = vpack.c.bf16 %v4172, %v4171
  %v4196 = vpack.c.bf16 %v4174, %v4173
  %v4197 = vpack.c.bf16 %v4176, %v4175
  %v4198 = vpack.c.bf16 %v4178, %v4177
  %v4199 = vpack.c.bf16 %v4180, %v4179
  %v4200 = vpack.c.bf16 %v4182, %v4181
  %4201 = vrot.lane.b32.xlu0 %v3940, 86
  %v4202 = vpop.permute.xlu0 %4201
  %4203 = vrot.lane.b32.xlu0 %v3941, 86
  %v4204 = vpop.permute.xlu0 %4203
  %4205 = vrot.lane.b32.xlu0 %v3942, 86
  %v4206 = vpop.permute.xlu0 %4205
  %4207 = vrot.lane.b32.xlu0 %v3943, 86
  %v4208 = vpop.permute.xlu0 %4207
  %4209 = vrot.lane.b32.xlu0 %v3944, 86
  %v4210 = vpop.permute.xlu0 %4209
  %4211 = vrot.lane.b32.xlu0 %v3945, 86
  %v4212 = vpop.permute.xlu0 %4211
  %4213 = vrot.lane.b32.xlu0 %v3946, 86
  %v4214 = vpop.permute.xlu0 %4213
  %4215 = vrot.lane.b32.xlu0 %v3947, 86
  %v4216 = vpop.permute.xlu0 %4215
  %4217 = vrot.lane.b32.xlu0 %v3948, 86
  %v4218 = vpop.permute.xlu0 %4217
  %4219 = vrot.lane.b32.xlu0 %v3949, 86
  %v4220 = vpop.permute.xlu0 %4219
  %4221 = vrot.lane.b32.xlu0 %v3950, 86
  %v4222 = vpop.permute.xlu0 %4221
  %4223 = vrot.lane.b32.xlu0 %v3951, 86
  %v4224 = vpop.permute.xlu0 %4223
  %4225 = vrot.lane.b32.xlu0 %v3952, 86
  %v4226 = vpop.permute.xlu0 %4225
  %4227 = vrot.lane.b32.xlu0 %v3953, 86
  %v4228 = vpop.permute.xlu0 %4227
  %4229 = vrot.lane.b32.xlu0 %v3954, 86
  %v4230 = vpop.permute.xlu0 %4229
  %4231 = vrot.lane.b32.xlu0 %v3955, 86
  %v4232 = vpop.permute.xlu0 %4231
  %4233 = vrot.lane.b32.xlu0 %v3956, 86
  %v4234 = vpop.permute.xlu0 %4233
  %4235 = vrot.lane.b32.xlu0 %v3957, 86
  %v4236 = vpop.permute.xlu0 %4235
  %4237 = vrot.lane.b32.xlu0 %v3958, 86
  %v4238 = vpop.permute.xlu0 %4237
  %4239 = vrot.lane.b32.xlu0 %v3959, 86
  %v4240 = vpop.permute.xlu0 %4239
  %4241 = vrot.lane.b32.xlu0 %v3960, 86
  %v4242 = vpop.permute.xlu0 %4241
  %4243 = vrot.lane.b32.xlu0 %v3961, 86
  %v4244 = vpop.permute.xlu0 %4243
  %4245 = vrot.lane.b32.xlu0 %v3962, 86
  %v4246 = vpop.permute.xlu0 %4245
  %4247 = vrot.lane.b32.xlu0 %v3963, 86
  %v4248 = vpop.permute.xlu0 %4247
  %4273 = vrot.lane.b32.xlu0 %v3940, 7
  %v4274 = vpop.permute.xlu0 %4273
  %4275 = vrot.lane.b32.xlu0 %v3941, 7
  %v4276 = vpop.permute.xlu0 %4275
  %4277 = vrot.lane.b32.xlu0 %v3942, 7
  %v4278 = vpop.permute.xlu0 %4277
  %4279 = vrot.lane.b32.xlu0 %v3943, 7
  %v4280 = vpop.permute.xlu0 %4279
  %4281 = vrot.lane.b32.xlu0 %v3944, 7
  %v4282 = vpop.permute.xlu0 %4281
  %4283 = vrot.lane.b32.xlu0 %v3945, 7
  %v4284 = vpop.permute.xlu0 %4283
  %4285 = vrot.lane.b32.xlu0 %v3946, 7
  %v4286 = vpop.permute.xlu0 %4285
  %4287 = vrot.lane.b32.xlu0 %v3947, 7
  %v4288 = vpop.permute.xlu0 %4287
  %4289 = vrot.lane.b32.xlu0 %v3948, 7
  %v4290 = vpop.permute.xlu0 %4289
  %4291 = vrot.lane.b32.xlu0 %v3949, 7
  %v4292 = vpop.permute.xlu0 %4291
  %4293 = vrot.lane.b32.xlu0 %v3950, 7
  %v4294 = vpop.permute.xlu0 %4293
  %4295 = vrot.lane.b32.xlu0 %v3951, 7
  %v4296 = vpop.permute.xlu0 %4295
  %4297 = vrot.lane.b32.xlu0 %v3952, 7
  %v4298 = vpop.permute.xlu0 %4297
  %4299 = vrot.lane.b32.xlu0 %v3953, 7
  %v4300 = vpop.permute.xlu0 %4299
  %4301 = vrot.lane.b32.xlu0 %v3954, 7
  %v4302 = vpop.permute.xlu0 %4301
  %4303 = vrot.lane.b32.xlu0 %v3955, 7
  %v4304 = vpop.permute.xlu0 %4303
  %4305 = vrot.lane.b32.xlu0 %v3956, 7
  %v4306 = vpop.permute.xlu0 %4305
  %4307 = vrot.lane.b32.xlu0 %v3957, 7
  %v4308 = vpop.permute.xlu0 %4307
  %4309 = vrot.lane.b32.xlu0 %v3958, 7
  %v4310 = vpop.permute.xlu0 %4309
  %4311 = vrot.lane.b32.xlu0 %v3959, 7
  %v4312 = vpop.permute.xlu0 %4311
  %4313 = vrot.lane.b32.xlu0 %v3960, 7
  %v4314 = vpop.permute.xlu0 %4313
  %4315 = vrot.lane.b32.xlu0 %v3961, 7
  %v4316 = vpop.permute.xlu0 %4315
  %4317 = vrot.lane.b32.xlu0 %v3962, 7
  %v4318 = vpop.permute.xlu0 %4317
  %4319 = vrot.lane.b32.xlu0 %v3963, 7
  %v4320 = vpop.permute.xlu0 %4319
  %vm4345 = vcmask 56320
  %v4346 = vsel %vm4345, %v4202, %v4274
  %v4347 = vsel %vm4345, %v4204, %v4276
  %v4348 = vsel %vm4345, %v4206, %v4278
  %v4349 = vsel %vm4345, %v4208, %v4280
  %v4350 = vsel %vm4345, %v4210, %v4282
  %v4351 = vsel %vm4345, %v4212, %v4284
  %v4352 = vsel %vm4345, %v4214, %v4286
  %v4353 = vsel %vm4345, %v4216, %v4288
  %v4354 = vsel %vm4345, %v4218, %v4290
  %v4355 = vsel %vm4345, %v4220, %v4292
  %v4356 = vsel %vm4345, %v4222, %v4294
  %v4357 = vsel %vm4345, %v4224, %v4296
  %v4358 = vsel %vm4345, %v4226, %v4298
  %v4359 = vsel %vm4345, %v4228, %v4300
  %v4360 = vsel %vm4345, %v4230, %v4302
  %v4361 = vsel %vm4345, %v4232, %v4304
  %v4362 = vsel %vm4345, %v4234, %v4306
  %v4363 = vsel %vm4345, %v4236, %v4308
  %v4364 = vsel %vm4345, %v4238, %v4310
  %v4365 = vsel %vm4345, %v4240, %v4312
  %v4366 = vsel %vm4345, %v4242, %v4314
  %v4367 = vsel %vm4345, %v4244, %v4316
  %v4368 = vsel %vm4345, %v4246, %v4318
  %v4369 = vsel %vm4345, %v4248, %v4320
  %v4370 = vld [vmem:[%s5 + $0x1] sm:$0x1]
  %v4371 = vperm.slane %v4370, 0
  %v4372 = vmul.f32 %v4346, %v4371
  %v4373 = vmul.f32 %v4347, %v4371
  %v4374 = vmul.f32 %v4348, %v4371
  %v4375 = vmul.f32 %v4349, %v4371
  %v4376 = vmul.f32 %v4350, %v4371
  %v4377 = vmul.f32 %v4351, %v4371
  %v4378 = vmul.f32 %v4352, %v4371
  %v4379 = vmul.f32 %v4353, %v4371
  %v4380 = vmul.f32 %v4354, %v4371
  %v4381 = vmul.f32 %v4355, %v4371
  %v4382 = vmul.f32 %v4356, %v4371
  %v4383 = vmul.f32 %v4357, %v4371
  %v4384 = vmul.f32 %v4358, %v4371
  %v4385 = vmul.f32 %v4359, %v4371
  %v4386 = vmul.f32 %v4360, %v4371
  %v4387 = vmul.f32 %v4361, %v4371
  %v4388 = vmul.f32 %v4362, %v4371
  %v4389 = vmul.f32 %v4363, %v4371
  %v4390 = vmul.f32 %v4364, %v4371
  %v4391 = vmul.f32 %v4365, %v4371
  %v4392 = vmul.f32 %v4366, %v4371
  %v4393 = vmul.f32 %v4367, %v4371
  %v4394 = vmul.f32 %v4368, %v4371
  %v4395 = vmul.f32 %v4369, %v4371
  %s4396 = scalar_lea.vmem %s4, 48
  %v4397 = vld [vmem:[%s4396] sm:$0xff]
  %v4398 = vld [vmem:[%s4396 + $0x8] sm:$0xff]
  %v4399 = vld [vmem:[%s4396 + $0x10] sm:$0xff]
  %v4400 = vld [vmem:[%s4396 + $0x18] sm:$0xff]
  %v4401 = vld [vmem:[%s4396 + $0x20] sm:$0xff]
  %v4402 = vld [vmem:[%s4396 + $0x28] sm:$0xff]
  %v4403 = vpack.c.bf16 %v4373, %v4372
  %v4404 = vpack.c.bf16 %v4375, %v4374
  %v4405 = vpack.c.bf16 %v4377, %v4376
  %v4406 = vpack.c.bf16 %v4379, %v4378
  %v4407 = vpack.c.bf16 %v4381, %v4380
  %v4408 = vpack.c.bf16 %v4383, %v4382
  %v4409 = vpack.c.bf16 %v4385, %v4384
  %v4410 = vpack.c.bf16 %v4387, %v4386
  %v4411 = vpack.c.bf16 %v4389, %v4388
  %v4412 = vpack.c.bf16 %v4391, %v4390
  %v4413 = vpack.c.bf16 %v4393, %v4392
  %v4414 = vpack.c.bf16 %v4395, %v4394
  %v4421 = vunpack.c.l.b16 %v4397
  %v4422 = vunpack.c.h.b16 %v4397
  %v4423 = vunpack.c.l.b16 %v4398
  %v4424 = vunpack.c.h.b16 %v4398
  %v4425 = vunpack.c.l.b16 %v4399
  %v4426 = vunpack.c.h.b16 %v4399
  %v4427 = vunpack.c.l.b16 %v4400
  %v4428 = vunpack.c.h.b16 %v4400
  %v4429 = vunpack.c.l.b16 %v4401
  %v4430 = vunpack.c.h.b16 %v4401
  %v4431 = vunpack.c.l.b16 %v4402
  %v4432 = vunpack.c.h.b16 %v4402
  %v4433 = vpack.c.b16 %v4423, %v4421
  %v4434 = vpack.c.b16 %v4424, %v4422
  %v4435 = vpack.c.b16 %v4427, %v4425
  %v4436 = vpack.c.b16 %v4428, %v4426
  %v4437 = vpack.c.b16 %v4431, %v4429
  %v4438 = vpack.c.b16 %v4432, %v4430
  %vm4442 = vcmask 523264
  %v4444 = vsel %vm4442, %v4434, 0
  %v4447 = vsel %vm4442, %v4436, 0
  %v4450 = vsel %vm4442, %v4438, 0
  %4452 = vmatpush.bf16.msra.mxu0 %v4410
  %4453 = vmatpush.bf16.msra.mxu0 %v4409
  %4454 = vmatpush.bf16.msra.mxu0 %v4408
  %4455 = vmatpush.bf16.msra.mxu0 %v4407
  %4456 = vmatpush.bf16.msra.mxu0 %v4406
  %4457 = vmatpush.bf16.msra.mxu0 %v4405
  %4458 = vmatpush.bf16.msra.mxu0 %v4404
  %4459 = vmatpush.bf16.msra.mxu0 %v4403
  %4460 = vmatmul.bf16.gmra.mxu0 %v4433
  %v4461 = vpop.f32.mrf.mxu0
  %v4462 = vadd.f32 0.0, %v4461
  %v4463 = vpop.f32.mrf.mxu0
  %v4464 = vadd.f32 0.0, %v4463
  %4465 = vmatmul.bf16.gmra.mxu0 %v4435
  %v4466 = vpop.f32.mrf.mxu0
  %v4467 = vadd.f32 0.0, %v4466
  %v4468 = vpop.f32.mrf.mxu0
  %v4469 = vadd.f32 0.0, %v4468
  %4470 = vmatmul.bf16.gmra.mxu0 %v4437
  %v4471 = vpop.f32.mrf.mxu0
  %v4472 = vadd.f32 0.0, %v4471
  %v4473 = vpop.f32.mrf.mxu0
  %v4474 = vadd.f32 0.0, %v4473
  %4475 = vdwg.mxu0
  %4476 = vmatpush.bf16.msra.mxu0 0
  %4477 = vmatpush.bf16.msra.mxu0 0
  %4478 = vmatpush.bf16.msra.mxu0 0
  %4479 = vmatpush.bf16.msra.mxu0 0
  %4480 = vmatpush.bf16.msra.mxu0 %v4414
  %4481 = vmatpush.bf16.msra.mxu0 %v4413
  %4482 = vmatpush.bf16.msra.mxu0 %v4412
  %4483 = vmatpush.bf16.msra.mxu0 %v4411
  %4484 = vmatmul.bf16.gmra.mxu0 %v4444
  %v4485 = vpop.f32.mrf.mxu0
  %v4486 = vadd.f32 %v4462, %v4485
  %v4487 = vpop.f32.mrf.mxu0
  %v4488 = vadd.f32 %v4464, %v4487
  %4489 = vmatmul.bf16.gmra.mxu0 %v4447
  %v4490 = vpop.f32.mrf.mxu0
  %v4491 = vadd.f32 %v4467, %v4490
  %v4492 = vpop.f32.mrf.mxu0
  %v4493 = vadd.f32 %v4469, %v4492
  %4494 = vmatmul.bf16.gmra.mxu0 %v4450
  %v4495 = vpop.f32.mrf.mxu0
  %v4496 = vadd.f32 %v4472, %v4495
  %v4497 = vpop.f32.mrf.mxu0
  %v4498 = vadd.f32 %v4474, %v4497
  %4499 = vdwg.mxu0
  %v4506 = vunpack.c.l.b16 %v4183
  %v4507 = vunpack.c.h.b16 %v4183
  %v4508 = vunpack.c.l.b16 %v4184
  %v4509 = vunpack.c.h.b16 %v4184
  %v4510 = vunpack.c.l.b16 %v4185
  %v4511 = vunpack.c.h.b16 %v4185
  %v4512 = vunpack.c.l.b16 %v4186
  %v4513 = vunpack.c.h.b16 %v4186
  %v4514 = vunpack.c.l.b16 %v4187
  %v4515 = vunpack.c.h.b16 %v4187
  %v4516 = vunpack.c.l.b16 %v4188
  %v4517 = vunpack.c.h.b16 %v4188
  %v4518 = vpack.c.b16 %v4508, %v4506
  %v4519 = vpack.c.b16 %v4509, %v4507
  %v4520 = vpack.c.b16 %v4512, %v4510
  %v4521 = vpack.c.b16 %v4513, %v4511
  %v4522 = vpack.c.b16 %v4516, %v4514
  %v4523 = vpack.c.b16 %v4517, %v4515
  %v4528 = vsel %vm4442, %v4519, 0
  %v4531 = vsel %vm4442, %v4521, 0
  %v4534 = vsel %vm4442, %v4523, 0
  %4536 = vmatpush.bf16.msra.mxu0 %v4196
  %4537 = vmatpush.bf16.msra.mxu0 %v4195
  %4538 = vmatpush.bf16.msra.mxu0 %v4194
  %4539 = vmatpush.bf16.msra.mxu0 %v4193
  %4540 = vmatpush.bf16.msra.mxu0 %v4192
  %4541 = vmatpush.bf16.msra.mxu0 %v4191
  %4542 = vmatpush.bf16.msra.mxu0 %v4190
  %4543 = vmatpush.bf16.msra.mxu0 %v4189
  %4544 = vmatmul.bf16.gmra.mxu0 %v4518
  %v4545 = vpop.f32.mrf.mxu0
  %v4546 = vadd.f32 %v4486, %v4545
  %v4547 = vpop.f32.mrf.mxu0
  %v4548 = vadd.f32 %v4488, %v4547
  %4549 = vmatmul.bf16.gmra.mxu0 %v4520
  %v4550 = vpop.f32.mrf.mxu0
  %v4551 = vadd.f32 %v4491, %v4550
  %v4552 = vpop.f32.mrf.mxu0
  %v4553 = vadd.f32 %v4493, %v4552
  %4554 = vmatmul.bf16.gmra.mxu0 %v4522
  %v4555 = vpop.f32.mrf.mxu0
  %v4556 = vadd.f32 %v4496, %v4555
  %v4557 = vpop.f32.mrf.mxu0
  %v4558 = vadd.f32 %v4498, %v4557
  %4559 = vdwg.mxu0
  %4560 = vmatpush.bf16.msra.mxu0 0
  %4561 = vmatpush.bf16.msra.mxu0 0
  %4562 = vmatpush.bf16.msra.mxu0 0
  %4563 = vmatpush.bf16.msra.mxu0 0
  %4564 = vmatpush.bf16.msra.mxu0 %v4200
  %4565 = vmatpush.bf16.msra.mxu0 %v4199
  %4566 = vmatpush.bf16.msra.mxu0 %v4198
  %4567 = vmatpush.bf16.msra.mxu0 %v4197
  %4568 = vmatmul.bf16.gmra.mxu0 %v4528
  %v4569 = vpop.f32.mrf.mxu0
  %v4570 = vadd.f32 %v4546, %v4569
  %v4571 = vpop.f32.mrf.mxu0
  %v4572 = vadd.f32 %v4548, %v4571
  %4573 = vmatmul.bf16.gmra.mxu0 %v4531
  %v4574 = vpop.f32.mrf.mxu0
  %v4575 = vadd.f32 %v4551, %v4574
  %v4576 = vpop.f32.mrf.mxu0
  %v4577 = vadd.f32 %v4553, %v4576
  %4578 = vmatmul.bf16.gmra.mxu0 %v4534
  %v4579 = vpop.f32.mrf.mxu0
  %v4580 = vadd.f32 %v4556, %v4579
  %v4581 = vpop.f32.mrf.mxu0
  %v4582 = vadd.f32 %v4558, %v4581
  %4583 = vdwg.mxu0
  %4584 = vrot.lane.b32.xlu0 %v3940, 85
  %v4585 = vpop.permute.xlu0 %4584
  %4586 = vrot.lane.b32.xlu0 %v3941, 85
  %v4587 = vpop.permute.xlu0 %4586
  %4588 = vrot.lane.b32.xlu0 %v3942, 85
  %v4589 = vpop.permute.xlu0 %4588
  %4590 = vrot.lane.b32.xlu0 %v3943, 85
  %v4591 = vpop.permute.xlu0 %4590
  %4592 = vrot.lane.b32.xlu0 %v3944, 85
  %v4593 = vpop.permute.xlu0 %4592
  %4594 = vrot.lane.b32.xlu0 %v3945, 85
  %v4595 = vpop.permute.xlu0 %4594
  %4596 = vrot.lane.b32.xlu0 %v3946, 85
  %v4597 = vpop.permute.xlu0 %4596
  %4598 = vrot.lane.b32.xlu0 %v3947, 85
  %v4599 = vpop.permute.xlu0 %4598
  %4600 = vrot.lane.b32.xlu0 %v3948, 85
  %v4601 = vpop.permute.xlu0 %4600
  %4602 = vrot.lane.b32.xlu0 %v3949, 85
  %v4603 = vpop.permute.xlu0 %4602
  %4604 = vrot.lane.b32.xlu0 %v3950, 85
  %v4605 = vpop.permute.xlu0 %4604
  %4606 = vrot.lane.b32.xlu0 %v3951, 85
  %v4607 = vpop.permute.xlu0 %4606
  %4608 = vrot.lane.b32.xlu0 %v3952, 85
  %v4609 = vpop.permute.xlu0 %4608
  %4610 = vrot.lane.b32.xlu0 %v3953, 85
  %v4611 = vpop.permute.xlu0 %4610
  %4612 = vrot.lane.b32.xlu0 %v3954, 85
  %v4613 = vpop.permute.xlu0 %4612
  %4614 = vrot.lane.b32.xlu0 %v3955, 85
  %v4615 = vpop.permute.xlu0 %4614
  %4616 = vrot.lane.b32.xlu0 %v3956, 85
  %v4617 = vpop.permute.xlu0 %4616
  %4618 = vrot.lane.b32.xlu0 %v3957, 85
  %v4619 = vpop.permute.xlu0 %4618
  %4620 = vrot.lane.b32.xlu0 %v3958, 85
  %v4621 = vpop.permute.xlu0 %4620
  %4622 = vrot.lane.b32.xlu0 %v3959, 85
  %v4623 = vpop.permute.xlu0 %4622
  %4624 = vrot.lane.b32.xlu0 %v3960, 85
  %v4625 = vpop.permute.xlu0 %4624
  %4626 = vrot.lane.b32.xlu0 %v3961, 85
  %v4627 = vpop.permute.xlu0 %4626
  %4628 = vrot.lane.b32.xlu0 %v3962, 85
  %v4629 = vpop.permute.xlu0 %4628
  %4630 = vrot.lane.b32.xlu0 %v3963, 85
  %v4631 = vpop.permute.xlu0 %4630
  %4656 = vrot.lane.b32.xlu0 %v3940, 6
  %v4657 = vpop.permute.xlu0 %4656
  %4658 = vrot.lane.b32.xlu0 %v3941, 6
  %v4659 = vpop.permute.xlu0 %4658
  %4660 = vrot.lane.b32.xlu0 %v3942, 6
  %v4661 = vpop.permute.xlu0 %4660
  %4662 = vrot.lane.b32.xlu0 %v3943, 6
  %v4663 = vpop.permute.xlu0 %4662
  %4664 = vrot.lane.b32.xlu0 %v3944, 6
  %v4665 = vpop.permute.xlu0 %4664
  %4666 = vrot.lane.b32.xlu0 %v3945, 6
  %v4667 = vpop.permute.xlu0 %4666
  %4668 = vrot.lane.b32.xlu0 %v3946, 6
  %v4669 = vpop.permute.xlu0 %4668
  %4670 = vrot.lane.b32.xlu0 %v3947, 6
  %v4671 = vpop.permute.xlu0 %4670
  %4672 = vrot.lane.b32.xlu0 %v3948, 6
  %v4673 = vpop.permute.xlu0 %4672
  %4674 = vrot.lane.b32.xlu0 %v3949, 6
  %v4675 = vpop.permute.xlu0 %4674
  %4676 = vrot.lane.b32.xlu0 %v3950, 6
  %v4677 = vpop.permute.xlu0 %4676
  %4678 = vrot.lane.b32.xlu0 %v3951, 6
  %v4679 = vpop.permute.xlu0 %4678
  %4680 = vrot.lane.b32.xlu0 %v3952, 6
  %v4681 = vpop.permute.xlu0 %4680
  %4682 = vrot.lane.b32.xlu0 %v3953, 6
  %v4683 = vpop.permute.xlu0 %4682
  %4684 = vrot.lane.b32.xlu0 %v3954, 6
  %v4685 = vpop.permute.xlu0 %4684
  %4686 = vrot.lane.b32.xlu0 %v3955, 6
  %v4687 = vpop.permute.xlu0 %4686
  %4688 = vrot.lane.b32.xlu0 %v3956, 6
  %v4689 = vpop.permute.xlu0 %4688
  %4690 = vrot.lane.b32.xlu0 %v3957, 6
  %v4691 = vpop.permute.xlu0 %4690
  %4692 = vrot.lane.b32.xlu0 %v3958, 6
  %v4693 = vpop.permute.xlu0 %4692
  %4694 = vrot.lane.b32.xlu0 %v3959, 6
  %v4695 = vpop.permute.xlu0 %4694
  %4696 = vrot.lane.b32.xlu0 %v3960, 6
  %v4697 = vpop.permute.xlu0 %4696
  %4698 = vrot.lane.b32.xlu0 %v3961, 6
  %v4699 = vpop.permute.xlu0 %4698
  %4700 = vrot.lane.b32.xlu0 %v3962, 6
  %v4701 = vpop.permute.xlu0 %4700
  %4702 = vrot.lane.b32.xlu0 %v3963, 6
  %v4703 = vpop.permute.xlu0 %4702
  %vm4728 = vcmask 48128
  %v4729 = vsel %vm4728, %v4585, %v4657
  %v4730 = vsel %vm4728, %v4587, %v4659
  %v4731 = vsel %vm4728, %v4589, %v4661
  %v4732 = vsel %vm4728, %v4591, %v4663
  %v4733 = vsel %vm4728, %v4593, %v4665
  %v4734 = vsel %vm4728, %v4595, %v4667
  %v4735 = vsel %vm4728, %v4597, %v4669
  %v4736 = vsel %vm4728, %v4599, %v4671
  %v4737 = vsel %vm4728, %v4601, %v4673
  %v4738 = vsel %vm4728, %v4603, %v4675
  %v4739 = vsel %vm4728, %v4605, %v4677
  %v4740 = vsel %vm4728, %v4607, %v4679
  %v4741 = vsel %vm4728, %v4609, %v4681
  %v4742 = vsel %vm4728, %v4611, %v4683
  %v4743 = vsel %vm4728, %v4613, %v4685
  %v4744 = vsel %vm4728, %v4615, %v4687
  %v4745 = vsel %vm4728, %v4617, %v4689
  %v4746 = vsel %vm4728, %v4619, %v4691
  %v4747 = vsel %vm4728, %v4621, %v4693
  %v4748 = vsel %vm4728, %v4623, %v4695
  %v4749 = vsel %vm4728, %v4625, %v4697
  %v4750 = vsel %vm4728, %v4627, %v4699
  %v4751 = vsel %vm4728, %v4629, %v4701
  %v4752 = vsel %vm4728, %v4631, %v4703
  %v4753 = vld [vmem:[%s5 + $0x2] sm:$0x1]
  %v4754 = vperm.slane %v4753, 0
  %v4755 = vmul.f32 %v4729, %v4754
  %v4756 = vmul.f32 %v4730, %v4754
  %v4757 = vmul.f32 %v4731, %v4754
  %v4758 = vmul.f32 %v4732, %v4754
  %v4759 = vmul.f32 %v4733, %v4754
  %v4760 = vmul.f32 %v4734, %v4754
  %v4761 = vmul.f32 %v4735, %v4754
  %v4762 = vmul.f32 %v4736, %v4754
  %v4763 = vmul.f32 %v4737, %v4754
  %v4764 = vmul.f32 %v4738, %v4754
  %v4765 = vmul.f32 %v4739, %v4754
  %v4766 = vmul.f32 %v4740, %v4754
  %v4767 = vmul.f32 %v4741, %v4754
  %v4768 = vmul.f32 %v4742, %v4754
  %v4769 = vmul.f32 %v4743, %v4754
  %v4770 = vmul.f32 %v4744, %v4754
  %v4771 = vmul.f32 %v4745, %v4754
  %v4772 = vmul.f32 %v4746, %v4754
  %v4773 = vmul.f32 %v4747, %v4754
  %v4774 = vmul.f32 %v4748, %v4754
  %v4775 = vmul.f32 %v4749, %v4754
  %v4776 = vmul.f32 %v4750, %v4754
  %v4777 = vmul.f32 %v4751, %v4754
  %v4778 = vmul.f32 %v4752, %v4754
  %s4779 = scalar_lea.vmem %s4, 96
  %v4780 = vld [vmem:[%s4779] sm:$0xff]
  %v4781 = vld [vmem:[%s4779 + $0x8] sm:$0xff]
  %v4782 = vld [vmem:[%s4779 + $0x10] sm:$0xff]
  %v4783 = vld [vmem:[%s4779 + $0x18] sm:$0xff]
  %v4784 = vld [vmem:[%s4779 + $0x20] sm:$0xff]
  %v4785 = vld [vmem:[%s4779 + $0x28] sm:$0xff]
  %v4786 = vpack.c.bf16 %v4756, %v4755
  %v4787 = vpack.c.bf16 %v4758, %v4757
  %v4788 = vpack.c.bf16 %v4760, %v4759
  %v4789 = vpack.c.bf16 %v4762, %v4761
  %v4790 = vpack.c.bf16 %v4764, %v4763
  %v4791 = vpack.c.bf16 %v4766, %v4765
  %v4792 = vpack.c.bf16 %v4768, %v4767
  %v4793 = vpack.c.bf16 %v4770, %v4769
  %v4794 = vpack.c.bf16 %v4772, %v4771
  %v4795 = vpack.c.bf16 %v4774, %v4773
  %v4796 = vpack.c.bf16 %v4776, %v4775
  %v4797 = vpack.c.bf16 %v4778, %v4777
  %v4804 = vunpack.c.l.b16 %v4780
  %v4805 = vunpack.c.h.b16 %v4780
  %v4806 = vunpack.c.l.b16 %v4781
  %v4807 = vunpack.c.h.b16 %v4781
  %v4808 = vunpack.c.l.b16 %v4782
  %v4809 = vunpack.c.h.b16 %v4782
  %v4810 = vunpack.c.l.b16 %v4783
  %v4811 = vunpack.c.h.b16 %v4783
  %v4812 = vunpack.c.l.b16 %v4784
  %v4813 = vunpack.c.h.b16 %v4784
  %v4814 = vunpack.c.l.b16 %v4785
  %v4815 = vunpack.c.h.b16 %v4785
  %v4816 = vpack.c.b16 %v4806, %v4804
  %v4817 = vpack.c.b16 %v4807, %v4805
  %v4818 = vpack.c.b16 %v4810, %v4808
  %v4819 = vpack.c.b16 %v4811, %v4809
  %v4820 = vpack.c.b16 %v4814, %v4812
  %v4821 = vpack.c.b16 %v4815, %v4813
  %v4826 = vsel %vm4442, %v4817, 0
  %v4829 = vsel %vm4442, %v4819, 0
  %v4832 = vsel %vm4442, %v4821, 0
  %4834 = vmatpush.bf16.msra.mxu0 %v4793
  %4835 = vmatpush.bf16.msra.mxu0 %v4792
  %4836 = vmatpush.bf16.msra.mxu0 %v4791
  %4837 = vmatpush.bf16.msra.mxu0 %v4790
  %4838 = vmatpush.bf16.msra.mxu0 %v4789
  %4839 = vmatpush.bf16.msra.mxu0 %v4788
  %4840 = vmatpush.bf16.msra.mxu0 %v4787
  %4841 = vmatpush.bf16.msra.mxu0 %v4786
  %4842 = vmatmul.bf16.gmra.mxu0 %v4816
  %v4843 = vpop.f32.mrf.mxu0
  %v4844 = vadd.f32 0.0, %v4843
  %v4845 = vpop.f32.mrf.mxu0
  %v4846 = vadd.f32 0.0, %v4845
  %4847 = vmatmul.bf16.gmra.mxu0 %v4818
  %v4848 = vpop.f32.mrf.mxu0
  %v4849 = vadd.f32 0.0, %v4848
  %v4850 = vpop.f32.mrf.mxu0
  %v4851 = vadd.f32 0.0, %v4850
  %4852 = vmatmul.bf16.gmra.mxu0 %v4820
  %v4853 = vpop.f32.mrf.mxu0
  %v4854 = vadd.f32 0.0, %v4853
  %v4855 = vpop.f32.mrf.mxu0
  %v4856 = vadd.f32 0.0, %v4855
  %4857 = vdwg.mxu0
  %4858 = vmatpush.bf16.msra.mxu0 0
  %4859 = vmatpush.bf16.msra.mxu0 0
  %4860 = vmatpush.bf16.msra.mxu0 0
  %4861 = vmatpush.bf16.msra.mxu0 0
  %4862 = vmatpush.bf16.msra.mxu0 %v4797
  %4863 = vmatpush.bf16.msra.mxu0 %v4796
  %4864 = vmatpush.bf16.msra.mxu0 %v4795
  %4865 = vmatpush.bf16.msra.mxu0 %v4794
  %4866 = vmatmul.bf16.gmra.mxu0 %v4826
  %v4867 = vpop.f32.mrf.mxu0
  %v4868 = vadd.f32 %v4844, %v4867
  %v4869 = vpop.f32.mrf.mxu0
  %v4870 = vadd.f32 %v4846, %v4869
  %4871 = vmatmul.bf16.gmra.mxu0 %v4829
  %v4872 = vpop.f32.mrf.mxu0
  %v4873 = vadd.f32 %v4849, %v4872
  %v4874 = vpop.f32.mrf.mxu0
  %v4875 = vadd.f32 %v4851, %v4874
  %4876 = vmatmul.bf16.gmra.mxu0 %v4832
  %v4877 = vpop.f32.mrf.mxu0
  %v4878 = vadd.f32 %v4854, %v4877
  %v4879 = vpop.f32.mrf.mxu0
  %v4880 = vadd.f32 %v4856, %v4879
  %4881 = vdwg.mxu0
  %v4882 = vadd.f32 %v4570, %v4868
  %v4883 = vadd.f32 %v4572, %v4870
  %v4884 = vadd.f32 %v4575, %v4873
  %v4885 = vadd.f32 %v4577, %v4875
  %v4886 = vadd.f32 %v4580, %v4878
  %v4887 = vadd.f32 %v4582, %v4880
  %4888 = vrot.lane.b32.xlu0 %v3940, 80
  %v4889 = vpop.permute.xlu0 %4888
  %4890 = vrot.lane.b32.xlu0 %v3941, 80
  %v4891 = vpop.permute.xlu0 %4890
  %4892 = vrot.lane.b32.xlu0 %v3942, 80
  %v4893 = vpop.permute.xlu0 %4892
  %4894 = vrot.lane.b32.xlu0 %v3943, 80
  %v4895 = vpop.permute.xlu0 %4894
  %4896 = vrot.lane.b32.xlu0 %v3944, 80
  %v4897 = vpop.permute.xlu0 %4896
  %4898 = vrot.lane.b32.xlu0 %v3945, 80
  %v4899 = vpop.permute.xlu0 %4898
  %4900 = vrot.lane.b32.xlu0 %v3946, 80
  %v4901 = vpop.permute.xlu0 %4900
  %4902 = vrot.lane.b32.xlu0 %v3947, 80
  %v4903 = vpop.permute.xlu0 %4902
  %4904 = vrot.lane.b32.xlu0 %v3948, 80
  %v4905 = vpop.permute.xlu0 %4904
  %4906 = vrot.lane.b32.xlu0 %v3949, 80
  %v4907 = vpop.permute.xlu0 %4906
  %4908 = vrot.lane.b32.xlu0 %v3950, 80
  %v4909 = vpop.permute.xlu0 %4908
  %4910 = vrot.lane.b32.xlu0 %v3951, 80
  %v4911 = vpop.permute.xlu0 %4910
  %4912 = vrot.lane.b32.xlu0 %v3952, 80
  %v4913 = vpop.permute.xlu0 %4912
  %4914 = vrot.lane.b32.xlu0 %v3953, 80
  %v4915 = vpop.permute.xlu0 %4914
  %4916 = vrot.lane.b32.xlu0 %v3954, 80
  %v4917 = vpop.permute.xlu0 %4916
  %4918 = vrot.lane.b32.xlu0 %v3955, 80
  %v4919 = vpop.permute.xlu0 %4918
  %4920 = vrot.lane.b32.xlu0 %v3956, 80
  %v4921 = vpop.permute.xlu0 %4920
  %4922 = vrot.lane.b32.xlu0 %v3957, 80
  %v4923 = vpop.permute.xlu0 %4922
  %4924 = vrot.lane.b32.xlu0 %v3958, 80
  %v4925 = vpop.permute.xlu0 %4924
  %4926 = vrot.lane.b32.xlu0 %v3959, 80
  %v4927 = vpop.permute.xlu0 %4926
  %4928 = vrot.lane.b32.xlu0 %v3960, 80
  %v4929 = vpop.permute.xlu0 %4928
  %4930 = vrot.lane.b32.xlu0 %v3961, 80
  %v4931 = vpop.permute.xlu0 %4930
  %4932 = vrot.lane.b32.xlu0 %v3962, 80
  %v4933 = vpop.permute.xlu0 %4932
  %4934 = vrot.lane.b32.xlu0 %v3963, 80
  %v4935 = vpop.permute.xlu0 %4934
  %4960 = vrot.lane.b32.xlu0 %v3940, 1
  %v4961 = vpop.permute.xlu0 %4960
  %4962 = vrot.lane.b32.xlu0 %v3941, 1
  %v4963 = vpop.permute.xlu0 %4962
  %4964 = vrot.lane.b32.xlu0 %v3942, 1
  %v4965 = vpop.permute.xlu0 %4964
  %4966 = vrot.lane.b32.xlu0 %v3943, 1
  %v4967 = vpop.permute.xlu0 %4966
  %4968 = vrot.lane.b32.xlu0 %v3944, 1
  %v4969 = vpop.permute.xlu0 %4968
  %4970 = vrot.lane.b32.xlu0 %v3945, 1
  %v4971 = vpop.permute.xlu0 %4970
  %4972 = vrot.lane.b32.xlu0 %v3946, 1
  %v4973 = vpop.permute.xlu0 %4972
  %4974 = vrot.lane.b32.xlu0 %v3947, 1
  %v4975 = vpop.permute.xlu0 %4974
  %4976 = vrot.lane.b32.xlu0 %v3948, 1
  %v4977 = vpop.permute.xlu0 %4976
  %4978 = vrot.lane.b32.xlu0 %v3949, 1
  %v4979 = vpop.permute.xlu0 %4978
  %4980 = vrot.lane.b32.xlu0 %v3950, 1
  %v4981 = vpop.permute.xlu0 %4980
  %4982 = vrot.lane.b32.xlu0 %v3951, 1
  %v4983 = vpop.permute.xlu0 %4982
  %4984 = vrot.lane.b32.xlu0 %v3952, 1
  %v4985 = vpop.permute.xlu0 %4984
  %4986 = vrot.lane.b32.xlu0 %v3953, 1
  %v4987 = vpop.permute.xlu0 %4986
  %4988 = vrot.lane.b32.xlu0 %v3954, 1
  %v4989 = vpop.permute.xlu0 %4988
  %4990 = vrot.lane.b32.xlu0 %v3955, 1
  %v4991 = vpop.permute.xlu0 %4990
  %4992 = vrot.lane.b32.xlu0 %v3956, 1
  %v4993 = vpop.permute.xlu0 %4992
  %4994 = vrot.lane.b32.xlu0 %v3957, 1
  %v4995 = vpop.permute.xlu0 %4994
  %4996 = vrot.lane.b32.xlu0 %v3958, 1
  %v4997 = vpop.permute.xlu0 %4996
  %4998 = vrot.lane.b32.xlu0 %v3959, 1
  %v4999 = vpop.permute.xlu0 %4998
  %5000 = vrot.lane.b32.xlu0 %v3960, 1
  %v5001 = vpop.permute.xlu0 %5000
  %5002 = vrot.lane.b32.xlu0 %v3961, 1
  %v5003 = vpop.permute.xlu0 %5002
  %5004 = vrot.lane.b32.xlu0 %v3962, 1
  %v5005 = vpop.permute.xlu0 %5004
  %5006 = vrot.lane.b32.xlu0 %v3963, 1
  %v5007 = vpop.permute.xlu0 %5006
  %vm5032 = vcmask 7168
  %v5033 = vsel %vm5032, %v4889, %v4961
  %v5034 = vsel %vm5032, %v4891, %v4963
  %v5035 = vsel %vm5032, %v4893, %v4965
  %v5036 = vsel %vm5032, %v4895, %v4967
  %v5037 = vsel %vm5032, %v4897, %v4969
  %v5038 = vsel %vm5032, %v4899, %v4971
  %v5039 = vsel %vm5032, %v4901, %v4973
  %v5040 = vsel %vm5032, %v4903, %v4975
  %v5041 = vsel %vm5032, %v4905, %v4977
  %v5042 = vsel %vm5032, %v4907, %v4979
  %v5043 = vsel %vm5032, %v4909, %v4981
  %v5044 = vsel %vm5032, %v4911, %v4983
  %v5045 = vsel %vm5032, %v4913, %v4985
  %v5046 = vsel %vm5032, %v4915, %v4987
  %v5047 = vsel %vm5032, %v4917, %v4989
  %v5048 = vsel %vm5032, %v4919, %v4991
  %v5049 = vsel %vm5032, %v4921, %v4993
  %v5050 = vsel %vm5032, %v4923, %v4995
  %v5051 = vsel %vm5032, %v4925, %v4997
  %v5052 = vsel %vm5032, %v4927, %v4999
  %v5053 = vsel %vm5032, %v4929, %v5001
  %v5054 = vsel %vm5032, %v4931, %v5003
  %v5055 = vsel %vm5032, %v4933, %v5005
  %v5056 = vsel %vm5032, %v4935, %v5007
  %v5057 = vld [vmem:[%s5 + $0x3] sm:$0x1]
  %v5058 = vperm.slane %v5057, 0
  %v5059 = vmul.f32 %v5033, %v5058
  %v5060 = vmul.f32 %v5034, %v5058
  %v5061 = vmul.f32 %v5035, %v5058
  %v5062 = vmul.f32 %v5036, %v5058
  %v5063 = vmul.f32 %v5037, %v5058
  %v5064 = vmul.f32 %v5038, %v5058
  %v5065 = vmul.f32 %v5039, %v5058
  %v5066 = vmul.f32 %v5040, %v5058
  %v5067 = vmul.f32 %v5041, %v5058
  %v5068 = vmul.f32 %v5042, %v5058
  %v5069 = vmul.f32 %v5043, %v5058
  %v5070 = vmul.f32 %v5044, %v5058
  %v5071 = vmul.f32 %v5045, %v5058
  %v5072 = vmul.f32 %v5046, %v5058
  %v5073 = vmul.f32 %v5047, %v5058
  %v5074 = vmul.f32 %v5048, %v5058
  %v5075 = vmul.f32 %v5049, %v5058
  %v5076 = vmul.f32 %v5050, %v5058
  %v5077 = vmul.f32 %v5051, %v5058
  %v5078 = vmul.f32 %v5052, %v5058
  %v5079 = vmul.f32 %v5053, %v5058
  %v5080 = vmul.f32 %v5054, %v5058
  %v5081 = vmul.f32 %v5055, %v5058
  %v5082 = vmul.f32 %v5056, %v5058
  %s5083 = scalar_lea.vmem %s4, 144
  %v5084 = vld [vmem:[%s5083] sm:$0xff]
  %v5085 = vld [vmem:[%s5083 + $0x8] sm:$0xff]
  %v5086 = vld [vmem:[%s5083 + $0x10] sm:$0xff]
  %v5087 = vld [vmem:[%s5083 + $0x18] sm:$0xff]
  %v5088 = vld [vmem:[%s5083 + $0x20] sm:$0xff]
  %v5089 = vld [vmem:[%s5083 + $0x28] sm:$0xff]
  %v5090 = vpack.c.bf16 %v5060, %v5059
  %v5091 = vpack.c.bf16 %v5062, %v5061
  %v5092 = vpack.c.bf16 %v5064, %v5063
  %v5093 = vpack.c.bf16 %v5066, %v5065
  %v5094 = vpack.c.bf16 %v5068, %v5067
  %v5095 = vpack.c.bf16 %v5070, %v5069
  %v5096 = vpack.c.bf16 %v5072, %v5071
  %v5097 = vpack.c.bf16 %v5074, %v5073
  %v5098 = vpack.c.bf16 %v5076, %v5075
  %v5099 = vpack.c.bf16 %v5078, %v5077
  %v5100 = vpack.c.bf16 %v5080, %v5079
  %v5101 = vpack.c.bf16 %v5082, %v5081
  %v5108 = vunpack.c.l.b16 %v5084
  %v5109 = vunpack.c.h.b16 %v5084
  %v5110 = vunpack.c.l.b16 %v5085
  %v5111 = vunpack.c.h.b16 %v5085
  %v5112 = vunpack.c.l.b16 %v5086
  %v5113 = vunpack.c.h.b16 %v5086
  %v5114 = vunpack.c.l.b16 %v5087
  %v5115 = vunpack.c.h.b16 %v5087
  %v5116 = vunpack.c.l.b16 %v5088
  %v5117 = vunpack.c.h.b16 %v5088
  %v5118 = vunpack.c.l.b16 %v5089
  %v5119 = vunpack.c.h.b16 %v5089
  %v5120 = vpack.c.b16 %v5110, %v5108
  %v5121 = vpack.c.b16 %v5111, %v5109
  %v5122 = vpack.c.b16 %v5114, %v5112
  %v5123 = vpack.c.b16 %v5115, %v5113
  %v5124 = vpack.c.b16 %v5118, %v5116
  %v5125 = vpack.c.b16 %v5119, %v5117
  %v5130 = vsel %vm4442, %v5121, 0
  %v5133 = vsel %vm4442, %v5123, 0
  %v5136 = vsel %vm4442, %v5125, 0
  %5138 = vmatpush.bf16.msra.mxu0 %v5097
  %5139 = vmatpush.bf16.msra.mxu0 %v5096
  %5140 = vmatpush.bf16.msra.mxu0 %v5095
  %5141 = vmatpush.bf16.msra.mxu0 %v5094
  %5142 = vmatpush.bf16.msra.mxu0 %v5093
  %5143 = vmatpush.bf16.msra.mxu0 %v5092
  %5144 = vmatpush.bf16.msra.mxu0 %v5091
  %5145 = vmatpush.bf16.msra.mxu0 %v5090
  %5146 = vmatmul.bf16.gmra.mxu0 %v5120
  %v5147 = vpop.f32.mrf.mxu0
  %v5148 = vadd.f32 0.0, %v5147
  %v5149 = vpop.f32.mrf.mxu0
  %v5150 = vadd.f32 0.0, %v5149
  %5151 = vmatmul.bf16.gmra.mxu0 %v5122
  %v5152 = vpop.f32.mrf.mxu0
  %v5153 = vadd.f32 0.0, %v5152
  %v5154 = vpop.f32.mrf.mxu0
  %v5155 = vadd.f32 0.0, %v5154
  %5156 = vmatmul.bf16.gmra.mxu0 %v5124
  %v5157 = vpop.f32.mrf.mxu0
  %v5158 = vadd.f32 0.0, %v5157
  %v5159 = vpop.f32.mrf.mxu0
  %v5160 = vadd.f32 0.0, %v5159
  %5161 = vdwg.mxu0
  %5162 = vmatpush.bf16.msra.mxu0 0
  %5163 = vmatpush.bf16.msra.mxu0 0
  %5164 = vmatpush.bf16.msra.mxu0 0
  %5165 = vmatpush.bf16.msra.mxu0 0
  %5166 = vmatpush.bf16.msra.mxu0 %v5101
  %5167 = vmatpush.bf16.msra.mxu0 %v5100
  %5168 = vmatpush.bf16.msra.mxu0 %v5099
  %5169 = vmatpush.bf16.msra.mxu0 %v5098
  %5170 = vmatmul.bf16.gmra.mxu0 %v5130
  %v5171 = vpop.f32.mrf.mxu0
  %v5172 = vadd.f32 %v5148, %v5171
  %v5173 = vpop.f32.mrf.mxu0
  %v5174 = vadd.f32 %v5150, %v5173
  %5175 = vmatmul.bf16.gmra.mxu0 %v5133
  %v5176 = vpop.f32.mrf.mxu0
  %v5177 = vadd.f32 %v5153, %v5176
  %v5178 = vpop.f32.mrf.mxu0
  %v5179 = vadd.f32 %v5155, %v5178
  %5180 = vmatmul.bf16.gmra.mxu0 %v5136
  %v5181 = vpop.f32.mrf.mxu0
  %v5182 = vadd.f32 %v5158, %v5181
  %v5183 = vpop.f32.mrf.mxu0
  %v5184 = vadd.f32 %v5160, %v5183
  %5185 = vdwg.mxu0
  %v5186 = vadd.f32 %v4882, %v5172
  %v5187 = vadd.f32 %v4883, %v5174
  %v5188 = vadd.f32 %v4884, %v5177
  %v5189 = vadd.f32 %v4885, %v5179
  %v5190 = vadd.f32 %v4886, %v5182
  %v5191 = vadd.f32 %v4887, %v5184
  %s5192 = scalar_lea.vmem %s4, 192
  %v5193 = vld [vmem:[%s5192] sm:$0xff]
  %v5194 = vld [vmem:[%s5192 + $0x8] sm:$0xff]
  %v5195 = vld [vmem:[%s5192 + $0x10] sm:$0xff]
  %v5196 = vld [vmem:[%s5192 + $0x18] sm:$0xff]
  %v5197 = vld [vmem:[%s5192 + $0x20] sm:$0xff]
  %v5198 = vld [vmem:[%s5192 + $0x28] sm:$0xff]
  %v5199 = vpack.c.bf16 %v3941, %v3940
  %v5200 = vpack.c.bf16 %v3943, %v3942
  %v5201 = vpack.c.bf16 %v3945, %v3944
  %v5202 = vpack.c.bf16 %v3947, %v3946
  %v5203 = vpack.c.bf16 %v3949, %v3948
  %v5204 = vpack.c.bf16 %v3951, %v3950
  %v5205 = vpack.c.bf16 %v3953, %v3952
  %v5206 = vpack.c.bf16 %v3955, %v3954
  %v5207 = vpack.c.bf16 %v3957, %v3956
  %v5208 = vpack.c.bf16 %v3959, %v3958
  %v5209 = vpack.c.bf16 %v3961, %v3960
  %v5210 = vpack.c.bf16 %v3963, %v3962
  %v5217 = vunpack.c.l.b16 %v5193
  %v5218 = vunpack.c.h.b16 %v5193
  %v5219 = vunpack.c.l.b16 %v5194
  %v5220 = vunpack.c.h.b16 %v5194
  %v5221 = vunpack.c.l.b16 %v5195
  %v5222 = vunpack.c.h.b16 %v5195
  %v5223 = vunpack.c.l.b16 %v5196
  %v5224 = vunpack.c.h.b16 %v5196
  %v5225 = vunpack.c.l.b16 %v5197
  %v5226 = vunpack.c.h.b16 %v5197
  %v5227 = vunpack.c.l.b16 %v5198
  %v5228 = vunpack.c.h.b16 %v5198
  %v5229 = vpack.c.b16 %v5219, %v5217
  %v5230 = vpack.c.b16 %v5220, %v5218
  %v5231 = vpack.c.b16 %v5223, %v5221
  %v5232 = vpack.c.b16 %v5224, %v5222
  %v5233 = vpack.c.b16 %v5227, %v5225
  %v5234 = vpack.c.b16 %v5228, %v5226
  %v5239 = vsel %vm4442, %v5230, 0
  %v5242 = vsel %vm4442, %v5232, 0
  %v5245 = vsel %vm4442, %v5234, 0
  %5247 = vmatpush.bf16.msra.mxu0 %v5206
  %5248 = vmatpush.bf16.msra.mxu0 %v5205
  %5249 = vmatpush.bf16.msra.mxu0 %v5204
  %5250 = vmatpush.bf16.msra.mxu0 %v5203
  %5251 = vmatpush.bf16.msra.mxu0 %v5202
  %5252 = vmatpush.bf16.msra.mxu0 %v5201
  %5253 = vmatpush.bf16.msra.mxu0 %v5200
  %5254 = vmatpush.bf16.msra.mxu0 %v5199
  %5255 = vmatmul.bf16.gmra.mxu0 %v5229
  %v5256 = vpop.f32.mrf.mxu0
  %v5257 = vadd.f32 0.0, %v5256
  %v5258 = vpop.f32.mrf.mxu0
  %v5259 = vadd.f32 0.0, %v5258
  %5260 = vmatmul.bf16.gmra.mxu0 %v5231
  %v5261 = vpop.f32.mrf.mxu0
  %v5262 = vadd.f32 0.0, %v5261
  %v5263 = vpop.f32.mrf.mxu0
  %v5264 = vadd.f32 0.0, %v5263
  %5265 = vmatmul.bf16.gmra.mxu0 %v5233
  %v5266 = vpop.f32.mrf.mxu0
  %v5267 = vadd.f32 0.0, %v5266
  %v5268 = vpop.f32.mrf.mxu0
  %v5269 = vadd.f32 0.0, %v5268
  %5270 = vdwg.mxu0
  %5271 = vmatpush.bf16.msra.mxu0 0
  %5272 = vmatpush.bf16.msra.mxu0 0
  %5273 = vmatpush.bf16.msra.mxu0 0
  %5274 = vmatpush.bf16.msra.mxu0 0
  %5275 = vmatpush.bf16.msra.mxu0 %v5210
  %5276 = vmatpush.bf16.msra.mxu0 %v5209
  %5277 = vmatpush.bf16.msra.mxu0 %v5208
  %5278 = vmatpush.bf16.msra.mxu0 %v5207
  %5279 = vmatmul.bf16.gmra.mxu0 %v5239
  %v5280 = vpop.f32.mrf.mxu0
  %v5281 = vadd.f32 %v5257, %v5280
  %v5282 = vpop.f32.mrf.mxu0
  %v5283 = vadd.f32 %v5259, %v5282
  %5284 = vmatmul.bf16.gmra.mxu0 %v5242
  %v5285 = vpop.f32.mrf.mxu0
  %v5286 = vadd.f32 %v5262, %v5285
  %v5287 = vpop.f32.mrf.mxu0
  %v5288 = vadd.f32 %v5264, %v5287
  %5289 = vmatmul.bf16.gmra.mxu0 %v5245
  %v5290 = vpop.f32.mrf.mxu0
  %v5291 = vadd.f32 %v5267, %v5290
  %v5292 = vpop.f32.mrf.mxu0
  %v5293 = vadd.f32 %v5269, %v5292
  %5294 = vdwg.mxu0
  %v5295 = vadd.f32 %v5186, %v5281
  %v5296 = vadd.f32 %v5187, %v5283
  %v5297 = vadd.f32 %v5188, %v5286
  %v5298 = vadd.f32 %v5189, %v5288
  %v5299 = vadd.f32 %v5190, %v5291
  %v5300 = vadd.f32 %v5191, %v5293
  %5301 = vrot.lane.b32.xlu0 %v3940, 127
  %v5302 = vpop.permute.xlu0 %5301
  %5303 = vrot.lane.b32.xlu0 %v3941, 127
  %v5304 = vpop.permute.xlu0 %5303
  %5305 = vrot.lane.b32.xlu0 %v3942, 127
  %v5306 = vpop.permute.xlu0 %5305
  %5307 = vrot.lane.b32.xlu0 %v3943, 127
  %v5308 = vpop.permute.xlu0 %5307
  %5309 = vrot.lane.b32.xlu0 %v3944, 127
  %v5310 = vpop.permute.xlu0 %5309
  %5311 = vrot.lane.b32.xlu0 %v3945, 127
  %v5312 = vpop.permute.xlu0 %5311
  %5313 = vrot.lane.b32.xlu0 %v3946, 127
  %v5314 = vpop.permute.xlu0 %5313
  %5315 = vrot.lane.b32.xlu0 %v3947, 127
  %v5316 = vpop.permute.xlu0 %5315
  %5317 = vrot.lane.b32.xlu0 %v3948, 127
  %v5318 = vpop.permute.xlu0 %5317
  %5319 = vrot.lane.b32.xlu0 %v3949, 127
  %v5320 = vpop.permute.xlu0 %5319
  %5321 = vrot.lane.b32.xlu0 %v3950, 127
  %v5322 = vpop.permute.xlu0 %5321
  %5323 = vrot.lane.b32.xlu0 %v3951, 127
  %v5324 = vpop.permute.xlu0 %5323
  %5325 = vrot.lane.b32.xlu0 %v3952, 127
  %v5326 = vpop.permute.xlu0 %5325
  %5327 = vrot.lane.b32.xlu0 %v3953, 127
  %v5328 = vpop.permute.xlu0 %5327
  %5329 = vrot.lane.b32.xlu0 %v3954, 127
  %v5330 = vpop.permute.xlu0 %5329
  %5331 = vrot.lane.b32.xlu0 %v3955, 127
  %v5332 = vpop.permute.xlu0 %5331
  %5333 = vrot.lane.b32.xlu0 %v3956, 127
  %v5334 = vpop.permute.xlu0 %5333
  %5335 = vrot.lane.b32.xlu0 %v3957, 127
  %v5336 = vpop.permute.xlu0 %5335
  %5337 = vrot.lane.b32.xlu0 %v3958, 127
  %v5338 = vpop.permute.xlu0 %5337
  %5339 = vrot.lane.b32.xlu0 %v3959, 127
  %v5340 = vpop.permute.xlu0 %5339
  %5341 = vrot.lane.b32.xlu0 %v3960, 127
  %v5342 = vpop.permute.xlu0 %5341
  %5343 = vrot.lane.b32.xlu0 %v3961, 127
  %v5344 = vpop.permute.xlu0 %5343
  %5345 = vrot.lane.b32.xlu0 %v3962, 127
  %v5346 = vpop.permute.xlu0 %5345
  %5347 = vrot.lane.b32.xlu0 %v3963, 127
  %v5348 = vpop.permute.xlu0 %5347
  %5373 = vrot.lane.b32.xlu0 %v3940, 48
  %v5374 = vpop.permute.xlu0 %5373
  %5375 = vrot.lane.b32.xlu0 %v3941, 48
  %v5376 = vpop.permute.xlu0 %5375
  %5377 = vrot.lane.b32.xlu0 %v3942, 48
  %v5378 = vpop.permute.xlu0 %5377
  %5379 = vrot.lane.b32.xlu0 %v3943, 48
  %v5380 = vpop.permute.xlu0 %5379
  %5381 = vrot.lane.b32.xlu0 %v3944, 48
  %v5382 = vpop.permute.xlu0 %5381
  %5383 = vrot.lane.b32.xlu0 %v3945, 48
  %v5384 = vpop.permute.xlu0 %5383
  %5385 = vrot.lane.b32.xlu0 %v3946, 48
  %v5386 = vpop.permute.xlu0 %5385
  %5387 = vrot.lane.b32.xlu0 %v3947, 48
  %v5388 = vpop.permute.xlu0 %5387
  %5389 = vrot.lane.b32.xlu0 %v3948, 48
  %v5390 = vpop.permute.xlu0 %5389
  %5391 = vrot.lane.b32.xlu0 %v3949, 48
  %v5392 = vpop.permute.xlu0 %5391
  %5393 = vrot.lane.b32.xlu0 %v3950, 48
  %v5394 = vpop.permute.xlu0 %5393
  %5395 = vrot.lane.b32.xlu0 %v3951, 48
  %v5396 = vpop.permute.xlu0 %5395
  %5397 = vrot.lane.b32.xlu0 %v3952, 48
  %v5398 = vpop.permute.xlu0 %5397
  %5399 = vrot.lane.b32.xlu0 %v3953, 48
  %v5400 = vpop.permute.xlu0 %5399
  %5401 = vrot.lane.b32.xlu0 %v3954, 48
  %v5402 = vpop.permute.xlu0 %5401
  %5403 = vrot.lane.b32.xlu0 %v3955, 48
  %v5404 = vpop.permute.xlu0 %5403
  %5405 = vrot.lane.b32.xlu0 %v3956, 48
  %v5406 = vpop.permute.xlu0 %5405
  %5407 = vrot.lane.b32.xlu0 %v3957, 48
  %v5408 = vpop.permute.xlu0 %5407
  %5409 = vrot.lane.b32.xlu0 %v3958, 48
  %v5410 = vpop.permute.xlu0 %5409
  %5411 = vrot.lane.b32.xlu0 %v3959, 48
  %v5412 = vpop.permute.xlu0 %5411
  %5413 = vrot.lane.b32.xlu0 %v3960, 48
  %v5414 = vpop.permute.xlu0 %5413
  %5415 = vrot.lane.b32.xlu0 %v3961, 48
  %v5416 = vpop.permute.xlu0 %5415
  %5417 = vrot.lane.b32.xlu0 %v3962, 48
  %v5418 = vpop.permute.xlu0 %5417
  %5419 = vrot.lane.b32.xlu0 %v3963, 48
  %v5420 = vpop.permute.xlu0 %5419
  %vm5445 = vcmask 392192
  %v5446 = vsel %vm5445, %v5302, %v5374
  %v5447 = vsel %vm5445, %v5304, %v5376
  %v5448 = vsel %vm5445, %v5306, %v5378
  %v5449 = vsel %vm5445, %v5308, %v5380
  %v5450 = vsel %vm5445, %v5310, %v5382
  %v5451 = vsel %vm5445, %v5312, %v5384
  %v5452 = vsel %vm5445, %v5314, %v5386
  %v5453 = vsel %vm5445, %v5316, %v5388
  %v5454 = vsel %vm5445, %v5318, %v5390
  %v5455 = vsel %vm5445, %v5320, %v5392
  %v5456 = vsel %vm5445, %v5322, %v5394
  %v5457 = vsel %vm5445, %v5324, %v5396
  %v5458 = vsel %vm5445, %v5326, %v5398
  %v5459 = vsel %vm5445, %v5328, %v5400
  %v5460 = vsel %vm5445, %v5330, %v5402
  %v5461 = vsel %vm5445, %v5332, %v5404
  %v5462 = vsel %vm5445, %v5334, %v5406
  %v5463 = vsel %vm5445, %v5336, %v5408
  %v5464 = vsel %vm5445, %v5338, %v5410
  %v5465 = vsel %vm5445, %v5340, %v5412
  %v5466 = vsel %vm5445, %v5342, %v5414
  %v5467 = vsel %vm5445, %v5344, %v5416
  %v5468 = vsel %vm5445, %v5346, %v5418
  %v5469 = vsel %vm5445, %v5348, %v5420
  %v5470 = vld [vmem:[%s5 + $0x5] sm:$0x1]
  %v5471 = vperm.slane %v5470, 0
  %v5472 = vmul.f32 %v5446, %v5471
  %v5473 = vmul.f32 %v5447, %v5471
  %v5474 = vmul.f32 %v5448, %v5471
  %v5475 = vmul.f32 %v5449, %v5471
  %v5476 = vmul.f32 %v5450, %v5471
  %v5477 = vmul.f32 %v5451, %v5471
  %v5478 = vmul.f32 %v5452, %v5471
  %v5479 = vmul.f32 %v5453, %v5471
  %v5480 = vmul.f32 %v5454, %v5471
  %v5481 = vmul.f32 %v5455, %v5471
  %v5482 = vmul.f32 %v5456, %v5471
  %v5483 = vmul.f32 %v5457, %v5471
  %v5484 = vmul.f32 %v5458, %v5471
  %v5485 = vmul.f32 %v5459, %v5471
  %v5486 = vmul.f32 %v5460, %v5471
  %v5487 = vmul.f32 %v5461, %v5471
  %v5488 = vmul.f32 %v5462, %v5471
  %v5489 = vmul.f32 %v5463, %v5471
  %v5490 = vmul.f32 %v5464, %v5471
  %v5491 = vmul.f32 %v5465, %v5471
  %v5492 = vmul.f32 %v5466, %v5471
  %v5493 = vmul.f32 %v5467, %v5471
  %v5494 = vmul.f32 %v5468, %v5471
  %v5495 = vmul.f32 %v5469, %v5471
  %s5496 = scalar_lea.vmem %s4, 240
  %v5497 = vld [vmem:[%s5496] sm:$0xff]
  %v5498 = vld [vmem:[%s5496 + $0x8] sm:$0xff]
  %v5499 = vld [vmem:[%s5496 + $0x10] sm:$0xff]
  %v5500 = vld [vmem:[%s5496 + $0x18] sm:$0xff]
  %v5501 = vld [vmem:[%s5496 + $0x20] sm:$0xff]
  %v5502 = vld [vmem:[%s5496 + $0x28] sm:$0xff]
  %v5503 = vpack.c.bf16 %v5473, %v5472
  %v5504 = vpack.c.bf16 %v5475, %v5474
  %v5505 = vpack.c.bf16 %v5477, %v5476
  %v5506 = vpack.c.bf16 %v5479, %v5478
  %v5507 = vpack.c.bf16 %v5481, %v5480
  %v5508 = vpack.c.bf16 %v5483, %v5482
  %v5509 = vpack.c.bf16 %v5485, %v5484
  %v5510 = vpack.c.bf16 %v5487, %v5486
  %v5511 = vpack.c.bf16 %v5489, %v5488
  %v5512 = vpack.c.bf16 %v5491, %v5490
  %v5513 = vpack.c.bf16 %v5493, %v5492
  %v5514 = vpack.c.bf16 %v5495, %v5494
  %v5521 = vunpack.c.l.b16 %v5497
  %v5522 = vunpack.c.h.b16 %v5497
  %v5523 = vunpack.c.l.b16 %v5498
  %v5524 = vunpack.c.h.b16 %v5498
  %v5525 = vunpack.c.l.b16 %v5499
  %v5526 = vunpack.c.h.b16 %v5499
  %v5527 = vunpack.c.l.b16 %v5500
  %v5528 = vunpack.c.h.b16 %v5500
  %v5529 = vunpack.c.l.b16 %v5501
  %v5530 = vunpack.c.h.b16 %v5501
  %v5531 = vunpack.c.l.b16 %v5502
  %v5532 = vunpack.c.h.b16 %v5502
  %v5533 = vpack.c.b16 %v5523, %v5521
  %v5534 = vpack.c.b16 %v5524, %v5522
  %v5535 = vpack.c.b16 %v5527, %v5525
  %v5536 = vpack.c.b16 %v5528, %v5526
  %v5537 = vpack.c.b16 %v5531, %v5529
  %v5538 = vpack.c.b16 %v5532, %v5530
  %v5543 = vsel %vm4442, %v5534, 0
  %v5546 = vsel %vm4442, %v5536, 0
  %v5549 = vsel %vm4442, %v5538, 0
  %5551 = vmatpush.bf16.msra.mxu0 %v5510
  %5552 = vmatpush.bf16.msra.mxu0 %v5509
  %5553 = vmatpush.bf16.msra.mxu0 %v5508
  %5554 = vmatpush.bf16.msra.mxu0 %v5507
  %5555 = vmatpush.bf16.msra.mxu0 %v5506
  %5556 = vmatpush.bf16.msra.mxu0 %v5505
  %5557 = vmatpush.bf16.msra.mxu0 %v5504
  %5558 = vmatpush.bf16.msra.mxu0 %v5503
  %5559 = vmatmul.bf16.gmra.mxu0 %v5533
  %v5560 = vpop.f32.mrf.mxu0
  %v5561 = vadd.f32 0.0, %v5560
  %v5562 = vpop.f32.mrf.mxu0
  %v5563 = vadd.f32 0.0, %v5562
  %5564 = vmatmul.bf16.gmra.mxu0 %v5535
  %v5565 = vpop.f32.mrf.mxu0
  %v5566 = vadd.f32 0.0, %v5565
  %v5567 = vpop.f32.mrf.mxu0
  %v5568 = vadd.f32 0.0, %v5567
  %5569 = vmatmul.bf16.gmra.mxu0 %v5537
  %v5570 = vpop.f32.mrf.mxu0
  %v5571 = vadd.f32 0.0, %v5570
  %v5572 = vpop.f32.mrf.mxu0
  %v5573 = vadd.f32 0.0, %v5572
  %5574 = vdwg.mxu0
  %5575 = vmatpush.bf16.msra.mxu0 0
  %5576 = vmatpush.bf16.msra.mxu0 0
  %5577 = vmatpush.bf16.msra.mxu0 0
  %5578 = vmatpush.bf16.msra.mxu0 0
  %5579 = vmatpush.bf16.msra.mxu0 %v5514
  %5580 = vmatpush.bf16.msra.mxu0 %v5513
  %5581 = vmatpush.bf16.msra.mxu0 %v5512
  %5582 = vmatpush.bf16.msra.mxu0 %v5511
  %5583 = vmatmul.bf16.gmra.mxu0 %v5543
  %v5584 = vpop.f32.mrf.mxu0
  %v5585 = vadd.f32 %v5561, %v5584
  %v5586 = vpop.f32.mrf.mxu0
  %v5587 = vadd.f32 %v5563, %v5586
  %5588 = vmatmul.bf16.gmra.mxu0 %v5546
  %v5589 = vpop.f32.mrf.mxu0
  %v5590 = vadd.f32 %v5566, %v5589
  %v5591 = vpop.f32.mrf.mxu0
  %v5592 = vadd.f32 %v5568, %v5591
  %5593 = vmatmul.bf16.gmra.mxu0 %v5549
  %v5594 = vpop.f32.mrf.mxu0
  %v5595 = vadd.f32 %v5571, %v5594
  %v5596 = vpop.f32.mrf.mxu0
  %v5597 = vadd.f32 %v5573, %v5596
  %5598 = vdwg.mxu0
  %v5599 = vadd.f32 %v5295, %v5585
  %v5600 = vadd.f32 %v5296, %v5587
  %v5601 = vadd.f32 %v5297, %v5590
  %v5602 = vadd.f32 %v5298, %v5592
  %v5603 = vadd.f32 %v5299, %v5595
  %v5604 = vadd.f32 %v5300, %v5597
  %5605 = vrot.lane.b32.xlu0 %v3940, 122
  %v5606 = vpop.permute.xlu0 %5605
  %5607 = vrot.lane.b32.xlu0 %v3941, 122
  %v5608 = vpop.permute.xlu0 %5607
  %5609 = vrot.lane.b32.xlu0 %v3942, 122
  %v5610 = vpop.permute.xlu0 %5609
  %5611 = vrot.lane.b32.xlu0 %v3943, 122
  %v5612 = vpop.permute.xlu0 %5611
  %5613 = vrot.lane.b32.xlu0 %v3944, 122
  %v5614 = vpop.permute.xlu0 %5613
  %5615 = vrot.lane.b32.xlu0 %v3945, 122
  %v5616 = vpop.permute.xlu0 %5615
  %5617 = vrot.lane.b32.xlu0 %v3946, 122
  %v5618 = vpop.permute.xlu0 %5617
  %5619 = vrot.lane.b32.xlu0 %v3947, 122
  %v5620 = vpop.permute.xlu0 %5619
  %5621 = vrot.lane.b32.xlu0 %v3948, 122
  %v5622 = vpop.permute.xlu0 %5621
  %5623 = vrot.lane.b32.xlu0 %v3949, 122
  %v5624 = vpop.permute.xlu0 %5623
  %5625 = vrot.lane.b32.xlu0 %v3950, 122
  %v5626 = vpop.permute.xlu0 %5625
  %5627 = vrot.lane.b32.xlu0 %v3951, 122
  %v5628 = vpop.permute.xlu0 %5627
  %5629 = vrot.lane.b32.xlu0 %v3952, 122
  %v5630 = vpop.permute.xlu0 %5629
  %5631 = vrot.lane.b32.xlu0 %v3953, 122
  %v5632 = vpop.permute.xlu0 %5631
  %5633 = vrot.lane.b32.xlu0 %v3954, 122
  %v5634 = vpop.permute.xlu0 %5633
  %5635 = vrot.lane.b32.xlu0 %v3955, 122
  %v5636 = vpop.permute.xlu0 %5635
  %5637 = vrot.lane.b32.xlu0 %v3956, 122
  %v5638 = vpop.permute.xlu0 %5637
  %5639 = vrot.lane.b32.xlu0 %v3957, 122
  %v5640 = vpop.permute.xlu0 %5639
  %5641 = vrot.lane.b32.xlu0 %v3958, 122
  %v5642 = vpop.permute.xlu0 %5641
  %5643 = vrot.lane.b32.xlu0 %v3959, 122
  %v5644 = vpop.permute.xlu0 %5643
  %5645 = vrot.lane.b32.xlu0 %v3960, 122
  %v5646 = vpop.permute.xlu0 %5645
  %5647 = vrot.lane.b32.xlu0 %v3961, 122
  %v5648 = vpop.permute.xlu0 %5647
  %5649 = vrot.lane.b32.xlu0 %v3962, 122
  %v5650 = vpop.permute.xlu0 %5649
  %5651 = vrot.lane.b32.xlu0 %v3963, 122
  %v5652 = vpop.permute.xlu0 %5651
  %5677 = vrot.lane.b32.xlu0 %v3940, 43
  %v5678 = vpop.permute.xlu0 %5677
  %5679 = vrot.lane.b32.xlu0 %v3941, 43
  %v5680 = vpop.permute.xlu0 %5679
  %5681 = vrot.lane.b32.xlu0 %v3942, 43
  %v5682 = vpop.permute.xlu0 %5681
  %5683 = vrot.lane.b32.xlu0 %v3943, 43
  %v5684 = vpop.permute.xlu0 %5683
  %5685 = vrot.lane.b32.xlu0 %v3944, 43
  %v5686 = vpop.permute.xlu0 %5685
  %5687 = vrot.lane.b32.xlu0 %v3945, 43
  %v5688 = vpop.permute.xlu0 %5687
  %5689 = vrot.lane.b32.xlu0 %v3946, 43
  %v5690 = vpop.permute.xlu0 %5689
  %5691 = vrot.lane.b32.xlu0 %v3947, 43
  %v5692 = vpop.permute.xlu0 %5691
  %5693 = vrot.lane.b32.xlu0 %v3948, 43
  %v5694 = vpop.permute.xlu0 %5693
  %5695 = vrot.lane.b32.xlu0 %v3949, 43
  %v5696 = vpop.permute.xlu0 %5695
  %5697 = vrot.lane.b32.xlu0 %v3950, 43
  %v5698 = vpop.permute.xlu0 %5697
  %5699 = vrot.lane.b32.xlu0 %v3951, 43
  %v5700 = vpop.permute.xlu0 %5699
  %5701 = vrot.lane.b32.xlu0 %v3952, 43
  %v5702 = vpop.permute.xlu0 %5701
  %5703 = vrot.lane.b32.xlu0 %v3953, 43
  %v5704 = vpop.permute.xlu0 %5703
  %5705 = vrot.lane.b32.xlu0 %v3954, 43
  %v5706 = vpop.permute.xlu0 %5705
  %5707 = vrot.lane.b32.xlu0 %v3955, 43
  %v5708 = vpop.permute.xlu0 %5707
  %5709 = vrot.lane.b32.xlu0 %v3956, 43
  %v5710 = vpop.permute.xlu0 %5709
  %5711 = vrot.lane.b32.xlu0 %v3957, 43
  %v5712 = vpop.permute.xlu0 %5711
  %5713 = vrot.lane.b32.xlu0 %v3958, 43
  %v5714 = vpop.permute.xlu0 %5713
  %5715 = vrot.lane.b32.xlu0 %v3959, 43
  %v5716 = vpop.permute.xlu0 %5715
  %5717 = vrot.lane.b32.xlu0 %v3960, 43
  %v5718 = vpop.permute.xlu0 %5717
  %5719 = vrot.lane.b32.xlu0 %v3961, 43
  %v5720 = vpop.permute.xlu0 %5719
  %5721 = vrot.lane.b32.xlu0 %v3962, 43
  %v5722 = vpop.permute.xlu0 %5721
  %5723 = vrot.lane.b32.xlu0 %v3963, 43
  %v5724 = vpop.permute.xlu0 %5723
  %vm5749 = vcmask 351232
  %v5750 = vsel %vm5749, %v5606, %v5678
  %v5751 = vsel %vm5749, %v5608, %v5680
  %v5752 = vsel %vm5749, %v5610, %v5682
  %v5753 = vsel %vm5749, %v5612, %v5684
  %v5754 = vsel %vm5749, %v5614, %v5686
  %v5755 = vsel %vm5749, %v5616, %v5688
  %v5756 = vsel %vm5749, %v5618, %v5690
  %v5757 = vsel %vm5749, %v5620, %v5692
  %v5758 = vsel %vm5749, %v5622, %v5694
  %v5759 = vsel %vm5749, %v5624, %v5696
  %v5760 = vsel %vm5749, %v5626, %v5698
  %v5761 = vsel %vm5749, %v5628, %v5700
  %v5762 = vsel %vm5749, %v5630, %v5702
  %v5763 = vsel %vm5749, %v5632, %v5704
  %v5764 = vsel %vm5749, %v5634, %v5706
  %v5765 = vsel %vm5749, %v5636, %v5708
  %v5766 = vsel %vm5749, %v5638, %v5710
  %v5767 = vsel %vm5749, %v5640, %v5712
  %v5768 = vsel %vm5749, %v5642, %v5714
  %v5769 = vsel %vm5749, %v5644, %v5716
  %v5770 = vsel %vm5749, %v5646, %v5718
  %v5771 = vsel %vm5749, %v5648, %v5720
  %v5772 = vsel %vm5749, %v5650, %v5722
  %v5773 = vsel %vm5749, %v5652, %v5724
  %v5774 = vld [vmem:[%s5 + $0x6] sm:$0x1]
  %v5775 = vperm.slane %v5774, 0
  %v5776 = vmul.f32 %v5750, %v5775
  %v5777 = vmul.f32 %v5751, %v5775
  %v5778 = vmul.f32 %v5752, %v5775
  %v5779 = vmul.f32 %v5753, %v5775
  %v5780 = vmul.f32 %v5754, %v5775
  %v5781 = vmul.f32 %v5755, %v5775
  %v5782 = vmul.f32 %v5756, %v5775
  %v5783 = vmul.f32 %v5757, %v5775
  %v5784 = vmul.f32 %v5758, %v5775
  %v5785 = vmul.f32 %v5759, %v5775
  %v5786 = vmul.f32 %v5760, %v5775
  %v5787 = vmul.f32 %v5761, %v5775
  %v5788 = vmul.f32 %v5762, %v5775
  %v5789 = vmul.f32 %v5763, %v5775
  %v5790 = vmul.f32 %v5764, %v5775
  %v5791 = vmul.f32 %v5765, %v5775
  %v5792 = vmul.f32 %v5766, %v5775
  %v5793 = vmul.f32 %v5767, %v5775
  %v5794 = vmul.f32 %v5768, %v5775
  %v5795 = vmul.f32 %v5769, %v5775
  %v5796 = vmul.f32 %v5770, %v5775
  %v5797 = vmul.f32 %v5771, %v5775
  %v5798 = vmul.f32 %v5772, %v5775
  %v5799 = vmul.f32 %v5773, %v5775
  %s5800 = scalar_lea.vmem %s4, 288
  %v5801 = vld [vmem:[%s5800] sm:$0xff]
  %v5802 = vld [vmem:[%s5800 + $0x8] sm:$0xff]
  %v5803 = vld [vmem:[%s5800 + $0x10] sm:$0xff]
  %v5804 = vld [vmem:[%s5800 + $0x18] sm:$0xff]
  %v5805 = vld [vmem:[%s5800 + $0x20] sm:$0xff]
  %v5806 = vld [vmem:[%s5800 + $0x28] sm:$0xff]
  %v5807 = vpack.c.bf16 %v5777, %v5776
  %v5808 = vpack.c.bf16 %v5779, %v5778
  %v5809 = vpack.c.bf16 %v5781, %v5780
  %v5810 = vpack.c.bf16 %v5783, %v5782
  %v5811 = vpack.c.bf16 %v5785, %v5784
  %v5812 = vpack.c.bf16 %v5787, %v5786
  %v5813 = vpack.c.bf16 %v5789, %v5788
  %v5814 = vpack.c.bf16 %v5791, %v5790
  %v5815 = vpack.c.bf16 %v5793, %v5792
  %v5816 = vpack.c.bf16 %v5795, %v5794
  %v5817 = vpack.c.bf16 %v5797, %v5796
  %v5818 = vpack.c.bf16 %v5799, %v5798
  %v5825 = vunpack.c.l.b16 %v5801
  %v5826 = vunpack.c.h.b16 %v5801
  %v5827 = vunpack.c.l.b16 %v5802
  %v5828 = vunpack.c.h.b16 %v5802
  %v5829 = vunpack.c.l.b16 %v5803
  %v5830 = vunpack.c.h.b16 %v5803
  %v5831 = vunpack.c.l.b16 %v5804
  %v5832 = vunpack.c.h.b16 %v5804
  %v5833 = vunpack.c.l.b16 %v5805
  %v5834 = vunpack.c.h.b16 %v5805
  %v5835 = vunpack.c.l.b16 %v5806
  %v5836 = vunpack.c.h.b16 %v5806
  %v5837 = vpack.c.b16 %v5827, %v5825
  %v5838 = vpack.c.b16 %v5828, %v5826
  %v5839 = vpack.c.b16 %v5831, %v5829
  %v5840 = vpack.c.b16 %v5832, %v5830
  %v5841 = vpack.c.b16 %v5835, %v5833
  %v5842 = vpack.c.b16 %v5836, %v5834
  %v5847 = vsel %vm4442, %v5838, 0
  %v5850 = vsel %vm4442, %v5840, 0
  %v5853 = vsel %vm4442, %v5842, 0
  %5855 = vmatpush.bf16.msra.mxu0 %v5814
  %5856 = vmatpush.bf16.msra.mxu0 %v5813
  %5857 = vmatpush.bf16.msra.mxu0 %v5812
  %5858 = vmatpush.bf16.msra.mxu0 %v5811
  %5859 = vmatpush.bf16.msra.mxu0 %v5810
  %5860 = vmatpush.bf16.msra.mxu0 %v5809
  %5861 = vmatpush.bf16.msra.mxu0 %v5808
  %5862 = vmatpush.bf16.msra.mxu0 %v5807
  %5863 = vmatmul.bf16.gmra.mxu0 %v5837
  %v5864 = vpop.f32.mrf.mxu0
  %v5865 = vadd.f32 0.0, %v5864
  %v5866 = vpop.f32.mrf.mxu0
  %v5867 = vadd.f32 0.0, %v5866
  %5868 = vmatmul.bf16.gmra.mxu0 %v5839
  %v5869 = vpop.f32.mrf.mxu0
  %v5870 = vadd.f32 0.0, %v5869
  %v5871 = vpop.f32.mrf.mxu0
  %v5872 = vadd.f32 0.0, %v5871
  %5873 = vmatmul.bf16.gmra.mxu0 %v5841
  %v5874 = vpop.f32.mrf.mxu0
  %v5875 = vadd.f32 0.0, %v5874
  %v5876 = vpop.f32.mrf.mxu0
  %v5877 = vadd.f32 0.0, %v5876
  %5878 = vdwg.mxu0
  %5879 = vmatpush.bf16.msra.mxu0 0
  %5880 = vmatpush.bf16.msra.mxu0 0
  %5881 = vmatpush.bf16.msra.mxu0 0
  %5882 = vmatpush.bf16.msra.mxu0 0
  %5883 = vmatpush.bf16.msra.mxu0 %v5818
  %5884 = vmatpush.bf16.msra.mxu0 %v5817
  %5885 = vmatpush.bf16.msra.mxu0 %v5816
  %5886 = vmatpush.bf16.msra.mxu0 %v5815
  %5887 = vmatmul.bf16.gmra.mxu0 %v5847
  %v5888 = vpop.f32.mrf.mxu0
  %v5889 = vadd.f32 %v5865, %v5888
  %v5890 = vpop.f32.mrf.mxu0
  %v5891 = vadd.f32 %v5867, %v5890
  %5892 = vmatmul.bf16.gmra.mxu0 %v5850
  %v5893 = vpop.f32.mrf.mxu0
  %v5894 = vadd.f32 %v5870, %v5893
  %v5895 = vpop.f32.mrf.mxu0
  %v5896 = vadd.f32 %v5872, %v5895
  %5897 = vmatmul.bf16.gmra.mxu0 %v5853
  %v5898 = vpop.f32.mrf.mxu0
  %v5899 = vadd.f32 %v5875, %v5898
  %v5900 = vpop.f32.mrf.mxu0
  %v5901 = vadd.f32 %v5877, %v5900
  %5902 = vdwg.mxu0
  %v5903 = vadd.f32 %v5599, %v5889
  %v5904 = vadd.f32 %v5600, %v5891
  %v5905 = vadd.f32 %v5601, %v5894
  %v5906 = vadd.f32 %v5602, %v5896
  %v5907 = vadd.f32 %v5603, %v5899
  %v5908 = vadd.f32 %v5604, %v5901
  %5909 = vrot.lane.b32.xlu0 %v3940, 121
  %v5910 = vpop.permute.xlu0 %5909
  %5911 = vrot.lane.b32.xlu0 %v3941, 121
  %v5912 = vpop.permute.xlu0 %5911
  %5913 = vrot.lane.b32.xlu0 %v3942, 121
  %v5914 = vpop.permute.xlu0 %5913
  %5915 = vrot.lane.b32.xlu0 %v3943, 121
  %v5916 = vpop.permute.xlu0 %5915
  %5917 = vrot.lane.b32.xlu0 %v3944, 121
  %v5918 = vpop.permute.xlu0 %5917
  %5919 = vrot.lane.b32.xlu0 %v3945, 121
  %v5920 = vpop.permute.xlu0 %5919
  %5921 = vrot.lane.b32.xlu0 %v3946, 121
  %v5922 = vpop.permute.xlu0 %5921
  %5923 = vrot.lane.b32.xlu0 %v3947, 121
  %v5924 = vpop.permute.xlu0 %5923
  %5925 = vrot.lane.b32.xlu0 %v3948, 121
  %v5926 = vpop.permute.xlu0 %5925
  %5927 = vrot.lane.b32.xlu0 %v3949, 121
  %v5928 = vpop.permute.xlu0 %5927
  %5929 = vrot.lane.b32.xlu0 %v3950, 121
  %v5930 = vpop.permute.xlu0 %5929
  %5931 = vrot.lane.b32.xlu0 %v3951, 121
  %v5932 = vpop.permute.xlu0 %5931
  %5933 = vrot.lane.b32.xlu0 %v3952, 121
  %v5934 = vpop.permute.xlu0 %5933
  %5935 = vrot.lane.b32.xlu0 %v3953, 121
  %v5936 = vpop.permute.xlu0 %5935
  %5937 = vrot.lane.b32.xlu0 %v3954, 121
  %v5938 = vpop.permute.xlu0 %5937
  %5939 = vrot.lane.b32.xlu0 %v3955, 121
  %v5940 = vpop.permute.xlu0 %5939
  %5941 = vrot.lane.b32.xlu0 %v3956, 121
  %v5942 = vpop.permute.xlu0 %5941
  %5943 = vrot.lane.b32.xlu0 %v3957, 121
  %v5944 = vpop.permute.xlu0 %5943
  %5945 = vrot.lane.b32.xlu0 %v3958, 121
  %v5946 = vpop.permute.xlu0 %5945
  %5947 = vrot.lane.b32.xlu0 %v3959, 121
  %v5948 = vpop.permute.xlu0 %5947
  %5949 = vrot.lane.b32.xlu0 %v3960, 121
  %v5950 = vpop.permute.xlu0 %5949
  %5951 = vrot.lane.b32.xlu0 %v3961, 121
  %v5952 = vpop.permute.xlu0 %5951
  %5953 = vrot.lane.b32.xlu0 %v3962, 121
  %v5954 = vpop.permute.xlu0 %5953
  %5955 = vrot.lane.b32.xlu0 %v3963, 121
  %v5956 = vpop.permute.xlu0 %5955
  %5981 = vrot.lane.b32.xlu0 %v3940, 42
  %v5982 = vpop.permute.xlu0 %5981
  %5983 = vrot.lane.b32.xlu0 %v3941, 42
  %v5984 = vpop.permute.xlu0 %5983
  %5985 = vrot.lane.b32.xlu0 %v3942, 42
  %v5986 = vpop.permute.xlu0 %5985
  %5987 = vrot.lane.b32.xlu0 %v3943, 42
  %v5988 = vpop.permute.xlu0 %5987
  %5989 = vrot.lane.b32.xlu0 %v3944, 42
  %v5990 = vpop.permute.xlu0 %5989
  %5991 = vrot.lane.b32.xlu0 %v3945, 42
  %v5992 = vpop.permute.xlu0 %5991
  %5993 = vrot.lane.b32.xlu0 %v3946, 42
  %v5994 = vpop.permute.xlu0 %5993
  %5995 = vrot.lane.b32.xlu0 %v3947, 42
  %v5996 = vpop.permute.xlu0 %5995
  %5997 = vrot.lane.b32.xlu0 %v3948, 42
  %v5998 = vpop.permute.xlu0 %5997
  %5999 = vrot.lane.b32.xlu0 %v3949, 42
  %v6000 = vpop.permute.xlu0 %5999
  %6001 = vrot.lane.b32.xlu0 %v3950, 42
  %v6002 = vpop.permute.xlu0 %6001
  %6003 = vrot.lane.b32.xlu0 %v3951, 42
  %v6004 = vpop.permute.xlu0 %6003
  %6005 = vrot.lane.b32.xlu0 %v3952, 42
  %v6006 = vpop.permute.xlu0 %6005
  %6007 = vrot.lane.b32.xlu0 %v3953, 42
  %v6008 = vpop.permute.xlu0 %6007
  %6009 = vrot.lane.b32.xlu0 %v3954, 42
  %v6010 = vpop.permute.xlu0 %6009
  %6011 = vrot.lane.b32.xlu0 %v3955, 42
  %v6012 = vpop.permute.xlu0 %6011
  %6013 = vrot.lane.b32.xlu0 %v3956, 42
  %v6014 = vpop.permute.xlu0 %6013
  %6015 = vrot.lane.b32.xlu0 %v3957, 42
  %v6016 = vpop.permute.xlu0 %6015
  %6017 = vrot.lane.b32.xlu0 %v3958, 42
  %v6018 = vpop.permute.xlu0 %6017
  %6019 = vrot.lane.b32.xlu0 %v3959, 42
  %v6020 = vpop.permute.xlu0 %6019
  %6021 = vrot.lane.b32.xlu0 %v3960, 42
  %v6022 = vpop.permute.xlu0 %6021
  %6023 = vrot.lane.b32.xlu0 %v3961, 42
  %v6024 = vpop.permute.xlu0 %6023
  %6025 = vrot.lane.b32.xlu0 %v3962, 42
  %v6026 = vpop.permute.xlu0 %6025
  %6027 = vrot.lane.b32.xlu0 %v3963, 42
  %v6028 = vpop.permute.xlu0 %6027
  %vm6053 = vcmask 343040
  %v6054 = vsel %vm6053, %v5910, %v5982
  %v6055 = vsel %vm6053, %v5912, %v5984
  %v6056 = vsel %vm6053, %v5914, %v5986
  %v6057 = vsel %vm6053, %v5916, %v5988
  %v6058 = vsel %vm6053, %v5918, %v5990
  %v6059 = vsel %vm6053, %v5920, %v5992
  %v6060 = vsel %vm6053, %v5922, %v5994
  %v6061 = vsel %vm6053, %v5924, %v5996
  %v6062 = vsel %vm6053, %v5926, %v5998
  %v6063 = vsel %vm6053, %v5928, %v6000
  %v6064 = vsel %vm6053, %v5930, %v6002
  %v6065 = vsel %vm6053, %v5932, %v6004
  %v6066 = vsel %vm6053, %v5934, %v6006
  %v6067 = vsel %vm6053, %v5936, %v6008
  %v6068 = vsel %vm6053, %v5938, %v6010
  %v6069 = vsel %vm6053, %v5940, %v6012
  %v6070 = vsel %vm6053, %v5942, %v6014
  %v6071 = vsel %vm6053, %v5944, %v6016
  %v6072 = vsel %vm6053, %v5946, %v6018
  %v6073 = vsel %vm6053, %v5948, %v6020
  %v6074 = vsel %vm6053, %v5950, %v6022
  %v6075 = vsel %vm6053, %v5952, %v6024
  %v6076 = vsel %vm6053, %v5954, %v6026
  %v6077 = vsel %vm6053, %v5956, %v6028
  %v6078 = vld [vmem:[%s5 + $0x7] sm:$0x1]
  %v6079 = vperm.slane %v6078, 0
  %v6080 = vmul.f32 %v6054, %v6079
  %v6081 = vmul.f32 %v6055, %v6079
  %v6082 = vmul.f32 %v6056, %v6079
  %v6083 = vmul.f32 %v6057, %v6079
  %v6084 = vmul.f32 %v6058, %v6079
  %v6085 = vmul.f32 %v6059, %v6079
  %v6086 = vmul.f32 %v6060, %v6079
  %v6087 = vmul.f32 %v6061, %v6079
  %v6088 = vmul.f32 %v6062, %v6079
  %v6089 = vmul.f32 %v6063, %v6079
  %v6090 = vmul.f32 %v6064, %v6079
  %v6091 = vmul.f32 %v6065, %v6079
  %v6092 = vmul.f32 %v6066, %v6079
  %v6093 = vmul.f32 %v6067, %v6079
  %v6094 = vmul.f32 %v6068, %v6079
  %v6095 = vmul.f32 %v6069, %v6079
  %v6096 = vmul.f32 %v6070, %v6079
  %v6097 = vmul.f32 %v6071, %v6079
  %v6098 = vmul.f32 %v6072, %v6079
  %v6099 = vmul.f32 %v6073, %v6079
  %v6100 = vmul.f32 %v6074, %v6079
  %v6101 = vmul.f32 %v6075, %v6079
  %v6102 = vmul.f32 %v6076, %v6079
  %v6103 = vmul.f32 %v6077, %v6079
  %s6104 = scalar_lea.vmem %s4, 336
  %v6105 = vld [vmem:[%s6104] sm:$0xff]
  %v6106 = vld [vmem:[%s6104 + $0x8] sm:$0xff]
  %v6107 = vld [vmem:[%s6104 + $0x10] sm:$0xff]
  %v6108 = vld [vmem:[%s6104 + $0x18] sm:$0xff]
  %v6109 = vld [vmem:[%s6104 + $0x20] sm:$0xff]
  %v6110 = vld [vmem:[%s6104 + $0x28] sm:$0xff]
  %v6111 = vpack.c.bf16 %v6081, %v6080
  %v6112 = vpack.c.bf16 %v6083, %v6082
  %v6113 = vpack.c.bf16 %v6085, %v6084
  %v6114 = vpack.c.bf16 %v6087, %v6086
  %v6115 = vpack.c.bf16 %v6089, %v6088
  %v6116 = vpack.c.bf16 %v6091, %v6090
  %v6117 = vpack.c.bf16 %v6093, %v6092
  %v6118 = vpack.c.bf16 %v6095, %v6094
  %v6119 = vpack.c.bf16 %v6097, %v6096
  %v6120 = vpack.c.bf16 %v6099, %v6098
  %v6121 = vpack.c.bf16 %v6101, %v6100
  %v6122 = vpack.c.bf16 %v6103, %v6102
  %v6129 = vunpack.c.l.b16 %v6105
  %v6130 = vunpack.c.h.b16 %v6105
  %v6131 = vunpack.c.l.b16 %v6106
  %v6132 = vunpack.c.h.b16 %v6106
  %v6133 = vunpack.c.l.b16 %v6107
  %v6134 = vunpack.c.h.b16 %v6107
  %v6135 = vunpack.c.l.b16 %v6108
  %v6136 = vunpack.c.h.b16 %v6108
  %v6137 = vunpack.c.l.b16 %v6109
  %v6138 = vunpack.c.h.b16 %v6109
  %v6139 = vunpack.c.l.b16 %v6110
  %v6140 = vunpack.c.h.b16 %v6110
  %v6141 = vpack.c.b16 %v6131, %v6129
  %v6142 = vpack.c.b16 %v6132, %v6130
  %v6143 = vpack.c.b16 %v6135, %v6133
  %v6144 = vpack.c.b16 %v6136, %v6134
  %v6145 = vpack.c.b16 %v6139, %v6137
  %v6146 = vpack.c.b16 %v6140, %v6138
  %v6151 = vsel %vm4442, %v6142, 0
  %v6154 = vsel %vm4442, %v6144, 0
  %v6157 = vsel %vm4442, %v6146, 0
  %6159 = vmatpush.bf16.msra.mxu0 %v6118
  %6160 = vmatpush.bf16.msra.mxu0 %v6117
  %6161 = vmatpush.bf16.msra.mxu0 %v6116
  %6162 = vmatpush.bf16.msra.mxu0 %v6115
  %6163 = vmatpush.bf16.msra.mxu0 %v6114
  %6164 = vmatpush.bf16.msra.mxu0 %v6113
  %6165 = vmatpush.bf16.msra.mxu0 %v6112
  %6166 = vmatpush.bf16.msra.mxu0 %v6111
  %6167 = vmatmul.bf16.gmra.mxu0 %v6141
  %v6168 = vpop.f32.mrf.mxu0
  %v6169 = vadd.f32 0.0, %v6168
  %v6170 = vpop.f32.mrf.mxu0
  %v6171 = vadd.f32 0.0, %v6170
  %6172 = vmatmul.bf16.gmra.mxu0 %v6143
  %v6173 = vpop.f32.mrf.mxu0
  %v6174 = vadd.f32 0.0, %v6173
  %v6175 = vpop.f32.mrf.mxu0
  %v6176 = vadd.f32 0.0, %v6175
  %6177 = vmatmul.bf16.gmra.mxu0 %v6145
  %v6178 = vpop.f32.mrf.mxu0
  %v6179 = vadd.f32 0.0, %v6178
  %v6180 = vpop.f32.mrf.mxu0
  %v6181 = vadd.f32 0.0, %v6180
  %6182 = vdwg.mxu0
  %6183 = vmatpush.bf16.msra.mxu0 0
  %6184 = vmatpush.bf16.msra.mxu0 0
  %6185 = vmatpush.bf16.msra.mxu0 0
  %6186 = vmatpush.bf16.msra.mxu0 0
  %6187 = vmatpush.bf16.msra.mxu0 %v6122
  %6188 = vmatpush.bf16.msra.mxu0 %v6121
  %6189 = vmatpush.bf16.msra.mxu0 %v6120
  %6190 = vmatpush.bf16.msra.mxu0 %v6119
  %6191 = vmatmul.bf16.gmra.mxu0 %v6151
  %v6192 = vpop.f32.mrf.mxu0
  %v6193 = vadd.f32 %v6169, %v6192
  %v6194 = vpop.f32.mrf.mxu0
  %v6195 = vadd.f32 %v6171, %v6194
  %6196 = vmatmul.bf16.gmra.mxu0 %v6154
  %v6197 = vpop.f32.mrf.mxu0
  %v6198 = vadd.f32 %v6174, %v6197
  %v6199 = vpop.f32.mrf.mxu0
  %v6200 = vadd.f32 %v6176, %v6199
  %6201 = vmatmul.bf16.gmra.mxu0 %v6157
  %v6202 = vpop.f32.mrf.mxu0
  %v6203 = vadd.f32 %v6179, %v6202
  %v6204 = vpop.f32.mrf.mxu0
  %v6205 = vadd.f32 %v6181, %v6204
  %6206 = vdwg.mxu0
  %v6207 = vadd.f32 %v5903, %v6193
  %v6208 = vadd.f32 %v5904, %v6195
  %v6209 = vadd.f32 %v5905, %v6198
  %v6210 = vadd.f32 %v5906, %v6200
  %v6211 = vadd.f32 %v5907, %v6203
  %v6212 = vadd.f32 %v5908, %v6205
  %6213 = vrot.lane.b32.xlu0 %v3940, 120
  %v6214 = vpop.permute.xlu0 %6213
  %6215 = vrot.lane.b32.xlu0 %v3941, 120
  %v6216 = vpop.permute.xlu0 %6215
  %6217 = vrot.lane.b32.xlu0 %v3942, 120
  %v6218 = vpop.permute.xlu0 %6217
  %6219 = vrot.lane.b32.xlu0 %v3943, 120
  %v6220 = vpop.permute.xlu0 %6219
  %6221 = vrot.lane.b32.xlu0 %v3944, 120
  %v6222 = vpop.permute.xlu0 %6221
  %6223 = vrot.lane.b32.xlu0 %v3945, 120
  %v6224 = vpop.permute.xlu0 %6223
  %6225 = vrot.lane.b32.xlu0 %v3946, 120
  %v6226 = vpop.permute.xlu0 %6225
  %6227 = vrot.lane.b32.xlu0 %v3947, 120
  %v6228 = vpop.permute.xlu0 %6227
  %6229 = vrot.lane.b32.xlu0 %v3948, 120
  %v6230 = vpop.permute.xlu0 %6229
  %6231 = vrot.lane.b32.xlu0 %v3949, 120
  %v6232 = vpop.permute.xlu0 %6231
  %6233 = vrot.lane.b32.xlu0 %v3950, 120
  %v6234 = vpop.permute.xlu0 %6233
  %6235 = vrot.lane.b32.xlu0 %v3951, 120
  %v6236 = vpop.permute.xlu0 %6235
  %6237 = vrot.lane.b32.xlu0 %v3952, 120
  %v6238 = vpop.permute.xlu0 %6237
  %6239 = vrot.lane.b32.xlu0 %v3953, 120
  %v6240 = vpop.permute.xlu0 %6239
  %6241 = vrot.lane.b32.xlu0 %v3954, 120
  %v6242 = vpop.permute.xlu0 %6241
  %6243 = vrot.lane.b32.xlu0 %v3955, 120
  %v6244 = vpop.permute.xlu0 %6243
  %6245 = vrot.lane.b32.xlu0 %v3956, 120
  %v6246 = vpop.permute.xlu0 %6245
  %6247 = vrot.lane.b32.xlu0 %v3957, 120
  %v6248 = vpop.permute.xlu0 %6247
  %6249 = vrot.lane.b32.xlu0 %v3958, 120
  %v6250 = vpop.permute.xlu0 %6249
  %6251 = vrot.lane.b32.xlu0 %v3959, 120
  %v6252 = vpop.permute.xlu0 %6251
  %6253 = vrot.lane.b32.xlu0 %v3960, 120
  %v6254 = vpop.permute.xlu0 %6253
  %6255 = vrot.lane.b32.xlu0 %v3961, 120
  %v6256 = vpop.permute.xlu0 %6255
  %6257 = vrot.lane.b32.xlu0 %v3962, 120
  %v6258 = vpop.permute.xlu0 %6257
  %6259 = vrot.lane.b32.xlu0 %v3963, 120
  %v6260 = vpop.permute.xlu0 %6259
  %6285 = vrot.lane.b32.xlu0 %v3940, 41
  %v6286 = vpop.permute.xlu0 %6285
  %6287 = vrot.lane.b32.xlu0 %v3941, 41
  %v6288 = vpop.permute.xlu0 %6287
  %6289 = vrot.lane.b32.xlu0 %v3942, 41
  %v6290 = vpop.permute.xlu0 %6289
  %6291 = vrot.lane.b32.xlu0 %v3943, 41
  %v6292 = vpop.permute.xlu0 %6291
  %6293 = vrot.lane.b32.xlu0 %v3944, 41
  %v6294 = vpop.permute.xlu0 %6293
  %6295 = vrot.lane.b32.xlu0 %v3945, 41
  %v6296 = vpop.permute.xlu0 %6295
  %6297 = vrot.lane.b32.xlu0 %v3946, 41
  %v6298 = vpop.permute.xlu0 %6297
  %6299 = vrot.lane.b32.xlu0 %v3947, 41
  %v6300 = vpop.permute.xlu0 %6299
  %6301 = vrot.lane.b32.xlu0 %v3948, 41
  %v6302 = vpop.permute.xlu0 %6301
  %6303 = vrot.lane.b32.xlu0 %v3949, 41
  %v6304 = vpop.permute.xlu0 %6303
  %6305 = vrot.lane.b32.xlu0 %v3950, 41
  %v6306 = vpop.permute.xlu0 %6305
  %6307 = vrot.lane.b32.xlu0 %v3951, 41
  %v6308 = vpop.permute.xlu0 %6307
  %6309 = vrot.lane.b32.xlu0 %v3952, 41
  %v6310 = vpop.permute.xlu0 %6309
  %6311 = vrot.lane.b32.xlu0 %v3953, 41
  %v6312 = vpop.permute.xlu0 %6311
  %6313 = vrot.lane.b32.xlu0 %v3954, 41
  %v6314 = vpop.permute.xlu0 %6313
  %6315 = vrot.lane.b32.xlu0 %v3955, 41
  %v6316 = vpop.permute.xlu0 %6315
  %6317 = vrot.lane.b32.xlu0 %v3956, 41
  %v6318 = vpop.permute.xlu0 %6317
  %6319 = vrot.lane.b32.xlu0 %v3957, 41
  %v6320 = vpop.permute.xlu0 %6319
  %6321 = vrot.lane.b32.xlu0 %v3958, 41
  %v6322 = vpop.permute.xlu0 %6321
  %6323 = vrot.lane.b32.xlu0 %v3959, 41
  %v6324 = vpop.permute.xlu0 %6323
  %6325 = vrot.lane.b32.xlu0 %v3960, 41
  %v6326 = vpop.permute.xlu0 %6325
  %6327 = vrot.lane.b32.xlu0 %v3961, 41
  %v6328 = vpop.permute.xlu0 %6327
  %6329 = vrot.lane.b32.xlu0 %v3962, 41
  %v6330 = vpop.permute.xlu0 %6329
  %6331 = vrot.lane.b32.xlu0 %v3963, 41
  %v6332 = vpop.permute.xlu0 %6331
  %vm6357 = vcmask 334848
  %v6358 = vsel %vm6357, %v6214, %v6286
  %v6359 = vsel %vm6357, %v6216, %v6288
  %v6360 = vsel %vm6357, %v6218, %v6290
  %v6361 = vsel %vm6357, %v6220, %v6292
  %v6362 = vsel %vm6357, %v6222, %v6294
  %v6363 = vsel %vm6357, %v6224, %v6296
  %v6364 = vsel %vm6357, %v6226, %v6298
  %v6365 = vsel %vm6357, %v6228, %v6300
  %v6366 = vsel %vm6357, %v6230, %v6302
  %v6367 = vsel %vm6357, %v6232, %v6304
  %v6368 = vsel %vm6357, %v6234, %v6306
  %v6369 = vsel %vm6357, %v6236, %v6308
  %v6370 = vsel %vm6357, %v6238, %v6310
  %v6371 = vsel %vm6357, %v6240, %v6312
  %v6372 = vsel %vm6357, %v6242, %v6314
  %v6373 = vsel %vm6357, %v6244, %v6316
  %v6374 = vsel %vm6357, %v6246, %v6318
  %v6375 = vsel %vm6357, %v6248, %v6320
  %v6376 = vsel %vm6357, %v6250, %v6322
  %v6377 = vsel %vm6357, %v6252, %v6324
  %v6378 = vsel %vm6357, %v6254, %v6326
  %v6379 = vsel %vm6357, %v6256, %v6328
  %v6380 = vsel %vm6357, %v6258, %v6330
  %v6381 = vsel %vm6357, %v6260, %v6332
  %v6382 = vld [vmem:[%s5 + $0x8] sm:$0x1]
  %v6383 = vperm.slane %v6382, 0
  %v6384 = vmul.f32 %v6358, %v6383
  %v6385 = vmul.f32 %v6359, %v6383
  %v6386 = vmul.f32 %v6360, %v6383
  %v6387 = vmul.f32 %v6361, %v6383
  %v6388 = vmul.f32 %v6362, %v6383
  %v6389 = vmul.f32 %v6363, %v6383
  %v6390 = vmul.f32 %v6364, %v6383
  %v6391 = vmul.f32 %v6365, %v6383
  %v6392 = vmul.f32 %v6366, %v6383
  %v6393 = vmul.f32 %v6367, %v6383
  %v6394 = vmul.f32 %v6368, %v6383
  %v6395 = vmul.f32 %v6369, %v6383
  %v6396 = vmul.f32 %v6370, %v6383
  %v6397 = vmul.f32 %v6371, %v6383
  %v6398 = vmul.f32 %v6372, %v6383
  %v6399 = vmul.f32 %v6373, %v6383
  %v6400 = vmul.f32 %v6374, %v6383
  %v6401 = vmul.f32 %v6375, %v6383
  %v6402 = vmul.f32 %v6376, %v6383
  %v6403 = vmul.f32 %v6377, %v6383
  %v6404 = vmul.f32 %v6378, %v6383
  %v6405 = vmul.f32 %v6379, %v6383
  %v6406 = vmul.f32 %v6380, %v6383
  %v6407 = vmul.f32 %v6381, %v6383
  %s6408 = scalar_lea.vmem %s4, 384
  %v6409 = vld [vmem:[%s6408] sm:$0xff]
  %v6410 = vld [vmem:[%s6408 + $0x8] sm:$0xff]
  %v6411 = vld [vmem:[%s6408 + $0x10] sm:$0xff]
  %v6412 = vld [vmem:[%s6408 + $0x18] sm:$0xff]
  %v6413 = vld [vmem:[%s6408 + $0x20] sm:$0xff]
  %v6414 = vld [vmem:[%s6408 + $0x28] sm:$0xff]
  %v6415 = vpack.c.bf16 %v6385, %v6384
  %v6416 = vpack.c.bf16 %v6387, %v6386
  %v6417 = vpack.c.bf16 %v6389, %v6388
  %v6418 = vpack.c.bf16 %v6391, %v6390
  %v6419 = vpack.c.bf16 %v6393, %v6392
  %v6420 = vpack.c.bf16 %v6395, %v6394
  %v6421 = vpack.c.bf16 %v6397, %v6396
  %v6422 = vpack.c.bf16 %v6399, %v6398
  %v6423 = vpack.c.bf16 %v6401, %v6400
  %v6424 = vpack.c.bf16 %v6403, %v6402
  %v6425 = vpack.c.bf16 %v6405, %v6404
  %v6426 = vpack.c.bf16 %v6407, %v6406
  %v6433 = vunpack.c.l.b16 %v6409
  %v6434 = vunpack.c.h.b16 %v6409
  %v6435 = vunpack.c.l.b16 %v6410
  %v6436 = vunpack.c.h.b16 %v6410
  %v6437 = vunpack.c.l.b16 %v6411
  %v6438 = vunpack.c.h.b16 %v6411
  %v6439 = vunpack.c.l.b16 %v6412
  %v6440 = vunpack.c.h.b16 %v6412
  %v6441 = vunpack.c.l.b16 %v6413
  %v6442 = vunpack.c.h.b16 %v6413
  %v6443 = vunpack.c.l.b16 %v6414
  %v6444 = vunpack.c.h.b16 %v6414
  %v6445 = vpack.c.b16 %v6435, %v6433
  %v6446 = vpack.c.b16 %v6436, %v6434
  %v6447 = vpack.c.b16 %v6439, %v6437
  %v6448 = vpack.c.b16 %v6440, %v6438
  %v6449 = vpack.c.b16 %v6443, %v6441
  %v6450 = vpack.c.b16 %v6444, %v6442
  %v6455 = vsel %vm4442, %v6446, 0
  %v6458 = vsel %vm4442, %v6448, 0
  %v6461 = vsel %vm4442, %v6450, 0
  %6463 = vmatpush.bf16.msra.mxu0 %v6422
  %6464 = vmatpush.bf16.msra.mxu0 %v6421
  %6465 = vmatpush.bf16.msra.mxu0 %v6420
  %6466 = vmatpush.bf16.msra.mxu0 %v6419
  %6467 = vmatpush.bf16.msra.mxu0 %v6418
  %6468 = vmatpush.bf16.msra.mxu0 %v6417
  %6469 = vmatpush.bf16.msra.mxu0 %v6416
  %6470 = vmatpush.bf16.msra.mxu0 %v6415
  %6471 = vmatmul.bf16.gmra.mxu0 %v6445
  %v6472 = vpop.f32.mrf.mxu0
  %v6473 = vadd.f32 0.0, %v6472
  %v6474 = vpop.f32.mrf.mxu0
  %v6475 = vadd.f32 0.0, %v6474
  %6476 = vmatmul.bf16.gmra.mxu0 %v6447
  %v6477 = vpop.f32.mrf.mxu0
  %v6478 = vadd.f32 0.0, %v6477
  %v6479 = vpop.f32.mrf.mxu0
  %v6480 = vadd.f32 0.0, %v6479
  %6481 = vmatmul.bf16.gmra.mxu0 %v6449
  %v6482 = vpop.f32.mrf.mxu0
  %v6483 = vadd.f32 0.0, %v6482
  %v6484 = vpop.f32.mrf.mxu0
  %v6485 = vadd.f32 0.0, %v6484
  %6486 = vdwg.mxu0
  %6487 = vmatpush.bf16.msra.mxu0 0
  %6488 = vmatpush.bf16.msra.mxu0 0
  %6489 = vmatpush.bf16.msra.mxu0 0
  %6490 = vmatpush.bf16.msra.mxu0 0
  %6491 = vmatpush.bf16.msra.mxu0 %v6426
  %6492 = vmatpush.bf16.msra.mxu0 %v6425
  %6493 = vmatpush.bf16.msra.mxu0 %v6424
  %6494 = vmatpush.bf16.msra.mxu0 %v6423
  %6495 = vmatmul.bf16.gmra.mxu0 %v6455
  %v6496 = vpop.f32.mrf.mxu0
  %v6497 = vadd.f32 %v6473, %v6496
  %v6498 = vpop.f32.mrf.mxu0
  %v6499 = vadd.f32 %v6475, %v6498
  %6500 = vmatmul.bf16.gmra.mxu0 %v6458
  %v6501 = vpop.f32.mrf.mxu0
  %v6502 = vadd.f32 %v6478, %v6501
  %v6503 = vpop.f32.mrf.mxu0
  %v6504 = vadd.f32 %v6480, %v6503
  %6505 = vmatmul.bf16.gmra.mxu0 %v6461
  %v6506 = vpop.f32.mrf.mxu0
  %v6507 = vadd.f32 %v6483, %v6506
  %v6508 = vpop.f32.mrf.mxu0
  %v6509 = vadd.f32 %v6485, %v6508
  %6510 = vdwg.mxu0
  %v6511 = vadd.f32 %v6207, %v6497
  %v6512 = vadd.f32 %v6208, %v6499
  %v6513 = vadd.f32 %v6209, %v6502
  %v6514 = vadd.f32 %v6210, %v6504
  %v6515 = vadd.f32 %v6211, %v6507
  %v6516 = vadd.f32 %v6212, %v6509
  %6517 = vst.msk [vmem:[%s6] sm:$0xff] %vm3003, %v6511
  %6518 = vst.msk [vmem:[%s6 + $0x8] sm:$0xff] %vm3003, %v6512
  %6519 = vst.msk [vmem:[%s6 + $0x10] sm:$0xff] %vm3003, %v6513
  %6520 = vst.msk [vmem:[%s6 + $0x18] sm:$0xff] %vm3003, %v6514
  %6521 = vst.msk [vmem:[%s6 + $0x20] sm:$0xff] %vm3003, %v6515
  %6522 = vst.msk [vmem:[%s6 + $0x28] sm:$0xff] %vm3003, %v6516
  // Predicated region
  $region26: #{run_module.1} parent=0 // pred_check
    _
  $region27: #{run_module.1} parent=0 // pred_check_branch
    %6524 = sbr.rel (0) target = $region29
  $region28: #{run_module.1} parent=0 // pred_region
    _
  $region29: #{run_module.1} parent=0 // pred_fallthru
    _
  // Predicated region
  $region30: #{run_module.1} parent=0 // pred_check
    _
  $region31: #{run_module.1} parent=0 // pred_check_branch
    %6526 = sbr.rel (0) target = $region33
  $region32: #{run_module.1} parent=0 // pred_region
    _
  $region33: #{run_module.1} parent=0 // pred_fallthru
    _

</llo_original>
